<compile_context>
chip_gen: v7x
topology: tpu7x:2x2x1
jax: 0.10.0
libtpu: 0.0.40
codegen_flags: <defaults>
</compile_context>

<pallas_src>
import numpy as np
import jax
import jax.numpy as jnp
from jax import lax
from jax.experimental import pallas as pl
from jax.experimental.pallas import tpu as pltpu


# ----------------------------------------------------------------------------
# Pallas kernel (built per fuse_recurrent flag; trace-time Python branch only)
# ----------------------------------------------------------------------------
def _make_kernel(fuse_recurrent):
    def kernel(tile_max_smem,                 # [n_tiles] int32, SMEM (scalar prefetch)
               x_ref,                         # [S, Bt, D]  bf16 (time-major)
               len_ref,                       # [Bt, 1] int32
               wih_ref,                       # [D, 6H] bf16  (fwd|bwd, gates r,z,n)
               whh_ref,                       # [2H, 6H] bf16 (block-diag)  OR  [2, H, 3H]
               bin_ref,                       # [2, 3H] f32   (bih+bhh for r,z ; bih for n)
               bhn_ref,                       # [2, H]  f32   (bhh_n fwd / bwd)
               cap_ref,                       # [S, Bt, H] out (fwd raw during loop, final after epilogue)
               mean_ref,                      # [Bt, H] f32 out
               gi_f_ref, gi_b_ref,            # [S, Bt, 3H] bf16 scratch (hoisted input proj)
               bwd_ref):                      # [S, Bt, H]  f32 scratch (bwd raw outputs)
        S, Bt, D = x_ref.shape
        H = bhn_ref.shape[1]
        H3 = 3 * H
        eps = 1e-8

        # Per-tile max valid length (precomputed in the wrapper -> robust even for
        # unsorted lengths). Padded time steps are skipped entirely.
        t_max = tile_max_smem[pl.program_id(0)]
        lengths = len_ref[...]                                   # [Bt, 1] int32

        # ---- hoisted input projection: one fused bf16 GEMM for both directions ----
        x2d = x_ref[...].reshape(S * Bt, D)
        gi = jnp.dot(x2d, wih_ref[...], preferred_element_type=jnp.float32)   # [S*Bt, 6H]
        gi_f_ref[...] = (gi[:, :H3] + bin_ref[0:1, :]).reshape(S, Bt, H3).astype(jnp.bfloat16)
        gi_b_ref[...] = (gi[:, H3:] + bin_ref[1:2, :]).reshape(S, Bt, H3).astype(jnp.bfloat16)

        bhn_f = bhn_ref[0:1, :]                                  # [1, H]
        bhn_b = bhn_ref[1:2, :]                                  # [1, H]

        def gru_gates(gi_t, gh, bhn, h):
            # gi_t already contains bih (+ bhh for r,z); gh = h @ Whh_fused.
            # Single sigmoid over the contiguous r|z slice (one EUP sequence).
            rz = jax.nn.sigmoid(gi_t[:, :2 * H].astype(jnp.float32) + gh[:, :2 * H])
            r, z = rz[:, :H], rz[:, H:]
            n = jnp.tanh(gi_t[:, 2 * H:].astype(jnp.float32) + r * (gh[:, 2 * H:] + bhn))
            return (1.0 - z) * n + z * h

        # ---- merged serial recurrence: fwd at t=s, bwd at t=t_max-1-s ----
        def body(s, carry):
            h_f, h_b = carry
            tf = s
            tb = t_max - 1 - s
            if fuse_recurrent:
                # One K=2H matmul per step (block-diagonal weights): bwd rides along.
                h_cat = jnp.concatenate([h_f, h_b], axis=-1).astype(jnp.bfloat16)   # [Bt, 2H]
                gh = jnp.dot(h_cat, whh_ref[...], preferred_element_type=jnp.float32)
                gh_f, gh_b = gh[:, :H3], gh[:, H3:]
            else:
                gh_f = jnp.dot(h_f.astype(jnp.bfloat16), whh_ref[0],
                               preferred_element_type=jnp.float32)
                gh_b = jnp.dot(h_b.astype(jnp.bfloat16), whh_ref[1],
                               preferred_element_type=jnp.float32)
            hf_new = gru_gates(gi_f_ref[tf], gh_f, bhn_f, h_f)
            hb_new = gru_gates(gi_b_ref[tb], gh_b, bhn_b, h_b)
            # Unmasked stores; padded positions are zeroed once in the epilogue.
            cap_ref[tf] = hf_new.astype(cap_ref.dtype)           # raw fwd outputs
            bwd_ref[tb] = hb_new                                 # raw bwd outputs
            # Forward carry needs no mask: outputs at t<L never see steps >= L.
            # Backward carry must stay zero until tb < length (packed-GRU start).
            h_b = jnp.where(tb < lengths, hb_new, h_b)
            return hf_new, h_b

        h0 = jnp.zeros((Bt, H), jnp.float32)
        lax.fori_loop(0, t_max, body, (h0, h0))

        # ---- vectorized epilogue: pad-mask, combine, l2norm, mean, l2norm ----
        t_idx = lax.broadcasted_iota(jnp.int32, (S, Bt, 1), 0)
        valid = t_idx < lengths[None, :, :]                      # [S, Bt, 1]
        comb = jnp.where(valid,
                         (cap_ref[...].astype(jnp.float32) + bwd_ref[...]) * 0.5,
                         0.0)                                    # [S, Bt, H]
        norm = jnp.sqrt(jnp.sum(comb * comb, axis=-1, keepdims=True)) + eps
        comb = comb * pl.reciprocal(norm, approx=True)           # l2norm(cap_emb, dim=-1)
        cap_ref[...] = comb.astype(cap_ref.dtype)

        mean = jnp.sum(comb, axis=0) * (1.0 / S)                 # torch.mean over padded S
        mnorm = jnp.sqrt(jnp.sum(mean * mean, axis=-1, keepdims=True)) + eps
        mean_ref[...] = mean / mnorm                             # exact recip (1 tiny vector)
    return kernel


# ----------------------------------------------------------------------------
# Wrapper (glue: embedding gather, weight fusion, pallas_call)
# ----------------------------------------------------------------------------
def encoder_text_forward(tokens, lengths, params, *, b_tile=32, fuse_recurrent=None,
                         batch_first=False, cap_dtype=jnp.float32):
    """tokens: [B, S] int32, lengths: [B] int32 (max(lengths) == S).

    Returns (cap_emb, cap_emb_mean). cap_emb is TIME-MAJOR [S, B, H] by default
    (avoids a full HBM transpose pass); pass batch_first=True for PyTorch layout.
    cap_dtype=jnp.bfloat16 halves the dominant HBM write if downstream tolerates it.
    """
    embed = params["embed"]
    D = embed.shape[1]
    H = params["whh_f"].shape[-1]
    B, S = tokens.shape
    assert B % b_tile == 0, "batch must be a multiple of b_tile"
    n_tiles = B // b_tile

    # Block-diagonal fwd/bwd weight fusion only pays off on 256-deep MXUs (v6e/v7x).
    if fuse_recurrent is None:
        try:
            kind = jax.devices()[0].device_kind.lower()
            fuse_recurrent = not any(t in kind for t in ("v2", "v3", "v4", "v5"))
        except Exception:
            fuse_recurrent = True

    # Time-major gather directly (no separate HBM transpose of the embeddings).
    # dropout: identity (eval mode).
    x_tm = embed[tokens.T].astype(jnp.bfloat16)                  # [S, B, D]

    def fuse_dir(wih, whh, bih, bhh):
        wih_fused = jnp.concatenate([wih[0], wih[1], wih[2]], axis=1)            # [D, 3H]
        whh_fused = jnp.concatenate([whh[0], whh[1], whh[2]], axis=1)            # [H, 3H]
        b_in = jnp.concatenate([bih[0] + bhh[0], bih[1] + bhh[1], bih[2]], axis=1)  # [1,3H]
        b_hn = bhh[2]                                                            # [1, H]
        return wih_fused, whh_fused, b_in, b_hn

    wih_fw, whh_fw, bin_fw, bhn_fw = fuse_dir(params["wih_f"], params["whh_f"],
                                              params["bih_f"], params["bhh_f"])
    wih_bw, whh_bw, bin_bw, bhn_bw = fuse_dir(params["wih_b"], params["whh_b"],
                                              params["bih_b"], params["bhh_b"])

    wih_all = jnp.concatenate([wih_fw, wih_bw], axis=1).astype(jnp.bfloat16)     # [D, 6H]
    if fuse_recurrent:
        zpad = jnp.zeros((H, 3 * H), jnp.float32)
        whh_all = jnp.concatenate(
            [jnp.concatenate([whh_fw, zpad], axis=1),
             jnp.concatenate([zpad, whh_bw], axis=1)], axis=0).astype(jnp.bfloat16)  # [2H,6H]
        whh_block = (2 * H, 6 * H)
        whh_imap = lambda i, tm: (0, 0)
    else:
        whh_all = jnp.stack([whh_fw, whh_bw], axis=0).astype(jnp.bfloat16)       # [2, H, 3H]
        whh_block = (2, H, 3 * H)
        whh_imap = lambda i, tm: (0, 0, 0)
    bin_all = jnp.concatenate([bin_fw, bin_bw], axis=0).astype(jnp.float32)      # [2, 3H]
    bhn_all = jnp.concatenate([bhn_fw, bhn_bw], axis=0).astype(jnp.float32)      # [2, H]

    lengths = lengths.astype(jnp.int32)
    len2 = lengths.reshape(B, 1)
    # Per-tile max length (scalar prefetch) -> robust to unsorted lengths.
    tile_max = jnp.max(lengths.reshape(n_tiles, b_tile), axis=1)                 # [n_tiles]

    # ---- generation-aware VMEM budget (v7x has 64 MiB/TC, v5e/v6e 128 MiB) ----
    def nbytes(shape, dtype):
        return int(np.prod(shape)) * jnp.dtype(dtype).itemsize

    cap_itemsize = jnp.dtype(cap_dtype).itemsize
    blocks = 2 * (nbytes((S, b_tile, D), jnp.bfloat16)           # x (double-buffered)
                  + nbytes((b_tile, 128), jnp.int32)             # lengths (lane-padded)
                  + nbytes((D, 6 * H), jnp.bfloat16)             # wih (constant index)
                  + nbytes(whh_block, jnp.bfloat16)              # whh (constant index)
                  + nbytes((8, 3 * H), jnp.float32)              # bin (sublane-padded)
                  + nbytes((8, H), jnp.float32)                  # bhn
                  + int(np.prod((S, b_tile, H))) * cap_itemsize  # cap out
                  + nbytes((b_tile, H), jnp.float32))            # mean out
    scratch = (2 * nbytes((S, b_tile, 3 * H), jnp.bfloat16)      # gi fwd/bwd (bf16)
               + nbytes((S, b_tile, H), jnp.float32))            # raw bwd outputs
    needed = blocks + scratch
    try:
        vmem_cap = int(pltpu.get_tpu_info().vmem_capacity_bytes)
    except Exception:
        vmem_cap = 64 << 20                                      # conservative (v7x per-TC)
    vmem_limit = int(min(2 * needed + (8 << 20), vmem_cap - (2 << 20)))

    grid_spec = pltpu.PrefetchScalarGridSpec(
        num_scalar_prefetch=1,
        grid=(n_tiles,),
        in_specs=[
            pl.BlockSpec((S, b_tile, D), lambda i, tm: (0, i, 0)),   # x (time-major)
            pl.BlockSpec((b_tile, 1),    lambda i, tm: (i, 0)),      # lengths (VMEM)
            pl.BlockSpec((D, 6 * H),     lambda i, tm: (0, 0)),      # Wih fused (resident)
            pl.BlockSpec(whh_block,      whh_imap),                  # Whh (block-diag or stacked)
            pl.BlockSpec((2, 3 * H),     lambda i, tm: (0, 0)),      # fused input biases
            pl.BlockSpec((2, H),         lambda i, tm: (0, 0)),      # bhh_n fwd/bwd
        ],
        out_specs=(
            pl.BlockSpec((S, b_tile, H), lambda i, tm: (0, i, 0)),   # cap (time-major)
            pl.BlockSpec((b_tile, H),    lambda i, tm: (i, 0)),      # cap mean
        ),
        scratch_shapes=[
            pltpu.VMEM((S, b_tile, 3 * H), jnp.bfloat16),            # gi fwd (bf16)
            pltpu.VMEM((S, b_tile, 3 * H), jnp.bfloat16),            # gi bwd (bf16)
            pltpu.VMEM((S, b_tile, H), jnp.float32),                 # raw bwd outputs
        ],
    )

    cap_tm, cap_mean = pl.pallas_call(
        _make_kernel(fuse_recurrent),
        out_shape=(jax.ShapeDtypeStruct((S, B, H), cap_dtype),
                   jax.ShapeDtypeStruct((B, H), jnp.float32)),
        grid_spec=grid_spec,
        compiler_params=pltpu.CompilerParams(
            dimension_semantics=("parallel",),
            vmem_limit_bytes=vmem_limit),
    )(tile_max, x_tm, len2, wih_all, whh_all, bin_all, bhn_all)

    if batch_first:
        # PyTorch layout parity; costs one extra XLA transpose HBM pass.
        return jnp.transpose(cap_tm, (1, 0, 2)), cap_mean
    return cap_tm, cap_mean


# ----------------------------------------------------------------------------
# Pure NumPy reference (mirrors PyTorch packed BiGRU + l2norm + mean)
# ----------------------------------------------------------------------------
def _ref_forward(tokens, lengths, p):
    emb = np.asarray(p["embed"])[np.asarray(tokens)]             # [B, S, D]
    B, S, _ = emb.shape
    H = p["whh_f"].shape[-1]
    sig = lambda v: 1.0 / (1.0 + np.exp(-v))

    def run_dir(wih, whh, bih, bhh, reverse):
        out = np.zeros((B, S, H), np.float32)
        for b in range(B):
            h = np.zeros(H, np.float32)
            L = int(lengths[b])
            ts = range(L - 1, -1, -1) if reverse else range(L)
            for t in ts:
                xt = emb[b, t]
                r = sig(xt @ wih[0] + bih[0, 0] + h @ whh[0] + bhh[0, 0])
                z = sig(xt @ wih[1] + bih[1, 0] + h @ whh[1] + bhh[1, 0])
                n = np.tanh(xt @ wih[2] + bih[2, 0] + r * (h @ whh[2] + bhh[2, 0]))
                h = (1.0 - z) * n + z * h
                out[b, t] = h
        return out

    npf = lambda k: np.asarray(p[k], np.float32)
    of = run_dir(npf("wih_f"), npf("whh_f"), npf("bih_f"), npf("bhh_f"), False)
    ob = run_dir(npf("wih_b"), npf("whh_b"), npf("bih_b"), npf("bhh_b"), True)
    cap = (of + ob) / 2.0
    eps = 1e-8
    cap = cap / (np.sqrt((cap ** 2).sum(-1, keepdims=True)) + eps)
    mean = cap.mean(1)
    mean = mean / (np.sqrt((mean ** 2).sum(-1, keepdims=True)) + eps)
    return cap, mean


# ----------------------------------------------------------------------------
# Deterministic parameter init + demo
# ----------------------------------------------------------------------------
def init_params(key, vocab_size, word_dim, embed_size):
    ks = jax.random.split(key, 9)
    xav = np.sqrt(6.0 / (vocab_size + word_dim))
    k = 1.0 / np.sqrt(embed_size)
    u = lambda kk, shape, b: jax.random.uniform(kk, shape, jnp.float32, -b, b)
    return {
        "embed": u(ks[0], (vocab_size, word_dim), xav),
        "wih_f": u(ks[1], (3, word_dim, embed_size), k),
        "whh_f": u(ks[2], (3, embed_size, embed_size), k),
        "bih_f": u(ks[3], (3, 1, embed_size), k),
        "bhh_f": u(ks[4], (3, 1, embed_size), k),
        "wih_b": u(ks[5], (3, word_dim, embed_size), k),
        "whh_b": u(ks[6], (3, embed_size, embed_size), k),
        "bih_b": u(ks[7], (3, 1, embed_size), k),
        "bhh_b": u(ks[8], (3, 1, embed_size), k),
    }


if __name__ == "__main__":
    # Small but vreg-friendly shapes: H multiple of 128, b_tile=32, 2 grid tiles.
    VOCAB, WORD_DIM, EMBED_SIZE = 50, 64, 128
    B, S = 64, 8

    key = jax.random.PRNGKey(0)
    k_par, k_tok = jax.random.split(key)
    params = init_params(k_par, VOCAB, WORD_DIM, EMBED_SIZE)

    tokens = jax.random.randint(k_tok, (B, S), 0, VOCAB, dtype=jnp.int32)
    # Sorted descending (pack_padded_sequence convention), max == S.
    lengths_np = np.clip(S - np.arange(B) // 8, 1, S).astype(np.int32)
    lengths = jnp.asarray(lengths_np)

    cap_tm, cap_emb_mean = encoder_text_forward(tokens, lengths, params, b_tile=32)
    cap_tm = jax.block_until_ready(cap_tm)                       # time-major [S, B, H]
    cap_emb_mean = jax.block_until_ready(cap_emb_mean)

    ref_cap, ref_mean = _ref_forward(np.asarray(tokens), lengths_np, params)
    # bf16 MXU operands + bf16 gi scratch + approx reciprocal -> relaxed tolerance.
    np.testing.assert_allclose(np.asarray(cap_tm).transpose(1, 0, 2), ref_cap,
                               rtol=2e-2, atol=2e-2)
    np.testing.assert_allclose(np.asarray(cap_emb_mean), ref_mean, rtol=2e-2, atol=2e-2)

    print("KERNEL_OK")
</pallas_src>

<mosaic_0001>
module attributes {stable_mosaic.version = 11 : i64} {
  func.func @kernel(%arg0: i32, %arg1: memref<2xi32, #tpu.memory_space<smem>>, %arg2: memref<8x32x64xbf16, #tpu.memory_space<vmem>>, %arg3: memref<32x1xi32, #tpu.memory_space<vmem>>, %arg4: memref<64x768xbf16, #tpu.memory_space<vmem>>, %arg5: memref<256x768xbf16, #tpu.memory_space<vmem>>, %arg6: memref<2x384xf32, #tpu.memory_space<vmem>>, %arg7: memref<2x128xf32, #tpu.memory_space<vmem>>, %arg8: memref<8x32x128xf32, #tpu.memory_space<vmem>>, %arg9: memref<32x128xf32, #tpu.memory_space<vmem>>, %arg10: memref<8x32x384xbf16, #tpu.memory_space<vmem>>, %arg11: memref<8x32x384xbf16, #tpu.memory_space<vmem>>, %arg12: memref<8x32x128xf32, #tpu.memory_space<vmem>>) attributes {dimension_semantics = [#tpu.dimension_semantics<parallel>], iteration_bounds = array<i64: 2>, scalar_prefetch = 1 : i64, scratch_operands = 3 : i64, tpu.core_type = #tpu.core_type<tc>, window_params = [{transform_indices = @transform_0, window_bounds = array<i64: 8, 32, 64>}, {transform_indices = @transform_1, window_bounds = array<i64: 32, 1>}, {pipeline_mode = #tpu.pipeline_mode<synchronous>, transform_indices = @transform_2, window_bounds = array<i64: 64, 768>}, {pipeline_mode = #tpu.pipeline_mode<synchronous>, transform_indices = @transform_3, window_bounds = array<i64: 256, 768>}, {pipeline_mode = #tpu.pipeline_mode<synchronous>, transform_indices = @transform_4, window_bounds = array<i64: 2, 384>}, {pipeline_mode = #tpu.pipeline_mode<synchronous>, transform_indices = @transform_5, window_bounds = array<i64: 2, 128>}, {transform_indices = @transform_6, window_bounds = array<i64: 8, 32, 128>}, {transform_indices = @transform_7, window_bounds = array<i64: 32, 128>}]} {
    %0 = arith.index_cast %arg0 : i32 to index
    %1 = memref.load %arg1[%0] : memref<2xi32, #tpu.memory_space<smem>>
    %c0 = arith.constant 0 : index
    %c0_0 = arith.constant 0 : index
    %2 = vector.load %arg3[%c0, %c0_0] : memref<32x1xi32, #tpu.memory_space<vmem>>, vector<32x1xi32>
    %c0_1 = arith.constant 0 : index
    %c0_2 = arith.constant 0 : index
    %c0_3 = arith.constant 0 : index
    %3 = vector.load %arg2[%c0_1, %c0_2, %c0_3] : memref<8x32x64xbf16, #tpu.memory_space<vmem>>, vector<8x32x64xbf16>
    %4 = vector.shape_cast %3 : vector<8x32x64xbf16> to vector<256x64xbf16>
    %c0_4 = arith.constant 0 : index
    %c0_5 = arith.constant 0 : index
    %5 = vector.load %arg4[%c0_4, %c0_5] : memref<64x768xbf16, #tpu.memory_space<vmem>>, vector<64x768xbf16>
    %cst = arith.constant dense<0.000000e+00> : vector<256x768xf32>
    %6 = tpu.matmul %4, %5, %cst {dimension_numbers = #tpu.dot_dimension_numbers<[1], [0], [0], [1], [0, 0, 1, 1], [], []>} : vector<256x64xbf16>, vector<64x768xbf16>, vector<256x768xf32> -> vector<256x768xf32>
    %7 = vector.extract_strided_slice %6 {offsets = [0, 0], sizes = [256, 384], strides = [1, 1]} : vector<256x768xf32> to vector<256x384xf32>
    %c0_6 = arith.constant 0 : index
    %c0_7 = arith.constant 0 : index
    %8 = vector.load %arg6[%c0_6, %c0_7] : memref<2x384xf32, #tpu.memory_space<vmem>>, vector<1x384xf32>
    %9 = vector.broadcast %8 : vector<1x384xf32> to vector<256x384xf32>
    %10 = arith.addf %7, %9 : vector<256x384xf32>
    %11 = vector.shape_cast %10 : vector<256x384xf32> to vector<8x32x384xf32>
    %12 = arith.truncf %11 : vector<8x32x384xf32> to vector<8x32x384xbf16>
    %c0_8 = arith.constant 0 : index
    %c0_9 = arith.constant 0 : index
    %c0_10 = arith.constant 0 : index
    %13 = vector.load %arg10[%c0_8, %c0_9, %c0_10] : memref<8x32x384xbf16, #tpu.memory_space<vmem>>, vector<8x32x384xbf16>
    tpu.vector_store %arg10[%c0_8, %c0_9, %c0_10], %12 {strides = array<i32>} : memref<8x32x384xbf16, #tpu.memory_space<vmem>>, vector<8x32x384xbf16>,
    %14 = vector.extract_strided_slice %6 {offsets = [0, 384], sizes = [256, 384], strides = [1, 1]} : vector<256x768xf32> to vector<256x384xf32>
    %c1 = arith.constant 1 : index
    %c0_11 = arith.constant 0 : index
    %15 = vector.load %arg6[%c1, %c0_11] : memref<2x384xf32, #tpu.memory_space<vmem>>, vector<1x384xf32>
    %16 = vector.broadcast %15 : vector<1x384xf32> to vector<256x384xf32>
    %17 = arith.addf %14, %16 : vector<256x384xf32>
    %18 = vector.shape_cast %17 : vector<256x384xf32> to vector<8x32x384xf32>
    %19 = arith.truncf %18 : vector<8x32x384xf32> to vector<8x32x384xbf16>
    %c0_12 = arith.constant 0 : index
    %c0_13 = arith.constant 0 : index
    %c0_14 = arith.constant 0 : index
    %20 = vector.load %arg11[%c0_12, %c0_13, %c0_14] : memref<8x32x384xbf16, #tpu.memory_space<vmem>>, vector<8x32x384xbf16>
    tpu.vector_store %arg11[%c0_12, %c0_13, %c0_14], %19 {strides = array<i32>} : memref<8x32x384xbf16, #tpu.memory_space<vmem>>, vector<8x32x384xbf16>,
    %c0_15 = arith.constant 0 : index
    %c0_16 = arith.constant 0 : index
    %21 = vector.load %arg7[%c0_15, %c0_16] : memref<2x128xf32, #tpu.memory_space<vmem>>, vector<1x128xf32>
    %c1_17 = arith.constant 1 : index
    %c0_18 = arith.constant 0 : index
    %22 = vector.load %arg7[%c1_17, %c0_18] : memref<2x128xf32, #tpu.memory_space<vmem>>, vector<1x128xf32>
    %cst_19 = arith.constant 0.000000e+00 : f32
    %23 = vector.broadcast %cst_19 : f32 to vector<32x128xf32>
    %c0_i32 = arith.constant 0 : i32
    %24 = arith.subi %1, %c0_i32 : i32
    %25 = arith.addi %c0_i32, %24 : i32
    %c1_i32 = arith.constant 1 : i32
    %26:2 = scf.for %arg13 = %c0_i32 to %25 step %c1_i32 iter_args(%arg14 = %23, %arg15 = %23) -> (vector<32x128xf32>, vector<32x128xf32>)  : i32 {
      %c1_i32_39 = arith.constant 1 : i32
      %62 = arith.subi %1, %c1_i32_39 : i32
      %63 = arith.subi %62, %arg13 : i32
      %64 = tpu.concatenate %arg14, %arg15 in 1 : vector<32x128xf32>, vector<32x128xf32> -> vector<32x256xf32>
      %65 = arith.truncf %64 : vector<32x256xf32> to vector<32x256xbf16>
      %c0_40 = arith.constant 0 : index
      %c0_41 = arith.constant 0 : index
      %66 = vector.load %arg5[%c0_40, %c0_41] : memref<256x768xbf16, #tpu.memory_space<vmem>>, vector<256x768xbf16>
      %cst_42 = arith.constant dense<0.000000e+00> : vector<32x768xf32>
      %67 = tpu.matmul %65, %66, %cst_42 {dimension_numbers = #tpu.dot_dimension_numbers<[1], [0], [0], [1], [0, 0, 1, 1], [], []>} : vector<32x256xbf16>, vector<256x768xbf16>, vector<32x768xf32> -> vector<32x768xf32>
      %68 = vector.extract_strided_slice %67 {offsets = [0, 0], sizes = [32, 384], strides = [1, 1]} : vector<32x768xf32> to vector<32x384xf32>
      %69 = vector.extract_strided_slice %67 {offsets = [0, 384], sizes = [32, 384], strides = [1, 1]} : vector<32x768xf32> to vector<32x384xf32>
      %70 = arith.index_cast %arg13 : i32 to index
      %c0_43 = arith.constant 0 : index
      %c0_44 = arith.constant 0 : index
      %71 = vector.load %arg10[%70, %c0_43, %c0_44] : memref<8x32x384xbf16, #tpu.memory_space<vmem>>, vector<1x32x384xbf16>
      %72 = vector.shape_cast %71 : vector<1x32x384xbf16> to vector<32x384xbf16>
      %73 = vector.extract_strided_slice %72 {offsets = [0, 0], sizes = [32, 256], strides = [1, 1]} : vector<32x384xbf16> to vector<32x256xbf16>
      %74 = arith.extf %73 : vector<32x256xbf16> to vector<32x256xf32>
      %75 = vector.extract_strided_slice %68 {offsets = [0, 0], sizes = [32, 256], strides = [1, 1]} : vector<32x384xf32> to vector<32x256xf32>
      %76 = arith.addf %74, %75 : vector<32x256xf32>
      %77 = arith.negf %76 : vector<32x256xf32>
      %78 = math.exp %77 : vector<32x256xf32>
      %cst_45 = arith.constant 1.000000e+00 : f32
      %79 = vector.broadcast %cst_45 : f32 to vector<32x256xf32>
      %80 = arith.addf %79, %78 : vector<32x256xf32>
      %81 = arith.divf %79, %80 : vector<32x256xf32>
      %82 = vector.extract_strided_slice %81 {offsets = [0, 0], sizes = [32, 128], strides = [1, 1]} : vector<32x256xf32> to vector<32x128xf32>
      %83 = vector.extract_strided_slice %81 {offsets = [0, 128], sizes = [32, 128], strides = [1, 1]} : vector<32x256xf32> to vector<32x128xf32>
      %84 = vector.extract_strided_slice %72 {offsets = [0, 256], sizes = [32, 128], strides = [1, 1]} : vector<32x384xbf16> to vector<32x128xbf16>
      %85 = arith.extf %84 : vector<32x128xbf16> to vector<32x128xf32>
      %86 = vector.extract_strided_slice %68 {offsets = [0, 256], sizes = [32, 128], strides = [1, 1]} : vector<32x384xf32> to vector<32x128xf32>
      %87 = vector.broadcast %21 : vector<1x128xf32> to vector<32x128xf32>
      %88 = arith.addf %86, %87 : vector<32x128xf32>
      %89 = arith.mulf %82, %88 : vector<32x128xf32>
      %90 = arith.addf %85, %89 : vector<32x128xf32>
      %91 = math.tanh %90 : vector<32x128xf32>
      %cst_46 = arith.constant 1.000000e+00 : f32
      %92 = vector.broadcast %cst_46 : f32 to vector<32x128xf32>
      %93 = arith.subf %92, %83 : vector<32x128xf32>
      %94 = arith.mulf %93, %91 : vector<32x128xf32>
      %95 = arith.mulf %83, %arg14 : vector<32x128xf32>
      %96 = arith.addf %94, %95 : vector<32x128xf32>
      %97 = arith.index_cast %63 : i32 to index
      %c0_47 = arith.constant 0 : index
      %c0_48 = arith.constant 0 : index
      %98 = vector.load %arg11[%97, %c0_47, %c0_48] : memref<8x32x384xbf16, #tpu.memory_space<vmem>>, vector<1x32x384xbf16>
      %99 = vector.shape_cast %98 : vector<1x32x384xbf16> to vector<32x384xbf16>
      %100 = vector.extract_strided_slice %99 {offsets = [0, 0], sizes = [32, 256], strides = [1, 1]} : vector<32x384xbf16> to vector<32x256xbf16>
      %101 = arith.extf %100 : vector<32x256xbf16> to vector<32x256xf32>
      %102 = vector.extract_strided_slice %69 {offsets = [0, 0], sizes = [32, 256], strides = [1, 1]} : vector<32x384xf32> to vector<32x256xf32>
      %103 = arith.addf %101, %102 : vector<32x256xf32>
      %104 = arith.negf %103 : vector<32x256xf32>
      %105 = math.exp %104 : vector<32x256xf32>
      %cst_49 = arith.constant 1.000000e+00 : f32
      %106 = vector.broadcast %cst_49 : f32 to vector<32x256xf32>
      %107 = arith.addf %106, %105 : vector<32x256xf32>
      %108 = arith.divf %106, %107 : vector<32x256xf32>
      %109 = vector.extract_strided_slice %108 {offsets = [0, 0], sizes = [32, 128], strides = [1, 1]} : vector<32x256xf32> to vector<32x128xf32>
      %110 = vector.extract_strided_slice %108 {offsets = [0, 128], sizes = [32, 128], strides = [1, 1]} : vector<32x256xf32> to vector<32x128xf32>
      %111 = vector.extract_strided_slice %99 {offsets = [0, 256], sizes = [32, 128], strides = [1, 1]} : vector<32x384xbf16> to vector<32x128xbf16>
      %112 = arith.extf %111 : vector<32x128xbf16> to vector<32x128xf32>
      %113 = vector.extract_strided_slice %69 {offsets = [0, 256], sizes = [32, 128], strides = [1, 1]} : vector<32x384xf32> to vector<32x128xf32>
      %114 = vector.broadcast %22 : vector<1x128xf32> to vector<32x128xf32>
      %115 = arith.addf %113, %114 : vector<32x128xf32>
      %116 = arith.mulf %109, %115 : vector<32x128xf32>
      %117 = arith.addf %112, %116 : vector<32x128xf32>
      %118 = math.tanh %117 : vector<32x128xf32>
      %cst_50 = arith.constant 1.000000e+00 : f32
      %119 = vector.broadcast %cst_50 : f32 to vector<32x128xf32>
      %120 = arith.subf %119, %110 : vector<32x128xf32>
      %121 = arith.mulf %120, %118 : vector<32x128xf32>
      %122 = arith.mulf %110, %arg15 : vector<32x128xf32>
      %123 = arith.addf %121, %122 : vector<32x128xf32>
      %124 = arith.index_cast %arg13 : i32 to index
      %c0_51 = arith.constant 0 : index
      %c0_52 = arith.constant 0 : index
      %125 = vector.load %arg8[%124, %c0_51, %c0_52] : memref<8x32x128xf32, #tpu.memory_space<vmem>>, vector<1x32x128xf32>
      %126 = vector.shape_cast %125 : vector<1x32x128xf32> to vector<32x128xf32>
      %127 = vector.shape_cast %96 : vector<32x128xf32> to vector<1x32x128xf32>
      tpu.vector_store %arg8[%124, %c0_51, %c0_52], %127 {strides = array<i32>} : memref<8x32x128xf32, #tpu.memory_space<vmem>>, vector<1x32x128xf32>,
      %128 = arith.index_cast %63 : i32 to index
      %c0_53 = arith.constant 0 : index
      %c0_54 = arith.constant 0 : index
      %129 = vector.load %arg12[%128, %c0_53, %c0_54] : memref<8x32x128xf32, #tpu.memory_space<vmem>>, vector<1x32x128xf32>
      %130 = vector.shape_cast %129 : vector<1x32x128xf32> to vector<32x128xf32>
      %131 = vector.shape_cast %123 : vector<32x128xf32> to vector<1x32x128xf32>
      tpu.vector_store %arg12[%128, %c0_53, %c0_54], %131 {strides = array<i32>} : memref<8x32x128xf32, #tpu.memory_space<vmem>>, vector<1x32x128xf32>,
      %132 = vector.broadcast %63 : i32 to vector<32x1xi32>
      %133 = arith.cmpi slt, %132, %2 : vector<32x1xi32>
      %134 = vector.shape_cast %133 : vector<32x1xi1> to vector<32x1xi1>
      %135 = vector.broadcast %134 : vector<32x1xi1> to vector<32x128xi1>
      %136 = arith.select %135, %123, %arg15 : vector<32x128xi1>, vector<32x128xf32>
      scf.yield %96, %136 : vector<32x128xf32>, vector<32x128xf32>
    }
    %27 = tpu.iota {dimensions = array<i32: 0>} : vector<8x32x1xi32>
    %28 = vector.shape_cast %2 : vector<32x1xi32> to vector<1x32x1xi32>
    %29 = vector.broadcast %28 : vector<1x32x1xi32> to vector<8x32x1xi32>
    %30 = arith.cmpi slt, %27, %29 : vector<8x32x1xi32>
    %c0_20 = arith.constant 0 : index
    %c0_21 = arith.constant 0 : index
    %c0_22 = arith.constant 0 : index
    %31 = vector.load %arg8[%c0_20, %c0_21, %c0_22] : memref<8x32x128xf32, #tpu.memory_space<vmem>>, vector<8x32x128xf32>
    %c0_23 = arith.constant 0 : index
    %c0_24 = arith.constant 0 : index
    %c0_25 = arith.constant 0 : index
    %32 = vector.load %arg12[%c0_23, %c0_24, %c0_25] : memref<8x32x128xf32, #tpu.memory_space<vmem>>, vector<8x32x128xf32>
    %33 = arith.addf %31, %32 : vector<8x32x128xf32>
    %cst_26 = arith.constant 5.000000e-01 : f32
    %34 = vector.broadcast %cst_26 : f32 to vector<8x32x128xf32>
    %35 = arith.mulf %33, %34 : vector<8x32x128xf32>
    %cst_27 = arith.constant 0.000000e+00 : f32
    %36 = vector.shape_cast %30 : vector<8x32x1xi1> to vector<8x32x1xi1>
    %37 = vector.broadcast %36 : vector<8x32x1xi1> to vector<8x32x128xi1>
    %38 = vector.broadcast %cst_27 : f32 to vector<8x32x128xf32>
    %39 = arith.select %37, %35, %38 : vector<8x32x128xi1>, vector<8x32x128xf32>
    %40 = arith.mulf %39, %39 : vector<8x32x128xf32>
    %cst_28 = arith.constant dense<0.000000e+00> : vector<8x32xf32>
    %41 = vector.multi_reduction <add>, %40, %cst_28 [2] : vector<8x32x128xf32> to vector<8x32xf32>
    %42 = vector.shape_cast %41 : vector<8x32xf32> to vector<8x32x1xf32>
    %43 = math.sqrt %42 : vector<8x32x1xf32>
    %cst_29 = arith.constant 9.99999993E-9 : f32
    %44 = vector.broadcast %cst_29 : f32 to vector<8x32x1xf32>
    %45 = arith.addf %43, %44 : vector<8x32x1xf32>
    %46 = tpu.reciprocal %45 {approx = true} : vector<8x32x1xf32> -> vector<8x32x1xf32>
    %47 = vector.broadcast %46 : vector<8x32x1xf32> to vector<8x32x128xf32>
    %48 = arith.mulf %39, %47 : vector<8x32x128xf32>
    %c0_30 = arith.constant 0 : index
    %c0_31 = arith.constant 0 : index
    %c0_32 = arith.constant 0 : index
    %49 = vector.load %arg8[%c0_30, %c0_31, %c0_32] : memref<8x32x128xf32, #tpu.memory_space<vmem>>, vector<8x32x128xf32>
    tpu.vector_store %arg8[%c0_30, %c0_31, %c0_32], %48 {strides = array<i32>} : memref<8x32x128xf32, #tpu.memory_space<vmem>>, vector<8x32x128xf32>,
    %cst_33 = arith.constant dense<0.000000e+00> : vector<32x128xf32>
    %50 = vector.multi_reduction <add>, %48, %cst_33 [0] : vector<8x32x128xf32> to vector<32x128xf32>
    %cst_34 = arith.constant 1.250000e-01 : f32
    %51 = vector.broadcast %cst_34 : f32 to vector<32x128xf32>
    %52 = arith.mulf %50, %51 : vector<32x128xf32>
    %53 = arith.mulf %52, %52 : vector<32x128xf32>
    %cst_35 = arith.constant dense<0.000000e+00> : vector<32xf32>
    %54 = vector.multi_reduction <add>, %53, %cst_35 [1] : vector<32x128xf32> to vector<32xf32>
    %55 = vector.shape_cast %54 : vector<32xf32> to vector<32x1xf32>
    %56 = math.sqrt %55 : vector<32x1xf32>
    %cst_36 = arith.constant 9.99999993E-9 : f32
    %57 = vector.broadcast %cst_36 : f32 to vector<32x1xf32>
    %58 = arith.addf %56, %57 : vector<32x1xf32>
    %59 = vector.broadcast %58 : vector<32x1xf32> to vector<32x128xf32>
    %60 = arith.divf %52, %59 : vector<32x128xf32>
    %c0_37 = arith.constant 0 : index
    %c0_38 = arith.constant 0 : index
    %61 = vector.load %arg9[%c0_37, %c0_38] : memref<32x128xf32, #tpu.memory_space<vmem>>, vector<32x128xf32>
    tpu.vector_store %arg9[%c0_37, %c0_38], %60 {strides = array<i32>} : memref<32x128xf32, #tpu.memory_space<vmem>>, vector<32x128xf32>,
    return
  }
  func.func @transform_0(%arg0: i32, %arg1: memref<2xi32, #tpu.memory_space<smem>>) -> (i32, i32, i32) {
    %c0_i32 = arith.constant 0 : i32
    %c0_i32_0 = arith.constant 0 : i32
    %c0_i32_1 = arith.constant 0 : i32
    return %c0_i32, %arg0, %c0_i32_0 : i32, i32, i32
  }
  func.func @transform_1(%arg0: i32, %arg1: memref<2xi32, #tpu.memory_space<smem>>) -> (i32, i32) {
    %c0_i32 = arith.constant 0 : i32
    %c0_i32_0 = arith.constant 0 : i32
    return %arg0, %c0_i32 : i32, i32
  }
  func.func @transform_2(%arg0: i32, %arg1: memref<2xi32, #tpu.memory_space<smem>>) -> (i32, i32) {
    %c0_i32 = arith.constant 0 : i32
    %c0_i32_0 = arith.constant 0 : i32
    %c0_i32_1 = arith.constant 0 : i32
    return %c0_i32, %c0_i32_0 : i32, i32
  }
  func.func @transform_3(%arg0: i32, %arg1: memref<2xi32, #tpu.memory_space<smem>>) -> (i32, i32) {
    %c0_i32 = arith.constant 0 : i32
    %c0_i32_0 = arith.constant 0 : i32
    %c0_i32_1 = arith.constant 0 : i32
    return %c0_i32, %c0_i32_0 : i32, i32
  }
  func.func @transform_4(%arg0: i32, %arg1: memref<2xi32, #tpu.memory_space<smem>>) -> (i32, i32) {
    %c0_i32 = arith.constant 0 : i32
    %c0_i32_0 = arith.constant 0 : i32
    %c0_i32_1 = arith.constant 0 : i32
    return %c0_i32, %c0_i32_0 : i32, i32
  }
  func.func @transform_5(%arg0: i32, %arg1: memref<2xi32, #tpu.memory_space<smem>>) -> (i32, i32) {
    %c0_i32 = arith.constant 0 : i32
    %c0_i32_0 = arith.constant 0 : i32
    %c0_i32_1 = arith.constant 0 : i32
    return %c0_i32, %c0_i32_0 : i32, i32
  }
  func.func @transform_6(%arg0: i32, %arg1: memref<2xi32, #tpu.memory_space<smem>>) -> (i32, i32, i32) {
    %c0_i32 = arith.constant 0 : i32
    %c0_i32_0 = arith.constant 0 : i32
    %c0_i32_1 = arith.constant 0 : i32
    return %c0_i32, %arg0, %c0_i32_0 : i32, i32, i32
  }
  func.func @transform_7(%arg0: i32, %arg1: memref<2xi32, #tpu.memory_space<smem>>) -> (i32, i32) {
    %c0_i32 = arith.constant 0 : i32
    %c0_i32_0 = arith.constant 0 : i32
    return %arg0, %c0_i32 : i32, i32
  }
}

</mosaic_0001>

<llo_original>
// kernel: tpu_custom_call.1
$region0: #{tpu_custom_call.1}
  #allocation0 [shape = 'u32[]', space=smem, size = 0x4, offset = 0x4, fixed_abs, tag = 'smem constant byte address 0x4 - core index']
  #allocation1 [shape = 'u32[144,128]{1,0:T(1,128)}', space=vmem, size = 0x12000, scoped, tag = 'internal scratch']
  #allocation2 [shape = 'bf16[8,32,384]{2,1,0:T(16,128)(2,1)}', space=vmem, size = 0x30000, scoped, tag = 'scratch operand']
  #allocation3 [shape = 'bf16[8,32,384]{2,1,0:T(16,128)(2,1)}', space=vmem, size = 0x30000, scoped, tag = 'scratch operand']
  #allocation4 [shape = 'f32[8,32,128]{2,1,0:T(8,128)}', space=vmem, size = 0x20000, scoped, tag = 'scratch operand']
  #allocation5 [shape = 's32[1]{0}', space=sflag, size = 0x4, scoped, tag = 'scoped memory for tpu_custom_call.1']
  #allocation6 [shape = 'u8[512]{0}', space=smem, size = 0x200, scoped, tag = 'prefetched SMEM operand 0']
  #allocation16 [shape = 's32[]', space=sflag, size = 0x4, offset = 0, fixed_abs, tag = 'sflag constant byte address 0x0 - dummy sync flag']
  #allocation18 [shape = 's32[]', space=sflag, size = 0x4, offset = 0, fixed_abs, tag = 'sflag constant byte address 0x0 - dummy sync flag']
  %s0 = inlined_call_operand.vmem [shape: s32[2], index: 0, kind: input, shape index: {}]
  %s1 = inlined_call_operand.hbm [shape: bf16[8,64,64], index: 1, kind: input, shape index: {}]
  %s2 = inlined_call_operand.vmem [shape: s32[64,1], index: 2, kind: input, shape index: {}]
  %s3 = inlined_call_operand.hbm [shape: bf16[64,768], index: 3, kind: input, shape index: {}]
  %s4 = inlined_call_operand.hbm [shape: bf16[256,768], index: 4, kind: input, shape index: {}]
  %s5 = inlined_call_operand.vmem [shape: f32[2,384], index: 5, kind: input, shape index: {}]
  %s6 = inlined_call_operand.vmem [shape: f32[2,128], index: 6, kind: input, shape index: {}]
  %s7 = inlined_call_operand.hbm [shape: f32[8,64,128], index: 7, kind: output, shape index: {0}]
  %s8 = inlined_call_operand.hbm [shape: f32[64,128], index: 8, kind: output, shape index: {1}]
  %9 = xla_tuple %s7, %s8
  %s10 = sld [smem:[#allocation0]]
  $region84: #{tpu_custom_call.1} parent=0
    _
  %s12 = ssub.s32 1, %s10
  %s13 = scalar_select 0, %s12, %s10
  %s14 = sshll.u32 %s0, 4
  %s15 = int_to_ptr.vmem [resolvable:$true] %s14
  %17 = dma.vmem_to_smem %s15, 16, [#allocation6], [#allocation5]
  %18 = dma.done [#allocation5], 16
  %19 = sfence
  $region1: #{tpu_custom_call.1} parent=0
    #allocation7 [shape = 'u8[131072]{0}', space=vmem, size = 0x20000, scoped, tag = 'input window, operand 1']
    #allocation8 [shape = 's32[2]{0}', space=sflag, size = 0x8, scoped, tag = 'scoped memory for tpu_custom_call.1']
    #allocation9 [shape = 's32[2]{0}', space=sflag, size = 0x8, scoped, tag = 'scoped memory for tpu_custom_call.1']
    #allocation10 [shape = 'u8[98304]{0}', space=vmem, size = 0x18000, scoped, tag = 'input window, operand 3, single buffered']
    #allocation11 [shape = 's32[1]{0}', space=sflag, size = 0x4, scoped, tag = 'scoped memory for tpu_custom_call.1']
    #allocation12 [shape = 'u8[393216]{0}', space=vmem, size = 0x60000, scoped, tag = 'input window, operand 4, single buffered']
    #allocation13 [shape = 'u8[262144]{0}', space=vmem, size = 0x40000, scoped, tag = 'output window, operand 0']
    #allocation14 [shape = 'u8[32768]{0}', space=vmem, size = 0x8000, scoped, tag = 'output window, operand 1']
    #allocation15 [shape = 's32[2]{0}', space=sflag, size = 0x8, scoped, tag = 'scoped memory for tpu_custom_call.1']
    %20 = vsyncpa [#allocation8], 0
    %s21 = scalar_lea.sflag [#allocation8], 1
    %22 = vsyncpa %s21, 0
    %23 = vsyncpa [#allocation11], 0
    %24 = vsyncpa [#allocation9], 0
    %s25 = scalar_lea.sflag [#allocation9], 1
    %26 = vsyncpa %s25, 0
    %27 = vsyncpa [#allocation15], 0
    %s28 = scalar_lea.sflag [#allocation15], 1
    %29 = vsyncpa %s28, 0
    loop: start=0, step=1, limit=4
    $region2: #{tpu_custom_call.1} parent=1 // loop_pre_header
      _
    $region3: #{tpu_custom_call.1} parent=1 // loop_header
      %s31 = sphi 0, %s35
      %p32 = scmp.ge.s32.totalorder %s31, 4
      %s41 = sphi 0, %s43
      %s44 = sphi 0, %s41
      %s45 = sphi 0, %s44
      %s61 = sphi 0, %s45
      %s67 = sphi 0, %s69
      %s70 = sphi 0, %s67
      %s71 = sphi 0, %s70
      %s87 = sphi 0, %s71
      %s91 = sphi 0, %s91
      %s93 = sphi 0, %s91
      %s94 = sphi 0, %s93
      %s108 = sphi 0, %s94
      %s112 = sphi 0, %s112
      %s114 = sphi 0, %s112
      %s115 = sphi 0, %s114
      %s129 = sphi 0, %s115
      %s133 = sphi 0, %s133
      %s135 = sphi 0, %s133
      %s136 = sphi 0, %s135
      %s150 = sphi 0, %s136
      %s154 = sphi 0, %s154
      %s156 = sphi 0, %s154
      %s157 = sphi 0, %s156
      %s171 = sphi 0, %s157
      %s177 = sphi 0, %s179
      %s180 = sphi 0, %s177
      %s181 = sphi 0, %s180
      %s197 = sphi 0, %s181
      %s203 = sphi 0, %s205
      %s206 = sphi 0, %s203
      %s207 = sphi 0, %s206
      %s223 = sphi 0, %s207
    $region4: #{tpu_custom_call.1} parent=1 // loop_header_branch
      %34 = sbr.rel (%p32) target = $region8
    $region5: #{tpu_custom_call.1} parent=1 // loop_body
      %s36 = ssub.s32 %s31, 1
      %s37 = ssub.s32 %s31, 2
      %s38 = sadd.s32 %s31, 1
      %s39 = ssub.s32 %s31, %s38
      %p40 = scmp.eq.s32.totalorder %s39, 0
      %s42 = sadd.s32 %s41, 1
      %s43 = scalar_select %p40, %s41, %s42
      %p46 = pneg %p40
      %p47 = scmp.eq.s32.totalorder %s31, 1
      %p48 = por %p46, %p47
      %p49 = scmp.ne.s32.totalorder %s41, %s44
      %p50 = scmp.eq.s32.totalorder %s31, 0
      %p51 = por %p49, %p50
      %p52 = scmp.ne.s32.totalorder %s41, %s44
      %p53 = scmp.eq.s32.totalorder %s36, 1
      %p54 = por %p52, %p53
      %p55 = scmp.ne.s32.totalorder %s44, %s45
      %p56 = scmp.eq.s32.totalorder %s36, 0
      %p57 = por %p55, %p56
      %p58 = scmp.ne.s32.totalorder %s44, %s45
      %p59 = scmp.eq.s32.totalorder %s37, 1
      %p60 = por %p58, %p59
      %p62 = scmp.ne.s32.totalorder %s45, %s61
      %p63 = scmp.eq.s32.totalorder %s37, 0
      %p64 = por %p62, %p63
      %s65 = ssub.s32 %s31, %s38
      %p66 = scmp.eq.s32.totalorder %s65, 0
      %s68 = sadd.s32 %s67, 1
      %s69 = scalar_select %p66, %s67, %s68
      %p72 = pneg %p66
      %p73 = scmp.eq.s32.totalorder %s31, 1
      %p74 = por %p72, %p73
      %p75 = scmp.ne.s32.totalorder %s67, %s70
      %p76 = scmp.eq.s32.totalorder %s31, 0
      %p77 = por %p75, %p76
      %p78 = scmp.ne.s32.totalorder %s67, %s70
      %p79 = scmp.eq.s32.totalorder %s36, 1
      %p80 = por %p78, %p79
      %p81 = scmp.ne.s32.totalorder %s70, %s71
      %p82 = scmp.eq.s32.totalorder %s36, 0
      %p83 = por %p81, %p82
      %p84 = scmp.ne.s32.totalorder %s70, %s71
      %p85 = scmp.eq.s32.totalorder %s37, 1
      %p86 = por %p84, %p85
      %p88 = scmp.ne.s32.totalorder %s71, %s87
      %p89 = scmp.eq.s32.totalorder %s37, 0
      %p90 = por %p88, %p89
      %s92 = sadd.s32 %s91, 1
      %p95 = scmp.eq.s32.totalorder %s31, 1
      %p96 = scmp.ne.s32.totalorder %s91, %s93
      %p97 = scmp.eq.s32.totalorder %s31, 0
      %p98 = por %p96, %p97
      %p99 = scmp.ne.s32.totalorder %s91, %s93
      %p100 = scmp.eq.s32.totalorder %s36, 1
      %p101 = por %p99, %p100
      %p102 = scmp.ne.s32.totalorder %s93, %s94
      %p103 = scmp.eq.s32.totalorder %s36, 0
      %p104 = por %p102, %p103
      %p105 = scmp.ne.s32.totalorder %s93, %s94
      %p106 = scmp.eq.s32.totalorder %s37, 1
      %p107 = por %p105, %p106
      %p109 = scmp.ne.s32.totalorder %s94, %s108
      %p110 = scmp.eq.s32.totalorder %s37, 0
      %p111 = por %p109, %p110
      %s113 = sadd.s32 %s112, 1
      %p116 = scmp.eq.s32.totalorder %s31, 1
      %p117 = scmp.ne.s32.totalorder %s112, %s114
      %p118 = scmp.eq.s32.totalorder %s31, 0
      %p119 = por %p117, %p118
      %p120 = scmp.ne.s32.totalorder %s112, %s114
      %p121 = scmp.eq.s32.totalorder %s36, 1
      %p122 = por %p120, %p121
      %p123 = scmp.ne.s32.totalorder %s114, %s115
      %p124 = scmp.eq.s32.totalorder %s36, 0
      %p125 = por %p123, %p124
      %p126 = scmp.ne.s32.totalorder %s114, %s115
      %p127 = scmp.eq.s32.totalorder %s37, 1
      %p128 = por %p126, %p127
      %p130 = scmp.ne.s32.totalorder %s115, %s129
      %p131 = scmp.eq.s32.totalorder %s37, 0
      %p132 = por %p130, %p131
      %s134 = sadd.s32 %s133, 1
      %p137 = scmp.eq.s32.totalorder %s31, 1
      %p138 = scmp.ne.s32.totalorder %s133, %s135
      %p139 = scmp.eq.s32.totalorder %s31, 0
      %p140 = por %p138, %p139
      %p141 = scmp.ne.s32.totalorder %s133, %s135
      %p142 = scmp.eq.s32.totalorder %s36, 1
      %p143 = por %p141, %p142
      %p144 = scmp.ne.s32.totalorder %s135, %s136
      %p145 = scmp.eq.s32.totalorder %s36, 0
      %p146 = por %p144, %p145
      %p147 = scmp.ne.s32.totalorder %s135, %s136
      %p148 = scmp.eq.s32.totalorder %s37, 1
      %p149 = por %p147, %p148
      %p151 = scmp.ne.s32.totalorder %s136, %s150
      %p152 = scmp.eq.s32.totalorder %s37, 0
      %p153 = por %p151, %p152
      %s155 = sadd.s32 %s154, 1
      %p158 = scmp.eq.s32.totalorder %s31, 1
      %p159 = scmp.ne.s32.totalorder %s154, %s156
      %p160 = scmp.eq.s32.totalorder %s31, 0
      %p161 = por %p159, %p160
      %p162 = scmp.ne.s32.totalorder %s154, %s156
      %p163 = scmp.eq.s32.totalorder %s36, 1
      %p164 = por %p162, %p163
      %p165 = scmp.ne.s32.totalorder %s156, %s157
      %p166 = scmp.eq.s32.totalorder %s36, 0
      %p167 = por %p165, %p166
      %p168 = scmp.ne.s32.totalorder %s156, %s157
      %p169 = scmp.eq.s32.totalorder %s37, 1
      %p170 = por %p168, %p169
      %p172 = scmp.ne.s32.totalorder %s157, %s171
      %p173 = scmp.eq.s32.totalorder %s37, 0
      %p174 = por %p172, %p173
      %s175 = ssub.s32 %s31, %s38
      %p176 = scmp.eq.s32.totalorder %s175, 0
      %s178 = sadd.s32 %s177, 1
      %s179 = scalar_select %p176, %s177, %s178
      %p182 = pneg %p176
      %p183 = scmp.eq.s32.totalorder %s31, 1
      %p184 = por %p182, %p183
      %p185 = scmp.ne.s32.totalorder %s177, %s180
      %p186 = scmp.eq.s32.totalorder %s31, 0
      %p187 = por %p185, %p186
      %p188 = scmp.ne.s32.totalorder %s177, %s180
      %p189 = scmp.eq.s32.totalorder %s36, 1
      %p190 = por %p188, %p189
      %p191 = scmp.ne.s32.totalorder %s180, %s181
      %p192 = scmp.eq.s32.totalorder %s36, 0
      %p193 = por %p191, %p192
      %p194 = scmp.ne.s32.totalorder %s180, %s181
      %p195 = scmp.eq.s32.totalorder %s37, 1
      %p196 = por %p194, %p195
      %p198 = scmp.ne.s32.totalorder %s181, %s197
      %p199 = scmp.eq.s32.totalorder %s37, 0
      %p200 = por %p198, %p199
      %s201 = ssub.s32 %s31, %s38
      %p202 = scmp.eq.s32.totalorder %s201, 0
      %s204 = sadd.s32 %s203, 1
      %s205 = scalar_select %p202, %s203, %s204
      %p208 = pneg %p202
      %p209 = scmp.eq.s32.totalorder %s31, 1
      %p210 = por %p208, %p209
      %p211 = scmp.ne.s32.totalorder %s203, %s206
      %p212 = scmp.eq.s32.totalorder %s31, 0
      %p213 = por %p211, %p212
      %p214 = scmp.ne.s32.totalorder %s203, %s206
      %p215 = scmp.eq.s32.totalorder %s36, 1
      %p216 = por %p214, %p215
      %p217 = scmp.ne.s32.totalorder %s206, %s207
      %p218 = scmp.eq.s32.totalorder %s36, 0
      %p219 = por %p217, %p218
      %p220 = scmp.ne.s32.totalorder %s206, %s207
      %p221 = scmp.eq.s32.totalorder %s37, 1
      %p222 = por %p220, %p221
      %p224 = scmp.ne.s32.totalorder %s207, %s223
      %p225 = scmp.eq.s32.totalorder %s37, 0
      %p226 = por %p224, %p225
      %p227 = scmp.le.s32.totalorder 1, %s31
      %p228 = scmp.lt.s32.totalorder %s31, 3
      %p229 = pnand %p227, %p228
      %p230 = pneg %p229
      // Predicated region
      $region9: #{tpu_custom_call.1} parent=5 // pred_check
        _
      $region10: #{tpu_custom_call.1} parent=5 // pred_check_branch
        %232 = sbr.rel (%p229) target = $region12
      $region11: #{tpu_custom_call.1} parent=5 // pred_region
        %s233 = ssub.s32 %s31, 1
        // Predicated region
        $region13: #{tpu_custom_call.1} parent=11 // pred_check
          %p234 = pneg %p104
        $region14: #{tpu_custom_call.1} parent=11 // pred_check_branch
          %236 = sbr.rel (%p234) target = $region16
        $region15: #{tpu_custom_call.1} parent=11 // pred_region
          %s238 = ssub.s32 3072, 3072
          %239 = vsyncadd [#allocation11], %s238
          %s240 = sshll.u32 [#allocation10], 4
          %s241 = int_to_ptr.vmem [resolvable:$true] %s240
          %246 = dma.hbm_to_vmem [thread:$0]  %s3, 3072, %s241, [#allocation11], 384, 384, 24
        $region16: #{tpu_custom_call.1} parent=11 // pred_fallthru
          _
        // Predicated region
        $region17: #{tpu_custom_call.1} parent=11 // pred_check
          %p247 = pneg %p125
        $region18: #{tpu_custom_call.1} parent=11 // pred_check_branch
          %249 = sbr.rel (%p247) target = $region20
        $region19: #{tpu_custom_call.1} parent=11 // pred_region
          %s251 = ssub.s32 12288, 12288
          %252 = vsyncadd [#allocation11], %s251
          %s253 = sshll.u32 [#allocation12], 4
          %s254 = int_to_ptr.vmem [resolvable:$true] %s253
          %259 = dma.hbm_to_vmem [thread:$0]  %s4, 12288, %s254, [#allocation11], 384, 384, 24
        $region20: #{tpu_custom_call.1} parent=11 // pred_fallthru
          _
        // Predicated region
        $region21: #{tpu_custom_call.1} parent=11 // pred_check
          %p260 = pneg %p146
        $region22: #{tpu_custom_call.1} parent=11 // pred_check_branch
          %262 = sbr.rel (%p260) target = $region24
        $region23: #{tpu_custom_call.1} parent=11 // pred_region
          _
        $region24: #{tpu_custom_call.1} parent=11 // pred_fallthru
          _
        // Predicated region
        $region25: #{tpu_custom_call.1} parent=11 // pred_check
          %p263 = pneg %p167
        $region26: #{tpu_custom_call.1} parent=11 // pred_check_branch
          %265 = sbr.rel (%p263) target = $region28
        $region27: #{tpu_custom_call.1} parent=11 // pred_region
          _
        $region28: #{tpu_custom_call.1} parent=11 // pred_fallthru
          _
      $region12: #{tpu_custom_call.1} parent=5 // pred_fallthru
        _
      %p266 = scmp.lt.s32.totalorder %s31, 2
      // Predicated region
      $region29: #{tpu_custom_call.1} parent=5 // pred_check
        %p267 = pneg %p266
      $region30: #{tpu_custom_call.1} parent=5 // pred_check_branch
        %269 = sbr.rel (%p267) target = $region32
      $region31: #{tpu_custom_call.1} parent=5 // pred_region
        // Predicated region
        $region33: #{tpu_custom_call.1} parent=31 // pred_check
          %p270 = pneg %p51
        $region34: #{tpu_custom_call.1} parent=31 // pred_check_branch
          %272 = sbr.rel (%p270) target = $region36
        $region35: #{tpu_custom_call.1} parent=31 // pred_region
          #allocation17 [shape = 'u32[6]{0}', space=smem, size = 0x18, scoped, tag = 'DMA stride descriptor']
          %s273 = sand.u32 %s41, 1
          %s274 = scalar_lea.sflag [#allocation8], %s273
          %s275 = sand.u32 %s41, 1
          %s276 = smul.addr %s275, 128
          %s277 = scalar_lea.vmem [#allocation7], %s276
          %s278 = smul.u32 4, %s31
          %s280 = ssub.s32 2048, 2048
          %281 = vsyncadd %s274, %s280
          %s282 = smul.addr %s278, 64
          %s283 = scalar_lea.hbm %s1, %s282
          %s285 = sshll.u32 1, 14
          %s286 = sxor.u32 4294967295, %s285
          %s288 = sld [smem:[#allocation0]]
          %s289 = sadd.s32 2, %s288
          %s291 = sshll.u32 7, 26
          %s292 = sxor.u32 4294967295, %s291
          %s293 = sand.u32 0, %s292
          %s294 = sshll.u32 %s289, 26
          %s295 = sor.u32 %s293, %s294
          %s296 = sshll.u32 %s277, 4
          %s297 = int_to_ptr.vmem [resolvable:$true] %s296
          %303 = sst [smem:[#allocation17]] 512
          %s304 = scalar_lea.smem [#allocation17], 1
          %305 = sst [smem:[%s304]] 256
          %s306 = scalar_lea.smem [#allocation17], 2
          %307 = sst [smem:[%s306]] 4
          %s308 = scalar_lea.smem [#allocation17], 3
          %309 = sst [smem:[%s308]] 64
          %s310 = scalar_lea.smem [#allocation17], 4
          %311 = sst [smem:[%s310]] 64
          %s312 = scalar_lea.smem [#allocation17], 5
          %313 = sst [smem:[%s312]] 4
          %315 = dma.general %s283, 2048, %s297, %s274, [#allocation16], [#allocation17], %s295, 0
        $region36: #{tpu_custom_call.1} parent=31 // pred_fallthru
          _
        // Predicated region
        $region37: #{tpu_custom_call.1} parent=31 // pred_check
          %p316 = pneg %p77
        $region38: #{tpu_custom_call.1} parent=31 // pred_check_branch
          %318 = sbr.rel (%p316) target = $region40
        $region39: #{tpu_custom_call.1} parent=31 // pred_region
          %s319 = smul.u32 4, %s31
          %p320 = scmp.lt.s32.totalorder %s319, 7
          %s321 = scalar_select %p320, %s319, 7
          %s322 = smul.addr %s321, 8
          %s323 = scalar_lea.vmem %s2, %s322
          %s324 = smul.u32 4, %s31
        $region40: #{tpu_custom_call.1} parent=31 // pred_fallthru
          _
      $region32: #{tpu_custom_call.1} parent=5 // pred_fallthru
        _
      %p325 = scmp.le.s32.totalorder 1, %s31
      %p326 = scmp.lt.s32.totalorder %s31, 3
      %p327 = pnand %p325, %p326
      %p328 = pneg %p327
      // Predicated region
      $region41: #{tpu_custom_call.1} parent=5 // pred_check
        _
      $region42: #{tpu_custom_call.1} parent=5 // pred_check_branch
        %330 = sbr.rel (%p327) target = $region44
      $region43: #{tpu_custom_call.1} parent=5 // pred_region
        %s331 = ssub.s32 %s31, 1
        %s332 = sand.u32 %s44, 1
        %s333 = scalar_lea.sflag [#allocation8], %s332
        %s334 = sand.u32 %s44, 1
        %s335 = smul.addr %s334, 128
        %s336 = scalar_lea.vmem [#allocation7], %s335
        // Predicated region
        $region45: #{tpu_custom_call.1} parent=43 // pred_check
          %p337 = pneg %p57
        $region46: #{tpu_custom_call.1} parent=43 // pred_check_branch
          %339 = sbr.rel (%p337) target = $region48
        $region47: #{tpu_custom_call.1} parent=43 // pred_region
          %340 = dma.done %s333, 2048
        $region48: #{tpu_custom_call.1} parent=43 // pred_fallthru
          _
        // Predicated region
        $region49: #{tpu_custom_call.1} parent=43 // pred_check
          %p341 = pneg %p104
        $region50: #{tpu_custom_call.1} parent=43 // pred_check_branch
          %343 = sbr.rel (%p341) target = $region52
        $region51: #{tpu_custom_call.1} parent=43 // pred_region
          %344 = dma.done [#allocation11], 3072
        $region52: #{tpu_custom_call.1} parent=43 // pred_fallthru
          _
        // Predicated region
        $region53: #{tpu_custom_call.1} parent=43 // pred_check
          %p345 = pneg %p125
        $region54: #{tpu_custom_call.1} parent=43 // pred_check_branch
          %347 = sbr.rel (%p345) target = $region56
        $region55: #{tpu_custom_call.1} parent=43 // pred_region
          %348 = dma.done [#allocation11], 12288
        $region56: #{tpu_custom_call.1} parent=43 // pred_fallthru
          _
        %s349 = sand.u32 %s44, 1
        %s350 = scalar_lea.sflag [#allocation8], %s349
        %s351 = sand.u32 %s44, 1
        %s352 = smul.addr %s351, 128
        %s353 = scalar_lea.vmem [#allocation7], %s352
        %p354 = pneg %p57
        %p355 = pneg %p54
        %s356 = smul.u32 4, %s36
        %p357 = scmp.lt.s32.totalorder %s356, 7
        %s358 = scalar_select %p357, %s356, 7
        %s359 = smul.addr %s358, 8
        %s360 = scalar_lea.vmem %s2, %s359
        %p361 = pneg %p83
        %p362 = pneg %p80
        %p363 = pneg %p104
        %p364 = pneg %p101
        %p365 = pneg %p125
        %p366 = pneg %p122
        %p367 = pneg %p146
        %p368 = pneg %p143
        %p369 = pneg %p167
        %p370 = pneg %p164
        %p371 = pneg %p193
        %p372 = pneg %p190
        %s373 = sand.u32 %s180, 1
        %s374 = scalar_lea.sflag [#allocation9], %s373
        %s375 = sand.u32 %s180, 1
        %s376 = smul.addr %s375, 256
        %s377 = scalar_lea.vmem [#allocation13], %s376
        %p378 = pneg %p219
        %p379 = pneg %p216
        %s380 = sand.u32 %s206, 1
        %s381 = scalar_lea.sflag [#allocation15], %s380
        %s382 = sand.u32 %s206, 1
        %s383 = smul.addr %s382, 32
        %s384 = scalar_lea.vmem [#allocation14], %s383
        %s385 = smul.u32 4, %s36
        %s386 = smul.u32 4, %s36
        %p387 = scmp.lt.s32.totalorder %s386, 7
        %s388 = scalar_select %p387, %s386, 7
        %s389 = smul.addr %s388, 8
        %s390 = scalar_lea.vmem %s2, %s389
        %s391 = smul.u32 4, %s36
        %s392 = smul.u32 4, %s36
        %s393 = smul.u32 4, %s36
        %s395 = sld [smem:[#allocation6 + %s36]]
        %v396 = vld [vmem:[%s390] sm:$0xff]
        %v397 = vld [vmem:[%s390 + $0x8] sm:$0xff]
        %v398 = vld [vmem:[%s390 + $0x10] sm:$0xff]
        %v399 = vld [vmem:[%s390 + $0x18] sm:$0xff]
        %v400 = vld [vmem:[%s336] sm:$0xf]
        %v401 = vld [vmem:[%s336 + $0x4] sm:$0xf]
        %v402 = vld [vmem:[%s336 + $0x8] sm:$0xf]
        %v403 = vld [vmem:[%s336 + $0xc] sm:$0xf]
        %v404 = vld [vmem:[%s336 + $0x10] sm:$0xf]
        %v405 = vld [vmem:[%s336 + $0x14] sm:$0xf]
        %v406 = vld [vmem:[%s336 + $0x18] sm:$0xf]
        %v407 = vld [vmem:[%s336 + $0x1c] sm:$0xf]
        %v408 = vld [vmem:[%s336 + $0x20] sm:$0xf]
        %v409 = vld [vmem:[%s336 + $0x24] sm:$0xf]
        %v410 = vld [vmem:[%s336 + $0x28] sm:$0xf]
        %v411 = vld [vmem:[%s336 + $0x2c] sm:$0xf]
        %v412 = vld [vmem:[%s336 + $0x30] sm:$0xf]
        %v413 = vld [vmem:[%s336 + $0x34] sm:$0xf]
        %v414 = vld [vmem:[%s336 + $0x38] sm:$0xf]
        %v415 = vld [vmem:[%s336 + $0x3c] sm:$0xf]
        %v416 = vld [vmem:[%s336 + $0x40] sm:$0xf]
        %v417 = vld [vmem:[%s336 + $0x44] sm:$0xf]
        %v418 = vld [vmem:[%s336 + $0x48] sm:$0xf]
        %v419 = vld [vmem:[%s336 + $0x4c] sm:$0xf]
        %v420 = vld [vmem:[%s336 + $0x50] sm:$0xf]
        %v421 = vld [vmem:[%s336 + $0x54] sm:$0xf]
        %v422 = vld [vmem:[%s336 + $0x58] sm:$0xf]
        %v423 = vld [vmem:[%s336 + $0x5c] sm:$0xf]
        %v424 = vld [vmem:[%s336 + $0x60] sm:$0xf]
        %v425 = vld [vmem:[%s336 + $0x64] sm:$0xf]
        %v426 = vld [vmem:[%s336 + $0x68] sm:$0xf]
        %v427 = vld [vmem:[%s336 + $0x6c] sm:$0xf]
        %v428 = vld [vmem:[%s336 + $0x70] sm:$0xf]
        %v429 = vld [vmem:[%s336 + $0x74] sm:$0xf]
        %v430 = vld [vmem:[%s336 + $0x78] sm:$0xf]
        %v431 = vld [vmem:[%s336 + $0x7c] sm:$0xf]
        %v432 = vld [vmem:[#allocation10] sm:$0xff]
        %v433 = vld [vmem:[#allocation10 + $0x8] sm:$0xff]
        %v434 = vld [vmem:[#allocation10 + $0x10] sm:$0xff]
        %v435 = vld [vmem:[#allocation10 + $0x18] sm:$0xff]
        %v436 = vld [vmem:[#allocation10 + $0x20] sm:$0xff]
        %v437 = vld [vmem:[#allocation10 + $0x28] sm:$0xff]
        %v438 = vld [vmem:[#allocation10 + $0x30] sm:$0xff]
        %v439 = vld [vmem:[#allocation10 + $0x38] sm:$0xff]
        %v440 = vld [vmem:[#allocation10 + $0x40] sm:$0xff]
        %v441 = vld [vmem:[#allocation10 + $0x48] sm:$0xff]
        %v442 = vld [vmem:[#allocation10 + $0x50] sm:$0xff]
        %v443 = vld [vmem:[#allocation10 + $0x58] sm:$0xff]
        %v444 = vld [vmem:[#allocation10 + $0x60] sm:$0xff]
        %v445 = vld [vmem:[#allocation10 + $0x68] sm:$0xff]
        %v446 = vld [vmem:[#allocation10 + $0x70] sm:$0xff]
        %v447 = vld [vmem:[#allocation10 + $0x78] sm:$0xff]
        %v448 = vld [vmem:[#allocation10 + $0x80] sm:$0xff]
        %v449 = vld [vmem:[#allocation10 + $0x88] sm:$0xff]
        %v450 = vld [vmem:[#allocation10 + $0x90] sm:$0xff]
        %v451 = vld [vmem:[#allocation10 + $0x98] sm:$0xff]
        %v452 = vld [vmem:[#allocation10 + $0xa0] sm:$0xff]
        %v453 = vld [vmem:[#allocation10 + $0xa8] sm:$0xff]
        %v454 = vld [vmem:[#allocation10 + $0xb0] sm:$0xff]
        %v455 = vld [vmem:[#allocation10 + $0xb8] sm:$0xff]
        %v488 = vunpack.c.l.b16 %v400
        %v489 = vunpack.c.l.b16 %v401
        %v490 = vunpack.c.l.b16 %v402
        %v491 = vunpack.c.l.b16 %v403
        %v492 = vunpack.c.l.b16 %v404
        %v493 = vunpack.c.l.b16 %v405
        %v494 = vunpack.c.l.b16 %v406
        %v495 = vunpack.c.l.b16 %v407
        %v496 = vunpack.c.l.b16 %v408
        %v497 = vunpack.c.l.b16 %v409
        %v498 = vunpack.c.l.b16 %v410
        %v499 = vunpack.c.l.b16 %v411
        %v500 = vunpack.c.l.b16 %v412
        %v501 = vunpack.c.l.b16 %v413
        %v502 = vunpack.c.l.b16 %v414
        %v503 = vunpack.c.l.b16 %v415
        %v504 = vunpack.c.l.b16 %v416
        %v505 = vunpack.c.l.b16 %v417
        %v506 = vunpack.c.l.b16 %v418
        %v507 = vunpack.c.l.b16 %v419
        %v508 = vunpack.c.l.b16 %v420
        %v509 = vunpack.c.l.b16 %v421
        %v510 = vunpack.c.l.b16 %v422
        %v511 = vunpack.c.l.b16 %v423
        %v512 = vunpack.c.l.b16 %v424
        %v513 = vunpack.c.l.b16 %v425
        %v514 = vunpack.c.l.b16 %v426
        %v515 = vunpack.c.l.b16 %v427
        %v516 = vunpack.c.l.b16 %v428
        %v517 = vunpack.c.l.b16 %v429
        %v518 = vunpack.c.l.b16 %v430
        %v519 = vunpack.c.l.b16 %v431
        %v520 = vpack.c.b16 %v489, %v488
        %v521 = vpack.c.b16 %v491, %v490
        %v522 = vpack.c.b16 %v493, %v492
        %v523 = vpack.c.b16 %v495, %v494
        %v524 = vpack.c.b16 %v497, %v496
        %v525 = vpack.c.b16 %v499, %v498
        %v526 = vpack.c.b16 %v501, %v500
        %v527 = vpack.c.b16 %v503, %v502
        %v528 = vpack.c.b16 %v505, %v504
        %v529 = vpack.c.b16 %v507, %v506
        %v530 = vpack.c.b16 %v509, %v508
        %v531 = vpack.c.b16 %v511, %v510
        %v532 = vpack.c.b16 %v513, %v512
        %v533 = vpack.c.b16 %v515, %v514
        %v534 = vpack.c.b16 %v517, %v516
        %v535 = vpack.c.b16 %v519, %v518
        %v560 = vunpack.c.l.b16 %v432
        %v561 = vunpack.c.h.b16 %v432
        %v562 = vunpack.c.l.b16 %v433
        %v563 = vunpack.c.h.b16 %v433
        %v564 = vunpack.c.l.b16 %v434
        %v565 = vunpack.c.h.b16 %v434
        %v566 = vunpack.c.l.b16 %v435
        %v567 = vunpack.c.h.b16 %v435
        %v568 = vunpack.c.l.b16 %v436
        %v569 = vunpack.c.h.b16 %v436
        %v570 = vunpack.c.l.b16 %v437
        %v571 = vunpack.c.h.b16 %v437
        %v572 = vunpack.c.l.b16 %v438
        %v573 = vunpack.c.h.b16 %v438
        %v574 = vunpack.c.l.b16 %v439
        %v575 = vunpack.c.h.b16 %v439
        %v576 = vunpack.c.l.b16 %v440
        %v577 = vunpack.c.h.b16 %v440
        %v578 = vunpack.c.l.b16 %v441
        %v579 = vunpack.c.h.b16 %v441
        %v580 = vunpack.c.l.b16 %v442
        %v581 = vunpack.c.h.b16 %v442
        %v582 = vunpack.c.l.b16 %v443
        %v583 = vunpack.c.h.b16 %v443
        %v584 = vunpack.c.l.b16 %v444
        %v585 = vunpack.c.h.b16 %v444
        %v586 = vunpack.c.l.b16 %v445
        %v587 = vunpack.c.h.b16 %v445
        %v588 = vunpack.c.l.b16 %v446
        %v589 = vunpack.c.h.b16 %v446
        %v590 = vunpack.c.l.b16 %v447
        %v591 = vunpack.c.h.b16 %v447
        %v592 = vunpack.c.l.b16 %v448
        %v593 = vunpack.c.h.b16 %v448
        %v594 = vunpack.c.l.b16 %v449
        %v595 = vunpack.c.h.b16 %v449
        %v596 = vunpack.c.l.b16 %v450
        %v597 = vunpack.c.h.b16 %v450
        %v598 = vunpack.c.l.b16 %v451
        %v599 = vunpack.c.h.b16 %v451
        %v600 = vunpack.c.l.b16 %v452
        %v601 = vunpack.c.h.b16 %v452
        %v602 = vunpack.c.l.b16 %v453
        %v603 = vunpack.c.h.b16 %v453
        %v604 = vunpack.c.l.b16 %v454
        %v605 = vunpack.c.h.b16 %v454
        %v606 = vunpack.c.l.b16 %v455
        %v607 = vunpack.c.h.b16 %v455
        %v608 = vpack.c.b16 %v566, %v560
        %v609 = vpack.c.b16 %v567, %v561
        %v610 = vpack.c.b16 %v568, %v562
        %v611 = vpack.c.b16 %v569, %v563
        %v612 = vpack.c.b16 %v570, %v564
        %v613 = vpack.c.b16 %v571, %v565
        %v614 = vpack.c.b16 %v578, %v572
        %v615 = vpack.c.b16 %v579, %v573
        %v616 = vpack.c.b16 %v580, %v574
        %v617 = vpack.c.b16 %v581, %v575
        %v618 = vpack.c.b16 %v582, %v576
        %v619 = vpack.c.b16 %v583, %v577
        %v620 = vpack.c.b16 %v590, %v584
        %v621 = vpack.c.b16 %v591, %v585
        %v622 = vpack.c.b16 %v592, %v586
        %v623 = vpack.c.b16 %v593, %v587
        %v624 = vpack.c.b16 %v594, %v588
        %v625 = vpack.c.b16 %v595, %v589
        %v626 = vpack.c.b16 %v602, %v596
        %v627 = vpack.c.b16 %v603, %v597
        %v628 = vpack.c.b16 %v604, %v598
        %v629 = vpack.c.b16 %v605, %v599
        %v630 = vpack.c.b16 %v606, %v600
        %v631 = vpack.c.b16 %v607, %v601
        %vm656 = vcmask 523264
        %v658 = vsel %vm656, %v520, 0
        %v661 = vsel %vm656, %v521, 0
        %v664 = vsel %vm656, %v522, 0
        %v667 = vsel %vm656, %v523, 0
        %v670 = vsel %vm656, %v524, 0
        %v673 = vsel %vm656, %v525, 0
        %v676 = vsel %vm656, %v526, 0
        %v679 = vsel %vm656, %v527, 0
        %v682 = vsel %vm656, %v528, 0
        %v685 = vsel %vm656, %v529, 0
        %v688 = vsel %vm656, %v530, 0
        %v691 = vsel %vm656, %v531, 0
        %v694 = vsel %vm656, %v532, 0
        %v697 = vsel %vm656, %v533, 0
        %v700 = vsel %vm656, %v534, 0
        %v703 = vsel %vm656, %v535, 0
        %705 = vmatprep.subr.bf16.mxu0 %v609
        %706 = vmatpush1.bf16.msra.mxu0 %v608
        %707 = vmatprep.subr.bf16.mxu0 %v615
        %708 = vmatpush1.bf16.msra.mxu0 %v614
        %709 = vmatprep.subr.bf16.mxu0 %v621
        %710 = vmatpush1.bf16.msra.mxu0 %v620
        %711 = vmatprep.subr.bf16.mxu0 %v627
        %712 = vmatpush1.bf16.msra.mxu0 %v626
        %713 = vmatprep.subr.bf16.mxu0 0
        %714 = vmatpush1.bf16.msra.mxu0 0
        %715 = vmatprep.subr.bf16.mxu0 0
        %716 = vmatpush1.bf16.msra.mxu0 0
        %717 = vmatprep.subr.bf16.mxu0 0
        %718 = vmatpush1.bf16.msra.mxu0 0
        %719 = vmatprep.subr.bf16.mxu0 0
        %720 = vmatpush1.bf16.msra.mxu0 0
        %721 = vmatprep.subr.bf16.mxu0 0
        %722 = vmatpush1.bf16.msra.mxu0 0
        %723 = vmatprep.subr.bf16.mxu0 0
        %724 = vmatpush1.bf16.msra.mxu0 0
        %725 = vmatprep.subr.bf16.mxu0 0
        %726 = vmatpush1.bf16.msra.mxu0 0
        %727 = vmatprep.subr.bf16.mxu0 0
        %728 = vmatpush1.bf16.msra.mxu0 0
        %729 = vmatprep.subr.bf16.mxu0 0
        %730 = vmatpush1.bf16.msra.mxu0 0
        %731 = vmatprep.subr.bf16.mxu0 0
        %732 = vmatpush1.bf16.msra.mxu0 0
        %733 = vmatprep.subr.bf16.mxu0 0
        %734 = vmatpush1.bf16.msra.mxu0 0
        %735 = vmatprep.subr.bf16.mxu0 0
        %736 = vmatpush1.bf16.msra.mxu0 0
        %737 = vmatprep.mubr.bf16.mxu0 0
        %738 = vmatmul.mubr.bf16.gmra.mrb[0].mxu0 %v658
        %v739 = vpop.f32.mrb[0].mxu0
        %v740 = vadd.f32 0.0, %v739
        %v741 = vpop.f32.mrb[0].mxu0
        %v742 = vadd.f32 0.0, %v741
        %v743 = vpop.f32.mrb[0].mxu0
        %v744 = vadd.f32 0.0, %v743
        %v745 = vpop.f32.mrb[0].mxu0
        %v746 = vadd.f32 0.0, %v745
        %747 = vmatprep.mubr.bf16.mxu0 0
        %748 = vmatmul.mubr.bf16.gmra.mrb[0].mxu0 %v661
        %v749 = vpop.f32.mrb[0].mxu0
        %v750 = vadd.f32 0.0, %v749
        %v751 = vpop.f32.mrb[0].mxu0
        %v752 = vadd.f32 0.0, %v751
        %v753 = vpop.f32.mrb[0].mxu0
        %v754 = vadd.f32 0.0, %v753
        %v755 = vpop.f32.mrb[0].mxu0
        %v756 = vadd.f32 0.0, %v755
        %757 = vmatprep.mubr.bf16.mxu0 0
        %758 = vmatmul.mubr.bf16.gmra.mrb[0].mxu0 %v664
        %v759 = vpop.f32.mrb[0].mxu0
        %v760 = vadd.f32 0.0, %v759
        %v761 = vpop.f32.mrb[0].mxu0
        %v762 = vadd.f32 0.0, %v761
        %v763 = vpop.f32.mrb[0].mxu0
        %v764 = vadd.f32 0.0, %v763
        %v765 = vpop.f32.mrb[0].mxu0
        %v766 = vadd.f32 0.0, %v765
        %767 = vmatprep.mubr.bf16.mxu0 0
        %768 = vmatmul.mubr.bf16.gmra.mrb[0].mxu0 %v667
        %v769 = vpop.f32.mrb[0].mxu0
        %v770 = vadd.f32 0.0, %v769
        %v771 = vpop.f32.mrb[0].mxu0
        %v772 = vadd.f32 0.0, %v771
        %v773 = vpop.f32.mrb[0].mxu0
        %v774 = vadd.f32 0.0, %v773
        %v775 = vpop.f32.mrb[0].mxu0
        %v776 = vadd.f32 0.0, %v775
        %777 = vmatprep.mubr.bf16.mxu0 0
        %778 = vmatmul.mubr.bf16.gmra.mrb[0].mxu0 %v670
        %v779 = vpop.f32.mrb[0].mxu0
        %v780 = vadd.f32 0.0, %v779
        %v781 = vpop.f32.mrb[0].mxu0
        %v782 = vadd.f32 0.0, %v781
        %v783 = vpop.f32.mrb[0].mxu0
        %v784 = vadd.f32 0.0, %v783
        %v785 = vpop.f32.mrb[0].mxu0
        %v786 = vadd.f32 0.0, %v785
        %787 = vmatprep.mubr.bf16.mxu0 0
        %788 = vmatmul.mubr.bf16.gmra.mrb[0].mxu0 %v673
        %v789 = vpop.f32.mrb[0].mxu0
        %v790 = vadd.f32 0.0, %v789
        %v791 = vpop.f32.mrb[0].mxu0
        %v792 = vadd.f32 0.0, %v791
        %v793 = vpop.f32.mrb[0].mxu0
        %v794 = vadd.f32 0.0, %v793
        %v795 = vpop.f32.mrb[0].mxu0
        %v796 = vadd.f32 0.0, %v795
        %797 = vmatprep.mubr.bf16.mxu0 0
        %798 = vmatmul.mubr.bf16.gmra.mrb[0].mxu0 %v676
        %v799 = vpop.f32.mrb[0].mxu0
        %v800 = vadd.f32 0.0, %v799
        %v801 = vpop.f32.mrb[0].mxu0
        %v802 = vadd.f32 0.0, %v801
        %v803 = vpop.f32.mrb[0].mxu0
        %v804 = vadd.f32 0.0, %v803
        %v805 = vpop.f32.mrb[0].mxu0
        %v806 = vadd.f32 0.0, %v805
        %807 = vmatprep.mubr.bf16.mxu0 0
        %808 = vmatmul.mubr.bf16.gmra.mrb[0].mxu0 %v679
        %v809 = vpop.f32.mrb[0].mxu0
        %v810 = vadd.f32 0.0, %v809
        %v811 = vpop.f32.mrb[0].mxu0
        %v812 = vadd.f32 0.0, %v811
        %v813 = vpop.f32.mrb[0].mxu0
        %v814 = vadd.f32 0.0, %v813
        %v815 = vpop.f32.mrb[0].mxu0
        %v816 = vadd.f32 0.0, %v815
        %817 = vmatprep.mubr.bf16.mxu0 0
        %818 = vmatmul.mubr.bf16.gmra.mrb[0].mxu0 %v682
        %v819 = vpop.f32.mrb[0].mxu0
        %v820 = vadd.f32 0.0, %v819
        %v821 = vpop.f32.mrb[0].mxu0
        %v822 = vadd.f32 0.0, %v821
        %v823 = vpop.f32.mrb[0].mxu0
        %v824 = vadd.f32 0.0, %v823
        %v825 = vpop.f32.mrb[0].mxu0
        %v826 = vadd.f32 0.0, %v825
        %827 = vmatprep.mubr.bf16.mxu0 0
        %828 = vmatmul.mubr.bf16.gmra.mrb[0].mxu0 %v685
        %v829 = vpop.f32.mrb[0].mxu0
        %v830 = vadd.f32 0.0, %v829
        %v831 = vpop.f32.mrb[0].mxu0
        %v832 = vadd.f32 0.0, %v831
        %v833 = vpop.f32.mrb[0].mxu0
        %v834 = vadd.f32 0.0, %v833
        %v835 = vpop.f32.mrb[0].mxu0
        %v836 = vadd.f32 0.0, %v835
        %837 = vmatprep.mubr.bf16.mxu0 0
        %838 = vmatmul.mubr.bf16.gmra.mrb[0].mxu0 %v688
        %v839 = vpop.f32.mrb[0].mxu0
        %v840 = vadd.f32 0.0, %v839
        %v841 = vpop.f32.mrb[0].mxu0
        %v842 = vadd.f32 0.0, %v841
        %v843 = vpop.f32.mrb[0].mxu0
        %v844 = vadd.f32 0.0, %v843
        %v845 = vpop.f32.mrb[0].mxu0
        %v846 = vadd.f32 0.0, %v845
        %847 = vmatprep.mubr.bf16.mxu0 0
        %848 = vmatmul.mubr.bf16.gmra.mrb[0].mxu0 %v691
        %v849 = vpop.f32.mrb[0].mxu0
        %v850 = vadd.f32 0.0, %v849
        %v851 = vpop.f32.mrb[0].mxu0
        %v852 = vadd.f32 0.0, %v851
        %v853 = vpop.f32.mrb[0].mxu0
        %v854 = vadd.f32 0.0, %v853
        %v855 = vpop.f32.mrb[0].mxu0
        %v856 = vadd.f32 0.0, %v855
        %857 = vmatprep.mubr.bf16.mxu0 0
        %858 = vmatmul.mubr.bf16.gmra.mrb[0].mxu0 %v694
        %v859 = vpop.f32.mrb[0].mxu0
        %v860 = vadd.f32 0.0, %v859
        %v861 = vpop.f32.mrb[0].mxu0
        %v862 = vadd.f32 0.0, %v861
        %v863 = vpop.f32.mrb[0].mxu0
        %v864 = vadd.f32 0.0, %v863
        %v865 = vpop.f32.mrb[0].mxu0
        %v866 = vadd.f32 0.0, %v865
        %867 = vmatprep.mubr.bf16.mxu0 0
        %868 = vmatmul.mubr.bf16.gmra.mrb[0].mxu0 %v697
        %v869 = vpop.f32.mrb[0].mxu0
        %v870 = vadd.f32 0.0, %v869
        %v871 = vpop.f32.mrb[0].mxu0
        %v872 = vadd.f32 0.0, %v871
        %v873 = vpop.f32.mrb[0].mxu0
        %v874 = vadd.f32 0.0, %v873
        %v875 = vpop.f32.mrb[0].mxu0
        %v876 = vadd.f32 0.0, %v875
        %877 = vmatprep.mubr.bf16.mxu0 0
        %878 = vmatmul.mubr.bf16.gmra.mrb[0].mxu0 %v700
        %v879 = vpop.f32.mrb[0].mxu0
        %v880 = vadd.f32 0.0, %v879
        %v881 = vpop.f32.mrb[0].mxu0
        %v882 = vadd.f32 0.0, %v881
        %v883 = vpop.f32.mrb[0].mxu0
        %v884 = vadd.f32 0.0, %v883
        %v885 = vpop.f32.mrb[0].mxu0
        %v886 = vadd.f32 0.0, %v885
        %887 = vmatprep.mubr.bf16.mxu0 0
        %888 = vmatmul.mubr.bf16.gmra.mrb[0].mxu0 %v703
        %v889 = vpop.f32.mrb[0].mxu0
        %v890 = vadd.f32 0.0, %v889
        %v891 = vpop.f32.mrb[0].mxu0
        %v892 = vadd.f32 0.0, %v891
        %v893 = vpop.f32.mrb[0].mxu0
        %v894 = vadd.f32 0.0, %v893
        %v895 = vpop.f32.mrb[0].mxu0
        %v896 = vadd.f32 0.0, %v895
        %897 = vdwg.mxu0
        %898 = vmatprep.subr.bf16.mxu0 %v611
        %899 = vmatpush1.bf16.msra.mxu0 %v610
        %900 = vmatprep.subr.bf16.mxu0 %v617
        %901 = vmatpush1.bf16.msra.mxu0 %v616
        %902 = vmatprep.subr.bf16.mxu0 %v623
        %903 = vmatpush1.bf16.msra.mxu0 %v622
        %904 = vmatprep.subr.bf16.mxu0 %v629
        %905 = vmatpush1.bf16.msra.mxu0 %v628
        %906 = vmatprep.subr.bf16.mxu0 0
        %907 = vmatpush1.bf16.msra.mxu0 0
        %908 = vmatprep.subr.bf16.mxu0 0
        %909 = vmatpush1.bf16.msra.mxu0 0
        %910 = vmatprep.subr.bf16.mxu0 0
        %911 = vmatpush1.bf16.msra.mxu0 0
        %912 = vmatprep.subr.bf16.mxu0 0
        %913 = vmatpush1.bf16.msra.mxu0 0
        %914 = vmatprep.subr.bf16.mxu0 0
        %915 = vmatpush1.bf16.msra.mxu0 0
        %916 = vmatprep.subr.bf16.mxu0 0
        %917 = vmatpush1.bf16.msra.mxu0 0
        %918 = vmatprep.subr.bf16.mxu0 0
        %919 = vmatpush1.bf16.msra.mxu0 0
        %920 = vmatprep.subr.bf16.mxu0 0
        %921 = vmatpush1.bf16.msra.mxu0 0
        %922 = vmatprep.subr.bf16.mxu0 0
        %923 = vmatpush1.bf16.msra.mxu0 0
        %924 = vmatprep.subr.bf16.mxu0 0
        %925 = vmatpush1.bf16.msra.mxu0 0
        %926 = vmatprep.subr.bf16.mxu0 0
        %927 = vmatpush1.bf16.msra.mxu0 0
        %928 = vmatprep.subr.bf16.mxu0 0
        %929 = vmatpush1.bf16.msra.mxu0 0
        %930 = vmatprep.mubr.bf16.mxu0 0
        %931 = vmatmul.mubr.bf16.gmra.mrb[0].mxu0 %v658
        %v932 = vpop.f32.mrb[0].mxu0
        %v933 = vadd.f32 0.0, %v932
        %v934 = vpop.f32.mrb[0].mxu0
        %v935 = vadd.f32 0.0, %v934
        %v936 = vpop.f32.mrb[0].mxu0
        %v937 = vadd.f32 0.0, %v936
        %v938 = vpop.f32.mrb[0].mxu0
        %v939 = vadd.f32 0.0, %v938
        %940 = vmatprep.mubr.bf16.mxu0 0
        %941 = vmatmul.mubr.bf16.gmra.mrb[0].mxu0 %v661
        %v942 = vpop.f32.mrb[0].mxu0
        %v943 = vadd.f32 0.0, %v942
        %v944 = vpop.f32.mrb[0].mxu0
        %v945 = vadd.f32 0.0, %v944
        %v946 = vpop.f32.mrb[0].mxu0
        %v947 = vadd.f32 0.0, %v946
        %v948 = vpop.f32.mrb[0].mxu0
        %v949 = vadd.f32 0.0, %v948
        %950 = vmatprep.mubr.bf16.mxu0 0
        %951 = vmatmul.mubr.bf16.gmra.mrb[0].mxu0 %v664
        %v952 = vpop.f32.mrb[0].mxu0
        %v953 = vadd.f32 0.0, %v952
        %v954 = vpop.f32.mrb[0].mxu0
        %v955 = vadd.f32 0.0, %v954
        %v956 = vpop.f32.mrb[0].mxu0
        %v957 = vadd.f32 0.0, %v956
        %v958 = vpop.f32.mrb[0].mxu0
        %v959 = vadd.f32 0.0, %v958
        %960 = vmatprep.mubr.bf16.mxu0 0
        %961 = vmatmul.mubr.bf16.gmra.mrb[0].mxu0 %v667
        %v962 = vpop.f32.mrb[0].mxu0
        %v963 = vadd.f32 0.0, %v962
        %v964 = vpop.f32.mrb[0].mxu0
        %v965 = vadd.f32 0.0, %v964
        %v966 = vpop.f32.mrb[0].mxu0
        %v967 = vadd.f32 0.0, %v966
        %v968 = vpop.f32.mrb[0].mxu0
        %v969 = vadd.f32 0.0, %v968
        %970 = vmatprep.mubr.bf16.mxu0 0
        %971 = vmatmul.mubr.bf16.gmra.mrb[0].mxu0 %v670
        %v972 = vpop.f32.mrb[0].mxu0
        %v973 = vadd.f32 0.0, %v972
        %v974 = vpop.f32.mrb[0].mxu0
        %v975 = vadd.f32 0.0, %v974
        %v976 = vpop.f32.mrb[0].mxu0
        %v977 = vadd.f32 0.0, %v976
        %v978 = vpop.f32.mrb[0].mxu0
        %v979 = vadd.f32 0.0, %v978
        %980 = vmatprep.mubr.bf16.mxu0 0
        %981 = vmatmul.mubr.bf16.gmra.mrb[0].mxu0 %v673
        %v982 = vpop.f32.mrb[0].mxu0
        %v983 = vadd.f32 0.0, %v982
        %v984 = vpop.f32.mrb[0].mxu0
        %v985 = vadd.f32 0.0, %v984
        %v986 = vpop.f32.mrb[0].mxu0
        %v987 = vadd.f32 0.0, %v986
        %v988 = vpop.f32.mrb[0].mxu0
        %v989 = vadd.f32 0.0, %v988
        %990 = vmatprep.mubr.bf16.mxu0 0
        %991 = vmatmul.mubr.bf16.gmra.mrb[0].mxu0 %v676
        %v992 = vpop.f32.mrb[0].mxu0
        %v993 = vadd.f32 0.0, %v992
        %v994 = vpop.f32.mrb[0].mxu0
        %v995 = vadd.f32 0.0, %v994
        %v996 = vpop.f32.mrb[0].mxu0
        %v997 = vadd.f32 0.0, %v996
        %v998 = vpop.f32.mrb[0].mxu0
        %v999 = vadd.f32 0.0, %v998
        %1000 = vmatprep.mubr.bf16.mxu0 0
        %1001 = vmatmul.mubr.bf16.gmra.mrb[0].mxu0 %v679
        %v1002 = vpop.f32.mrb[0].mxu0
        %v1003 = vadd.f32 0.0, %v1002
        %v1004 = vpop.f32.mrb[0].mxu0
        %v1005 = vadd.f32 0.0, %v1004
        %v1006 = vpop.f32.mrb[0].mxu0
        %v1007 = vadd.f32 0.0, %v1006
        %v1008 = vpop.f32.mrb[0].mxu0
        %v1009 = vadd.f32 0.0, %v1008
        %1010 = vmatprep.mubr.bf16.mxu0 0
        %1011 = vmatmul.mubr.bf16.gmra.mrb[0].mxu0 %v682
        %v1012 = vpop.f32.mrb[0].mxu0
        %v1013 = vadd.f32 0.0, %v1012
        %v1014 = vpop.f32.mrb[0].mxu0
        %v1015 = vadd.f32 0.0, %v1014
        %v1016 = vpop.f32.mrb[0].mxu0
        %v1017 = vadd.f32 0.0, %v1016
        %v1018 = vpop.f32.mrb[0].mxu0
        %v1019 = vadd.f32 0.0, %v1018
        %1020 = vmatprep.mubr.bf16.mxu0 0
        %1021 = vmatmul.mubr.bf16.gmra.mrb[0].mxu0 %v685
        %v1022 = vpop.f32.mrb[0].mxu0
        %v1023 = vadd.f32 0.0, %v1022
        %v1024 = vpop.f32.mrb[0].mxu0
        %v1025 = vadd.f32 0.0, %v1024
        %v1026 = vpop.f32.mrb[0].mxu0
        %v1027 = vadd.f32 0.0, %v1026
        %v1028 = vpop.f32.mrb[0].mxu0
        %v1029 = vadd.f32 0.0, %v1028
        %1030 = vmatprep.mubr.bf16.mxu0 0
        %1031 = vmatmul.mubr.bf16.gmra.mrb[0].mxu0 %v688
        %v1032 = vpop.f32.mrb[0].mxu0
        %v1033 = vadd.f32 0.0, %v1032
        %v1034 = vpop.f32.mrb[0].mxu0
        %v1035 = vadd.f32 0.0, %v1034
        %v1036 = vpop.f32.mrb[0].mxu0
        %v1037 = vadd.f32 0.0, %v1036
        %v1038 = vpop.f32.mrb[0].mxu0
        %v1039 = vadd.f32 0.0, %v1038
        %1040 = vmatprep.mubr.bf16.mxu0 0
        %1041 = vmatmul.mubr.bf16.gmra.mrb[0].mxu0 %v691
        %v1042 = vpop.f32.mrb[0].mxu0
        %v1043 = vadd.f32 0.0, %v1042
        %v1044 = vpop.f32.mrb[0].mxu0
        %v1045 = vadd.f32 0.0, %v1044
        %v1046 = vpop.f32.mrb[0].mxu0
        %v1047 = vadd.f32 0.0, %v1046
        %v1048 = vpop.f32.mrb[0].mxu0
        %v1049 = vadd.f32 0.0, %v1048
        %1050 = vmatprep.mubr.bf16.mxu0 0
        %1051 = vmatmul.mubr.bf16.gmra.mrb[0].mxu0 %v694
        %v1052 = vpop.f32.mrb[0].mxu0
        %v1053 = vadd.f32 0.0, %v1052
        %v1054 = vpop.f32.mrb[0].mxu0
        %v1055 = vadd.f32 0.0, %v1054
        %v1056 = vpop.f32.mrb[0].mxu0
        %v1057 = vadd.f32 0.0, %v1056
        %v1058 = vpop.f32.mrb[0].mxu0
        %v1059 = vadd.f32 0.0, %v1058
        %1060 = vmatprep.mubr.bf16.mxu0 0
        %1061 = vmatmul.mubr.bf16.gmra.mrb[0].mxu0 %v697
        %v1062 = vpop.f32.mrb[0].mxu0
        %v1063 = vadd.f32 0.0, %v1062
        %v1064 = vpop.f32.mrb[0].mxu0
        %v1065 = vadd.f32 0.0, %v1064
        %v1066 = vpop.f32.mrb[0].mxu0
        %v1067 = vadd.f32 0.0, %v1066
        %v1068 = vpop.f32.mrb[0].mxu0
        %v1069 = vadd.f32 0.0, %v1068
        %1070 = vmatprep.mubr.bf16.mxu0 0
        %1071 = vmatmul.mubr.bf16.gmra.mrb[0].mxu0 %v700
        %v1072 = vpop.f32.mrb[0].mxu0
        %v1073 = vadd.f32 0.0, %v1072
        %v1074 = vpop.f32.mrb[0].mxu0
        %v1075 = vadd.f32 0.0, %v1074
        %v1076 = vpop.f32.mrb[0].mxu0
        %v1077 = vadd.f32 0.0, %v1076
        %v1078 = vpop.f32.mrb[0].mxu0
        %v1079 = vadd.f32 0.0, %v1078
        %1080 = vmatprep.mubr.bf16.mxu0 0
        %1081 = vmatmul.mubr.bf16.gmra.mrb[0].mxu0 %v703
        %v1082 = vpop.f32.mrb[0].mxu0
        %v1083 = vadd.f32 0.0, %v1082
        %v1084 = vpop.f32.mrb[0].mxu0
        %v1085 = vadd.f32 0.0, %v1084
        %v1086 = vpop.f32.mrb[0].mxu0
        %v1087 = vadd.f32 0.0, %v1086
        %v1088 = vpop.f32.mrb[0].mxu0
        %v1089 = vadd.f32 0.0, %v1088
        %1090 = vdwg.mxu0
        %1091 = vmatprep.subr.bf16.mxu0 %v613
        %1092 = vmatpush1.bf16.msra.mxu0 %v612
        %1093 = vmatprep.subr.bf16.mxu0 %v619
        %1094 = vmatpush1.bf16.msra.mxu0 %v618
        %1095 = vmatprep.subr.bf16.mxu0 %v625
        %1096 = vmatpush1.bf16.msra.mxu0 %v624
        %1097 = vmatprep.subr.bf16.mxu0 %v631
        %1098 = vmatpush1.bf16.msra.mxu0 %v630
        %1099 = vmatprep.subr.bf16.mxu0 0
        %1100 = vmatpush1.bf16.msra.mxu0 0
        %1101 = vmatprep.subr.bf16.mxu0 0
        %1102 = vmatpush1.bf16.msra.mxu0 0
        %1103 = vmatprep.subr.bf16.mxu0 0
        %1104 = vmatpush1.bf16.msra.mxu0 0
        %1105 = vmatprep.subr.bf16.mxu0 0
        %1106 = vmatpush1.bf16.msra.mxu0 0
        %1107 = vmatprep.subr.bf16.mxu0 0
        %1108 = vmatpush1.bf16.msra.mxu0 0
        %1109 = vmatprep.subr.bf16.mxu0 0
        %1110 = vmatpush1.bf16.msra.mxu0 0
        %1111 = vmatprep.subr.bf16.mxu0 0
        %1112 = vmatpush1.bf16.msra.mxu0 0
        %1113 = vmatprep.subr.bf16.mxu0 0
        %1114 = vmatpush1.bf16.msra.mxu0 0
        %1115 = vmatprep.subr.bf16.mxu0 0
        %1116 = vmatpush1.bf16.msra.mxu0 0
        %1117 = vmatprep.subr.bf16.mxu0 0
        %1118 = vmatpush1.bf16.msra.mxu0 0
        %1119 = vmatprep.subr.bf16.mxu0 0
        %1120 = vmatpush1.bf16.msra.mxu0 0
        %1121 = vmatprep.subr.bf16.mxu0 0
        %1122 = vmatpush1.bf16.msra.mxu0 0
        %1123 = vmatprep.mubr.bf16.mxu0 0
        %1124 = vmatmul.mubr.bf16.gmra.mrb[0].mxu0 %v658
        %v1125 = vpop.f32.mrb[0].mxu0
        %v1126 = vadd.f32 0.0, %v1125
        %v1127 = vpop.f32.mrb[0].mxu0
        %v1128 = vadd.f32 0.0, %v1127
        %v1129 = vpop.f32.mrb[0].mxu0
        %v1130 = vadd.f32 0.0, %v1129
        %v1131 = vpop.f32.mrb[0].mxu0
        %v1132 = vadd.f32 0.0, %v1131
        %1133 = vmatprep.mubr.bf16.mxu0 0
        %1134 = vmatmul.mubr.bf16.gmra.mrb[0].mxu0 %v661
        %v1135 = vpop.f32.mrb[0].mxu0
        %v1136 = vadd.f32 0.0, %v1135
        %v1137 = vpop.f32.mrb[0].mxu0
        %v1138 = vadd.f32 0.0, %v1137
        %v1139 = vpop.f32.mrb[0].mxu0
        %v1140 = vadd.f32 0.0, %v1139
        %v1141 = vpop.f32.mrb[0].mxu0
        %v1142 = vadd.f32 0.0, %v1141
        %1143 = vmatprep.mubr.bf16.mxu0 0
        %1144 = vmatmul.mubr.bf16.gmra.mrb[0].mxu0 %v664
        %v1145 = vpop.f32.mrb[0].mxu0
        %v1146 = vadd.f32 0.0, %v1145
        %v1147 = vpop.f32.mrb[0].mxu0
        %v1148 = vadd.f32 0.0, %v1147
        %v1149 = vpop.f32.mrb[0].mxu0
        %v1150 = vadd.f32 0.0, %v1149
        %v1151 = vpop.f32.mrb[0].mxu0
        %v1152 = vadd.f32 0.0, %v1151
        %1153 = vmatprep.mubr.bf16.mxu0 0
        %1154 = vmatmul.mubr.bf16.gmra.mrb[0].mxu0 %v667
        %v1155 = vpop.f32.mrb[0].mxu0
        %v1156 = vadd.f32 0.0, %v1155
        %v1157 = vpop.f32.mrb[0].mxu0
        %v1158 = vadd.f32 0.0, %v1157
        %v1159 = vpop.f32.mrb[0].mxu0
        %v1160 = vadd.f32 0.0, %v1159
        %v1161 = vpop.f32.mrb[0].mxu0
        %v1162 = vadd.f32 0.0, %v1161
        %1163 = vmatprep.mubr.bf16.mxu0 0
        %1164 = vmatmul.mubr.bf16.gmra.mrb[0].mxu0 %v670
        %v1165 = vpop.f32.mrb[0].mxu0
        %v1166 = vadd.f32 0.0, %v1165
        %v1167 = vpop.f32.mrb[0].mxu0
        %v1168 = vadd.f32 0.0, %v1167
        %v1169 = vpop.f32.mrb[0].mxu0
        %v1170 = vadd.f32 0.0, %v1169
        %v1171 = vpop.f32.mrb[0].mxu0
        %v1172 = vadd.f32 0.0, %v1171
        %1173 = vmatprep.mubr.bf16.mxu0 0
        %1174 = vmatmul.mubr.bf16.gmra.mrb[0].mxu0 %v673
        %v1175 = vpop.f32.mrb[0].mxu0
        %v1176 = vadd.f32 0.0, %v1175
        %v1177 = vpop.f32.mrb[0].mxu0
        %v1178 = vadd.f32 0.0, %v1177
        %v1179 = vpop.f32.mrb[0].mxu0
        %v1180 = vadd.f32 0.0, %v1179
        %v1181 = vpop.f32.mrb[0].mxu0
        %v1182 = vadd.f32 0.0, %v1181
        %1183 = vmatprep.mubr.bf16.mxu0 0
        %1184 = vmatmul.mubr.bf16.gmra.mrb[0].mxu0 %v676
        %v1185 = vpop.f32.mrb[0].mxu0
        %v1186 = vadd.f32 0.0, %v1185
        %v1187 = vpop.f32.mrb[0].mxu0
        %v1188 = vadd.f32 0.0, %v1187
        %v1189 = vpop.f32.mrb[0].mxu0
        %v1190 = vadd.f32 0.0, %v1189
        %v1191 = vpop.f32.mrb[0].mxu0
        %v1192 = vadd.f32 0.0, %v1191
        %1193 = vmatprep.mubr.bf16.mxu0 0
        %1194 = vmatmul.mubr.bf16.gmra.mrb[0].mxu0 %v679
        %v1195 = vpop.f32.mrb[0].mxu0
        %v1196 = vadd.f32 0.0, %v1195
        %v1197 = vpop.f32.mrb[0].mxu0
        %v1198 = vadd.f32 0.0, %v1197
        %v1199 = vpop.f32.mrb[0].mxu0
        %v1200 = vadd.f32 0.0, %v1199
        %v1201 = vpop.f32.mrb[0].mxu0
        %v1202 = vadd.f32 0.0, %v1201
        %1203 = vmatprep.mubr.bf16.mxu0 0
        %1204 = vmatmul.mubr.bf16.gmra.mrb[0].mxu0 %v682
        %v1205 = vpop.f32.mrb[0].mxu0
        %v1206 = vadd.f32 0.0, %v1205
        %v1207 = vpop.f32.mrb[0].mxu0
        %v1208 = vadd.f32 0.0, %v1207
        %v1209 = vpop.f32.mrb[0].mxu0
        %v1210 = vadd.f32 0.0, %v1209
        %v1211 = vpop.f32.mrb[0].mxu0
        %v1212 = vadd.f32 0.0, %v1211
        %1213 = vmatprep.mubr.bf16.mxu0 0
        %1214 = vmatmul.mubr.bf16.gmra.mrb[0].mxu0 %v685
        %v1215 = vpop.f32.mrb[0].mxu0
        %v1216 = vadd.f32 0.0, %v1215
        %v1217 = vpop.f32.mrb[0].mxu0
        %v1218 = vadd.f32 0.0, %v1217
        %v1219 = vpop.f32.mrb[0].mxu0
        %v1220 = vadd.f32 0.0, %v1219
        %v1221 = vpop.f32.mrb[0].mxu0
        %v1222 = vadd.f32 0.0, %v1221
        %1223 = vmatprep.mubr.bf16.mxu0 0
        %1224 = vmatmul.mubr.bf16.gmra.mrb[0].mxu0 %v688
        %v1225 = vpop.f32.mrb[0].mxu0
        %v1226 = vadd.f32 0.0, %v1225
        %v1227 = vpop.f32.mrb[0].mxu0
        %v1228 = vadd.f32 0.0, %v1227
        %v1229 = vpop.f32.mrb[0].mxu0
        %v1230 = vadd.f32 0.0, %v1229
        %v1231 = vpop.f32.mrb[0].mxu0
        %v1232 = vadd.f32 0.0, %v1231
        %1233 = vmatprep.mubr.bf16.mxu0 0
        %1234 = vmatmul.mubr.bf16.gmra.mrb[0].mxu0 %v691
        %v1235 = vpop.f32.mrb[0].mxu0
        %v1236 = vadd.f32 0.0, %v1235
        %v1237 = vpop.f32.mrb[0].mxu0
        %v1238 = vadd.f32 0.0, %v1237
        %v1239 = vpop.f32.mrb[0].mxu0
        %v1240 = vadd.f32 0.0, %v1239
        %v1241 = vpop.f32.mrb[0].mxu0
        %v1242 = vadd.f32 0.0, %v1241
        %1243 = vmatprep.mubr.bf16.mxu0 0
        %1244 = vmatmul.mubr.bf16.gmra.mrb[0].mxu0 %v694
        %v1245 = vpop.f32.mrb[0].mxu0
        %v1246 = vadd.f32 0.0, %v1245
        %v1247 = vpop.f32.mrb[0].mxu0
        %v1248 = vadd.f32 0.0, %v1247
        %v1249 = vpop.f32.mrb[0].mxu0
        %v1250 = vadd.f32 0.0, %v1249
        %v1251 = vpop.f32.mrb[0].mxu0
        %v1252 = vadd.f32 0.0, %v1251
        %1253 = vmatprep.mubr.bf16.mxu0 0
        %1254 = vmatmul.mubr.bf16.gmra.mrb[0].mxu0 %v697
        %v1255 = vpop.f32.mrb[0].mxu0
        %v1256 = vadd.f32 0.0, %v1255
        %v1257 = vpop.f32.mrb[0].mxu0
        %v1258 = vadd.f32 0.0, %v1257
        %v1259 = vpop.f32.mrb[0].mxu0
        %v1260 = vadd.f32 0.0, %v1259
        %v1261 = vpop.f32.mrb[0].mxu0
        %v1262 = vadd.f32 0.0, %v1261
        %1263 = vmatprep.mubr.bf16.mxu0 0
        %1264 = vmatmul.mubr.bf16.gmra.mrb[0].mxu0 %v700
        %v1265 = vpop.f32.mrb[0].mxu0
        %v1266 = vadd.f32 0.0, %v1265
        %v1267 = vpop.f32.mrb[0].mxu0
        %v1268 = vadd.f32 0.0, %v1267
        %v1269 = vpop.f32.mrb[0].mxu0
        %v1270 = vadd.f32 0.0, %v1269
        %v1271 = vpop.f32.mrb[0].mxu0
        %v1272 = vadd.f32 0.0, %v1271
        %1273 = vmatprep.mubr.bf16.mxu0 0
        %1274 = vmatmul.mubr.bf16.gmra.mrb[0].mxu0 %v703
        %v1275 = vpop.f32.mrb[0].mxu0
        %v1276 = vadd.f32 0.0, %v1275
        %v1277 = vpop.f32.mrb[0].mxu0
        %v1278 = vadd.f32 0.0, %v1277
        %v1279 = vpop.f32.mrb[0].mxu0
        %v1280 = vadd.f32 0.0, %v1279
        %v1281 = vpop.f32.mrb[0].mxu0
        %v1282 = vadd.f32 0.0, %v1281
        %1283 = vdwg.mxu0
        %v1284 = vld [vmem:[%s5] ss:$2 sm:$0x7]
        %v1286 = vlaneseq
        %v1287 = vshrl.u32 %v1286, 7
        %v1288 = vsub.s32 0, %v1287
        %v1289 = vrot.slane %v1284, %v1288
        %v1290 = vlaneseq
        %v1291 = vshrl.u32 %v1290, 7
        %v1292 = vsub.s32 1, %v1291
        %v1293 = vrot.slane %v1284, %v1292
        %v1294 = vlaneseq
        %v1295 = vshrl.u32 %v1294, 7
        %v1296 = vsub.s32 2, %v1295
        %v1297 = vrot.slane %v1284, %v1296
        %v1301 = vadd.f32 %v740, %v1289
        %v1302 = vadd.f32 %v742, %v1293
        %v1303 = vadd.f32 %v933, %v1297
        %v1304 = vadd.f32 %v744, %v1289
        %v1305 = vadd.f32 %v746, %v1293
        %v1306 = vadd.f32 %v937, %v1297
        %v1307 = vadd.f32 %v750, %v1289
        %v1308 = vadd.f32 %v752, %v1293
        %v1309 = vadd.f32 %v943, %v1297
        %v1310 = vadd.f32 %v754, %v1289
        %v1311 = vadd.f32 %v756, %v1293
        %v1312 = vadd.f32 %v947, %v1297
        %v1313 = vadd.f32 %v760, %v1289
        %v1314 = vadd.f32 %v762, %v1293
        %v1315 = vadd.f32 %v953, %v1297
        %v1316 = vadd.f32 %v764, %v1289
        %v1317 = vadd.f32 %v766, %v1293
        %v1318 = vadd.f32 %v957, %v1297
        %v1319 = vadd.f32 %v770, %v1289
        %v1320 = vadd.f32 %v772, %v1293
        %v1321 = vadd.f32 %v963, %v1297
        %v1322 = vadd.f32 %v774, %v1289
        %v1323 = vadd.f32 %v776, %v1293
        %v1324 = vadd.f32 %v967, %v1297
        %v1325 = vadd.f32 %v780, %v1289
        %v1326 = vadd.f32 %v782, %v1293
        %v1327 = vadd.f32 %v973, %v1297
        %v1328 = vadd.f32 %v784, %v1289
        %v1329 = vadd.f32 %v786, %v1293
        %v1330 = vadd.f32 %v977, %v1297
        %v1331 = vadd.f32 %v790, %v1289
        %v1332 = vadd.f32 %v792, %v1293
        %v1333 = vadd.f32 %v983, %v1297
        %v1334 = vadd.f32 %v794, %v1289
        %v1335 = vadd.f32 %v796, %v1293
        %v1336 = vadd.f32 %v987, %v1297
        %v1337 = vadd.f32 %v800, %v1289
        %v1338 = vadd.f32 %v802, %v1293
        %v1339 = vadd.f32 %v993, %v1297
        %v1340 = vadd.f32 %v804, %v1289
        %v1341 = vadd.f32 %v806, %v1293
        %v1342 = vadd.f32 %v997, %v1297
        %v1343 = vadd.f32 %v810, %v1289
        %v1344 = vadd.f32 %v812, %v1293
        %v1345 = vadd.f32 %v1003, %v1297
        %v1346 = vadd.f32 %v814, %v1289
        %v1347 = vadd.f32 %v816, %v1293
        %v1348 = vadd.f32 %v1007, %v1297
        %v1349 = vadd.f32 %v820, %v1289
        %v1350 = vadd.f32 %v822, %v1293
        %v1351 = vadd.f32 %v1013, %v1297
        %v1352 = vadd.f32 %v824, %v1289
        %v1353 = vadd.f32 %v826, %v1293
        %v1354 = vadd.f32 %v1017, %v1297
        %v1355 = vadd.f32 %v830, %v1289
        %v1356 = vadd.f32 %v832, %v1293
        %v1357 = vadd.f32 %v1023, %v1297
        %v1358 = vadd.f32 %v834, %v1289
        %v1359 = vadd.f32 %v836, %v1293
        %v1360 = vadd.f32 %v1027, %v1297
        %v1361 = vadd.f32 %v840, %v1289
        %v1362 = vadd.f32 %v842, %v1293
        %v1363 = vadd.f32 %v1033, %v1297
        %v1364 = vadd.f32 %v844, %v1289
        %v1365 = vadd.f32 %v846, %v1293
        %v1366 = vadd.f32 %v1037, %v1297
        %v1367 = vadd.f32 %v850, %v1289
        %v1368 = vadd.f32 %v852, %v1293
        %v1369 = vadd.f32 %v1043, %v1297
        %v1370 = vadd.f32 %v854, %v1289
        %v1371 = vadd.f32 %v856, %v1293
        %v1372 = vadd.f32 %v1047, %v1297
        %v1373 = vadd.f32 %v860, %v1289
        %v1374 = vadd.f32 %v862, %v1293
        %v1375 = vadd.f32 %v1053, %v1297
        %v1376 = vadd.f32 %v864, %v1289
        %v1377 = vadd.f32 %v866, %v1293
        %v1378 = vadd.f32 %v1057, %v1297
        %v1379 = vadd.f32 %v870, %v1289
        %v1380 = vadd.f32 %v872, %v1293
        %v1381 = vadd.f32 %v1063, %v1297
        %v1382 = vadd.f32 %v874, %v1289
        %v1383 = vadd.f32 %v876, %v1293
        %v1384 = vadd.f32 %v1067, %v1297
        %v1385 = vadd.f32 %v880, %v1289
        %v1386 = vadd.f32 %v882, %v1293
        %v1387 = vadd.f32 %v1073, %v1297
        %v1388 = vadd.f32 %v884, %v1289
        %v1389 = vadd.f32 %v886, %v1293
        %v1390 = vadd.f32 %v1077, %v1297
        %v1391 = vadd.f32 %v890, %v1289
        %v1392 = vadd.f32 %v892, %v1293
        %v1393 = vadd.f32 %v1083, %v1297
        %v1394 = vadd.f32 %v894, %v1289
        %v1395 = vadd.f32 %v896, %v1293
        %v1396 = vadd.f32 %v1087, %v1297
        %v1397 = vpack.c.bf16 %v1304, %v1301
        %v1398 = vpack.c.bf16 %v1305, %v1302
        %v1399 = vpack.c.bf16 %v1306, %v1303
        %v1400 = vpack.c.bf16 %v1310, %v1307
        %v1401 = vpack.c.bf16 %v1311, %v1308
        %v1402 = vpack.c.bf16 %v1312, %v1309
        %v1403 = vpack.c.bf16 %v1316, %v1313
        %v1404 = vpack.c.bf16 %v1317, %v1314
        %v1405 = vpack.c.bf16 %v1318, %v1315
        %v1406 = vpack.c.bf16 %v1322, %v1319
        %v1407 = vpack.c.bf16 %v1323, %v1320
        %v1408 = vpack.c.bf16 %v1324, %v1321
        %v1409 = vpack.c.bf16 %v1328, %v1325
        %v1410 = vpack.c.bf16 %v1329, %v1326
        %v1411 = vpack.c.bf16 %v1330, %v1327
        %v1412 = vpack.c.bf16 %v1334, %v1331
        %v1413 = vpack.c.bf16 %v1335, %v1332
        %v1414 = vpack.c.bf16 %v1336, %v1333
        %v1415 = vpack.c.bf16 %v1340, %v1337
        %v1416 = vpack.c.bf16 %v1341, %v1338
        %v1417 = vpack.c.bf16 %v1342, %v1339
        %v1418 = vpack.c.bf16 %v1346, %v1343
        %v1419 = vpack.c.bf16 %v1347, %v1344
        %v1420 = vpack.c.bf16 %v1348, %v1345
        %v1421 = vpack.c.bf16 %v1352, %v1349
        %v1422 = vpack.c.bf16 %v1353, %v1350
        %v1423 = vpack.c.bf16 %v1354, %v1351
        %v1424 = vpack.c.bf16 %v1358, %v1355
        %v1425 = vpack.c.bf16 %v1359, %v1356
        %v1426 = vpack.c.bf16 %v1360, %v1357
        %v1427 = vpack.c.bf16 %v1364, %v1361
        %v1428 = vpack.c.bf16 %v1365, %v1362
        %v1429 = vpack.c.bf16 %v1366, %v1363
        %v1430 = vpack.c.bf16 %v1370, %v1367
        %v1431 = vpack.c.bf16 %v1371, %v1368
        %v1432 = vpack.c.bf16 %v1372, %v1369
        %v1433 = vpack.c.bf16 %v1376, %v1373
        %v1434 = vpack.c.bf16 %v1377, %v1374
        %v1435 = vpack.c.bf16 %v1378, %v1375
        %v1436 = vpack.c.bf16 %v1382, %v1379
        %v1437 = vpack.c.bf16 %v1383, %v1380
        %v1438 = vpack.c.bf16 %v1384, %v1381
        %v1439 = vpack.c.bf16 %v1388, %v1385
        %v1440 = vpack.c.bf16 %v1389, %v1386
        %v1441 = vpack.c.bf16 %v1390, %v1387
        %v1442 = vpack.c.bf16 %v1394, %v1391
        %v1443 = vpack.c.bf16 %v1395, %v1392
        %v1444 = vpack.c.bf16 %v1396, %v1393
        %1445 = vst [vmem:[#allocation2] sm:$0xff] %v1397
        %1446 = vst [vmem:[#allocation2 + $0x8] sm:$0xff] %v1398
        %1447 = vst [vmem:[#allocation2 + $0x10] sm:$0xff] %v1399
        %1448 = vst [vmem:[#allocation2 + $0x18] sm:$0xff] %v1400
        %1449 = vst [vmem:[#allocation2 + $0x20] sm:$0xff] %v1401
        %1450 = vst [vmem:[#allocation2 + $0x28] sm:$0xff] %v1402
        %1451 = vst [vmem:[#allocation2 + $0x30] sm:$0xff] %v1403
        %1452 = vst [vmem:[#allocation2 + $0x38] sm:$0xff] %v1404
        %1453 = vst [vmem:[#allocation2 + $0x40] sm:$0xff] %v1405
        %1454 = vst [vmem:[#allocation2 + $0x48] sm:$0xff] %v1406
        %1455 = vst [vmem:[#allocation2 + $0x50] sm:$0xff] %v1407
        %1456 = vst [vmem:[#allocation2 + $0x58] sm:$0xff] %v1408
        %1457 = vst [vmem:[#allocation2 + $0x60] sm:$0xff] %v1409
        %1458 = vst [vmem:[#allocation2 + $0x68] sm:$0xff] %v1410
        %1459 = vst [vmem:[#allocation2 + $0x70] sm:$0xff] %v1411
        %1460 = vst [vmem:[#allocation2 + $0x78] sm:$0xff] %v1412
        %1461 = vst [vmem:[#allocation2 + $0x80] sm:$0xff] %v1413
        %1462 = vst [vmem:[#allocation2 + $0x88] sm:$0xff] %v1414
        %1463 = vst [vmem:[#allocation2 + $0x90] sm:$0xff] %v1415
        %1464 = vst [vmem:[#allocation2 + $0x98] sm:$0xff] %v1416
        %1465 = vst [vmem:[#allocation2 + $0xa0] sm:$0xff] %v1417
        %1466 = vst [vmem:[#allocation2 + $0xa8] sm:$0xff] %v1418
        %1467 = vst [vmem:[#allocation2 + $0xb0] sm:$0xff] %v1419
        %1468 = vst [vmem:[#allocation2 + $0xb8] sm:$0xff] %v1420
        %1469 = vst [vmem:[#allocation2 + $0xc0] sm:$0xff] %v1421
        %1470 = vst [vmem:[#allocation2 + $0xc8] sm:$0xff] %v1422
        %1471 = vst [vmem:[#allocation2 + $0xd0] sm:$0xff] %v1423
        %1472 = vst [vmem:[#allocation2 + $0xd8] sm:$0xff] %v1424
        %1473 = vst [vmem:[#allocation2 + $0xe0] sm:$0xff] %v1425
        %1474 = vst [vmem:[#allocation2 + $0xe8] sm:$0xff] %v1426
        %1475 = vst [vmem:[#allocation2 + $0xf0] sm:$0xff] %v1427
        %1476 = vst [vmem:[#allocation2 + $0xf8] sm:$0xff] %v1428
        %1477 = vst [vmem:[#allocation2 + $0x100] sm:$0xff] %v1429
        %1478 = vst [vmem:[#allocation2 + $0x108] sm:$0xff] %v1430
        %1479 = vst [vmem:[#allocation2 + $0x110] sm:$0xff] %v1431
        %1480 = vst [vmem:[#allocation2 + $0x118] sm:$0xff] %v1432
        %1481 = vst [vmem:[#allocation2 + $0x120] sm:$0xff] %v1433
        %1482 = vst [vmem:[#allocation2 + $0x128] sm:$0xff] %v1434
        %1483 = vst [vmem:[#allocation2 + $0x130] sm:$0xff] %v1435
        %1484 = vst [vmem:[#allocation2 + $0x138] sm:$0xff] %v1436
        %1485 = vst [vmem:[#allocation2 + $0x140] sm:$0xff] %v1437
        %1486 = vst [vmem:[#allocation2 + $0x148] sm:$0xff] %v1438
        %1487 = vst [vmem:[#allocation2 + $0x150] sm:$0xff] %v1439
        %1488 = vst [vmem:[#allocation2 + $0x158] sm:$0xff] %v1440
        %1489 = vst [vmem:[#allocation2 + $0x160] sm:$0xff] %v1441
        %1490 = vst [vmem:[#allocation2 + $0x168] sm:$0xff] %v1442
        %1491 = vst [vmem:[#allocation2 + $0x170] sm:$0xff] %v1443
        %1492 = vst [vmem:[#allocation2 + $0x178] sm:$0xff] %v1444
        %s1493 = scalar_lea.vmem %s5, 1
        %v1494 = vld [vmem:[%s1493] ss:$2 sm:$0x7]
        %v1496 = vlaneseq
        %v1497 = vshrl.u32 %v1496, 7
        %v1498 = vsub.s32 0, %v1497
        %v1499 = vrot.slane %v1494, %v1498
        %v1500 = vlaneseq
        %v1501 = vshrl.u32 %v1500, 7
        %v1502 = vsub.s32 1, %v1501
        %v1503 = vrot.slane %v1494, %v1502
        %v1504 = vlaneseq
        %v1505 = vshrl.u32 %v1504, 7
        %v1506 = vsub.s32 2, %v1505
        %v1507 = vrot.slane %v1494, %v1506
        %v1511 = vadd.f32 %v935, %v1499
        %v1512 = vadd.f32 %v1126, %v1503
        %v1513 = vadd.f32 %v1128, %v1507
        %v1514 = vadd.f32 %v939, %v1499
        %v1515 = vadd.f32 %v1130, %v1503
        %v1516 = vadd.f32 %v1132, %v1507
        %v1517 = vadd.f32 %v945, %v1499
        %v1518 = vadd.f32 %v1136, %v1503
        %v1519 = vadd.f32 %v1138, %v1507
        %v1520 = vadd.f32 %v949, %v1499
        %v1521 = vadd.f32 %v1140, %v1503
        %v1522 = vadd.f32 %v1142, %v1507
        %v1523 = vadd.f32 %v955, %v1499
        %v1524 = vadd.f32 %v1146, %v1503
        %v1525 = vadd.f32 %v1148, %v1507
        %v1526 = vadd.f32 %v959, %v1499
        %v1527 = vadd.f32 %v1150, %v1503
        %v1528 = vadd.f32 %v1152, %v1507
        %v1529 = vadd.f32 %v965, %v1499
        %v1530 = vadd.f32 %v1156, %v1503
        %v1531 = vadd.f32 %v1158, %v1507
        %v1532 = vadd.f32 %v969, %v1499
        %v1533 = vadd.f32 %v1160, %v1503
        %v1534 = vadd.f32 %v1162, %v1507
        %v1535 = vadd.f32 %v975, %v1499
        %v1536 = vadd.f32 %v1166, %v1503
        %v1537 = vadd.f32 %v1168, %v1507
        %v1538 = vadd.f32 %v979, %v1499
        %v1539 = vadd.f32 %v1170, %v1503
        %v1540 = vadd.f32 %v1172, %v1507
        %v1541 = vadd.f32 %v985, %v1499
        %v1542 = vadd.f32 %v1176, %v1503
        %v1543 = vadd.f32 %v1178, %v1507
        %v1544 = vadd.f32 %v989, %v1499
        %v1545 = vadd.f32 %v1180, %v1503
        %v1546 = vadd.f32 %v1182, %v1507
        %v1547 = vadd.f32 %v995, %v1499
        %v1548 = vadd.f32 %v1186, %v1503
        %v1549 = vadd.f32 %v1188, %v1507
        %v1550 = vadd.f32 %v999, %v1499
        %v1551 = vadd.f32 %v1190, %v1503
        %v1552 = vadd.f32 %v1192, %v1507
        %v1553 = vadd.f32 %v1005, %v1499
        %v1554 = vadd.f32 %v1196, %v1503
        %v1555 = vadd.f32 %v1198, %v1507
        %v1556 = vadd.f32 %v1009, %v1499
        %v1557 = vadd.f32 %v1200, %v1503
        %v1558 = vadd.f32 %v1202, %v1507
        %v1559 = vadd.f32 %v1015, %v1499
        %v1560 = vadd.f32 %v1206, %v1503
        %v1561 = vadd.f32 %v1208, %v1507
        %v1562 = vadd.f32 %v1019, %v1499
        %v1563 = vadd.f32 %v1210, %v1503
        %v1564 = vadd.f32 %v1212, %v1507
        %v1565 = vadd.f32 %v1025, %v1499
        %v1566 = vadd.f32 %v1216, %v1503
        %v1567 = vadd.f32 %v1218, %v1507
        %v1568 = vadd.f32 %v1029, %v1499
        %v1569 = vadd.f32 %v1220, %v1503
        %v1570 = vadd.f32 %v1222, %v1507
        %v1571 = vadd.f32 %v1035, %v1499
        %v1572 = vadd.f32 %v1226, %v1503
        %v1573 = vadd.f32 %v1228, %v1507
        %v1574 = vadd.f32 %v1039, %v1499
        %v1575 = vadd.f32 %v1230, %v1503
        %v1576 = vadd.f32 %v1232, %v1507
        %v1577 = vadd.f32 %v1045, %v1499
        %v1578 = vadd.f32 %v1236, %v1503
        %v1579 = vadd.f32 %v1238, %v1507
        %v1580 = vadd.f32 %v1049, %v1499
        %v1581 = vadd.f32 %v1240, %v1503
        %v1582 = vadd.f32 %v1242, %v1507
        %v1583 = vadd.f32 %v1055, %v1499
        %v1584 = vadd.f32 %v1246, %v1503
        %v1585 = vadd.f32 %v1248, %v1507
        %v1586 = vadd.f32 %v1059, %v1499
        %v1587 = vadd.f32 %v1250, %v1503
        %v1588 = vadd.f32 %v1252, %v1507
        %v1589 = vadd.f32 %v1065, %v1499
        %v1590 = vadd.f32 %v1256, %v1503
        %v1591 = vadd.f32 %v1258, %v1507
        %v1592 = vadd.f32 %v1069, %v1499
        %v1593 = vadd.f32 %v1260, %v1503
        %v1594 = vadd.f32 %v1262, %v1507
        %v1595 = vadd.f32 %v1075, %v1499
        %v1596 = vadd.f32 %v1266, %v1503
        %v1597 = vadd.f32 %v1268, %v1507
        %v1598 = vadd.f32 %v1079, %v1499
        %v1599 = vadd.f32 %v1270, %v1503
        %v1600 = vadd.f32 %v1272, %v1507
        %v1601 = vadd.f32 %v1085, %v1499
        %v1602 = vadd.f32 %v1276, %v1503
        %v1603 = vadd.f32 %v1278, %v1507
        %v1604 = vadd.f32 %v1089, %v1499
        %v1605 = vadd.f32 %v1280, %v1503
        %v1606 = vadd.f32 %v1282, %v1507
        %v1607 = vpack.c.bf16 %v1514, %v1511
        %v1608 = vpack.c.bf16 %v1515, %v1512
        %v1609 = vpack.c.bf16 %v1516, %v1513
        %v1610 = vpack.c.bf16 %v1520, %v1517
        %v1611 = vpack.c.bf16 %v1521, %v1518
        %v1612 = vpack.c.bf16 %v1522, %v1519
        %v1613 = vpack.c.bf16 %v1526, %v1523
        %v1614 = vpack.c.bf16 %v1527, %v1524
        %v1615 = vpack.c.bf16 %v1528, %v1525
        %v1616 = vpack.c.bf16 %v1532, %v1529
        %v1617 = vpack.c.bf16 %v1533, %v1530
        %v1618 = vpack.c.bf16 %v1534, %v1531
        %v1619 = vpack.c.bf16 %v1538, %v1535
        %v1620 = vpack.c.bf16 %v1539, %v1536
        %v1621 = vpack.c.bf16 %v1540, %v1537
        %v1622 = vpack.c.bf16 %v1544, %v1541
        %v1623 = vpack.c.bf16 %v1545, %v1542
        %v1624 = vpack.c.bf16 %v1546, %v1543
        %v1625 = vpack.c.bf16 %v1550, %v1547
        %v1626 = vpack.c.bf16 %v1551, %v1548
        %v1627 = vpack.c.bf16 %v1552, %v1549
        %v1628 = vpack.c.bf16 %v1556, %v1553
        %v1629 = vpack.c.bf16 %v1557, %v1554
        %v1630 = vpack.c.bf16 %v1558, %v1555
        %v1631 = vpack.c.bf16 %v1562, %v1559
        %v1632 = vpack.c.bf16 %v1563, %v1560
        %v1633 = vpack.c.bf16 %v1564, %v1561
        %v1634 = vpack.c.bf16 %v1568, %v1565
        %v1635 = vpack.c.bf16 %v1569, %v1566
        %v1636 = vpack.c.bf16 %v1570, %v1567
        %v1637 = vpack.c.bf16 %v1574, %v1571
        %v1638 = vpack.c.bf16 %v1575, %v1572
        %v1639 = vpack.c.bf16 %v1576, %v1573
        %v1640 = vpack.c.bf16 %v1580, %v1577
        %v1641 = vpack.c.bf16 %v1581, %v1578
        %v1642 = vpack.c.bf16 %v1582, %v1579
        %v1643 = vpack.c.bf16 %v1586, %v1583
        %v1644 = vpack.c.bf16 %v1587, %v1584
        %v1645 = vpack.c.bf16 %v1588, %v1585
        %v1646 = vpack.c.bf16 %v1592, %v1589
        %v1647 = vpack.c.bf16 %v1593, %v1590
        %v1648 = vpack.c.bf16 %v1594, %v1591
        %v1649 = vpack.c.bf16 %v1598, %v1595
        %v1650 = vpack.c.bf16 %v1599, %v1596
        %v1651 = vpack.c.bf16 %v1600, %v1597
        %v1652 = vpack.c.bf16 %v1604, %v1601
        %v1653 = vpack.c.bf16 %v1605, %v1602
        %v1654 = vpack.c.bf16 %v1606, %v1603
        %1655 = vst [vmem:[#allocation3] sm:$0xff] %v1607
        %1656 = vst [vmem:[#allocation3 + $0x8] sm:$0xff] %v1608
        %1657 = vst [vmem:[#allocation3 + $0x10] sm:$0xff] %v1609
        %1658 = vst [vmem:[#allocation3 + $0x18] sm:$0xff] %v1610
        %1659 = vst [vmem:[#allocation3 + $0x20] sm:$0xff] %v1611
        %1660 = vst [vmem:[#allocation3 + $0x28] sm:$0xff] %v1612
        %1661 = vst [vmem:[#allocation3 + $0x30] sm:$0xff] %v1613
        %1662 = vst [vmem:[#allocation3 + $0x38] sm:$0xff] %v1614
        %1663 = vst [vmem:[#allocation3 + $0x40] sm:$0xff] %v1615
        %1664 = vst [vmem:[#allocation3 + $0x48] sm:$0xff] %v1616
        %1665 = vst [vmem:[#allocation3 + $0x50] sm:$0xff] %v1617
        %1666 = vst [vmem:[#allocation3 + $0x58] sm:$0xff] %v1618
        %1667 = vst [vmem:[#allocation3 + $0x60] sm:$0xff] %v1619
        %1668 = vst [vmem:[#allocation3 + $0x68] sm:$0xff] %v1620
        %1669 = vst [vmem:[#allocation3 + $0x70] sm:$0xff] %v1621
        %1670 = vst [vmem:[#allocation3 + $0x78] sm:$0xff] %v1622
        %1671 = vst [vmem:[#allocation3 + $0x80] sm:$0xff] %v1623
        %1672 = vst [vmem:[#allocation3 + $0x88] sm:$0xff] %v1624
        %1673 = vst [vmem:[#allocation3 + $0x90] sm:$0xff] %v1625
        %1674 = vst [vmem:[#allocation3 + $0x98] sm:$0xff] %v1626
        %1675 = vst [vmem:[#allocation3 + $0xa0] sm:$0xff] %v1627
        %1676 = vst [vmem:[#allocation3 + $0xa8] sm:$0xff] %v1628
        %1677 = vst [vmem:[#allocation3 + $0xb0] sm:$0xff] %v1629
        %1678 = vst [vmem:[#allocation3 + $0xb8] sm:$0xff] %v1630
        %1679 = vst [vmem:[#allocation3 + $0xc0] sm:$0xff] %v1631
        %1680 = vst [vmem:[#allocation3 + $0xc8] sm:$0xff] %v1632
        %1681 = vst [vmem:[#allocation3 + $0xd0] sm:$0xff] %v1633
        %1682 = vst [vmem:[#allocation3 + $0xd8] sm:$0xff] %v1634
        %1683 = vst [vmem:[#allocation3 + $0xe0] sm:$0xff] %v1635
        %1684 = vst [vmem:[#allocation3 + $0xe8] sm:$0xff] %v1636
        %1685 = vst [vmem:[#allocation3 + $0xf0] sm:$0xff] %v1637
        %1686 = vst [vmem:[#allocation3 + $0xf8] sm:$0xff] %v1638
        %1687 = vst [vmem:[#allocation3 + $0x100] sm:$0xff] %v1639
        %1688 = vst [vmem:[#allocation3 + $0x108] sm:$0xff] %v1640
        %1689 = vst [vmem:[#allocation3 + $0x110] sm:$0xff] %v1641
        %1690 = vst [vmem:[#allocation3 + $0x118] sm:$0xff] %v1642
        %1691 = vst [vmem:[#allocation3 + $0x120] sm:$0xff] %v1643
        %1692 = vst [vmem:[#allocation3 + $0x128] sm:$0xff] %v1644
        %1693 = vst [vmem:[#allocation3 + $0x130] sm:$0xff] %v1645
        %1694 = vst [vmem:[#allocation3 + $0x138] sm:$0xff] %v1646
        %1695 = vst [vmem:[#allocation3 + $0x140] sm:$0xff] %v1647
        %1696 = vst [vmem:[#allocation3 + $0x148] sm:$0xff] %v1648
        %1697 = vst [vmem:[#allocation3 + $0x150] sm:$0xff] %v1649
        %1698 = vst [vmem:[#allocation3 + $0x158] sm:$0xff] %v1650
        %1699 = vst [vmem:[#allocation3 + $0x160] sm:$0xff] %v1651
        %1700 = vst [vmem:[#allocation3 + $0x168] sm:$0xff] %v1652
        %1701 = vst [vmem:[#allocation3 + $0x170] sm:$0xff] %v1653
        %1702 = vst [vmem:[#allocation3 + $0x178] sm:$0xff] %v1654
        %v1703 = vld [vmem:[%s6] sm:$0x1]
        %v1704 = vld [vmem:[%s6 + $0x1] sm:$0x1]
        // While loop
        $region57: #{tpu_custom_call.1} parent=43 // loop_pre_header
          _
        $region58: #{tpu_custom_call.1} parent=43 // loop_header
          %s1706 = sphi 0, %s1708
          %p1707 = scmp.ge.s32.totalorder %s1706, %s395
          %v1711 = vphi 0.0, %v2569
          %v1712 = vphi 0.0, %v2570
          %v1713 = vphi 0.0, %v2571
          %v1714 = vphi 0.0, %v2572
          %v1715 = vphi 0.0, %v2723
          %v1716 = vphi 0.0, %v2724
          %v1717 = vphi 0.0, %v2725
          %v1718 = vphi 0.0, %v2726
        $region59: #{tpu_custom_call.1} parent=43 // loop_header_branch
          %1710 = sbr.rel (%p1707) target = $region63
        $region60: #{tpu_custom_call.1} parent=43 // loop_body
          %s1719 = ssub.s32 %s395, 1
          %s1720 = ssub.s32 %s1719, %s1706
          %v1721 = vpack.c.bf16 %v1712, %v1711
          %v1722 = vpack.c.bf16 %v1716, %v1715
          %v1723 = vpack.c.bf16 %v1714, %v1713
          %v1724 = vpack.c.bf16 %v1718, %v1717
          %v1725 = vld [vmem:[#allocation12] sm:$0xff]
          %v1726 = vld [vmem:[#allocation12 + $0x8] sm:$0xff]
          %v1727 = vld [vmem:[#allocation12 + $0x10] sm:$0xff]
          %v1728 = vld [vmem:[#allocation12 + $0x18] sm:$0xff]
          %v1729 = vld [vmem:[#allocation12 + $0x20] sm:$0xff]
          %v1730 = vld [vmem:[#allocation12 + $0x28] sm:$0xff]
          %v1731 = vld [vmem:[#allocation12 + $0x30] sm:$0xff]
          %v1732 = vld [vmem:[#allocation12 + $0x38] sm:$0xff]
          %v1733 = vld [vmem:[#allocation12 + $0x40] sm:$0xff]
          %v1734 = vld [vmem:[#allocation12 + $0x48] sm:$0xff]
          %v1735 = vld [vmem:[#allocation12 + $0x50] sm:$0xff]
          %v1736 = vld [vmem:[#allocation12 + $0x58] sm:$0xff]
          %v1737 = vld [vmem:[#allocation12 + $0x60] sm:$0xff]
          %v1738 = vld [vmem:[#allocation12 + $0x68] sm:$0xff]
          %v1739 = vld [vmem:[#allocation12 + $0x70] sm:$0xff]
          %v1740 = vld [vmem:[#allocation12 + $0x78] sm:$0xff]
          %v1741 = vld [vmem:[#allocation12 + $0x80] sm:$0xff]
          %v1742 = vld [vmem:[#allocation12 + $0x88] sm:$0xff]
          %v1743 = vld [vmem:[#allocation12 + $0x90] sm:$0xff]
          %v1744 = vld [vmem:[#allocation12 + $0x98] sm:$0xff]
          %v1745 = vld [vmem:[#allocation12 + $0xa0] sm:$0xff]
          %v1746 = vld [vmem:[#allocation12 + $0xa8] sm:$0xff]
          %v1747 = vld [vmem:[#allocation12 + $0xb0] sm:$0xff]
          %v1748 = vld [vmem:[#allocation12 + $0xb8] sm:$0xff]
          %v1749 = vld [vmem:[#allocation12 + $0xc0] sm:$0xff]
          %v1750 = vld [vmem:[#allocation12 + $0xc8] sm:$0xff]
          %v1751 = vld [vmem:[#allocation12 + $0xd0] sm:$0xff]
          %v1752 = vld [vmem:[#allocation12 + $0xd8] sm:$0xff]
          %v1753 = vld [vmem:[#allocation12 + $0xe0] sm:$0xff]
          %v1754 = vld [vmem:[#allocation12 + $0xe8] sm:$0xff]
          %v1755 = vld [vmem:[#allocation12 + $0xf0] sm:$0xff]
          %v1756 = vld [vmem:[#allocation12 + $0xf8] sm:$0xff]
          %v1757 = vld [vmem:[#allocation12 + $0x100] sm:$0xff]
          %v1758 = vld [vmem:[#allocation12 + $0x108] sm:$0xff]
          %v1759 = vld [vmem:[#allocation12 + $0x110] sm:$0xff]
          %v1760 = vld [vmem:[#allocation12 + $0x118] sm:$0xff]
          %v1761 = vld [vmem:[#allocation12 + $0x120] sm:$0xff]
          %v1762 = vld [vmem:[#allocation12 + $0x128] sm:$0xff]
          %v1763 = vld [vmem:[#allocation12 + $0x130] sm:$0xff]
          %v1764 = vld [vmem:[#allocation12 + $0x138] sm:$0xff]
          %v1765 = vld [vmem:[#allocation12 + $0x140] sm:$0xff]
          %v1766 = vld [vmem:[#allocation12 + $0x148] sm:$0xff]
          %v1767 = vld [vmem:[#allocation12 + $0x150] sm:$0xff]
          %v1768 = vld [vmem:[#allocation12 + $0x158] sm:$0xff]
          %v1769 = vld [vmem:[#allocation12 + $0x160] sm:$0xff]
          %v1770 = vld [vmem:[#allocation12 + $0x168] sm:$0xff]
          %v1771 = vld [vmem:[#allocation12 + $0x170] sm:$0xff]
          %v1772 = vld [vmem:[#allocation12 + $0x178] sm:$0xff]
          %v1773 = vld [vmem:[#allocation12 + $0x180] sm:$0xff]
          %v1774 = vld [vmem:[#allocation12 + $0x188] sm:$0xff]
          %v1775 = vld [vmem:[#allocation12 + $0x190] sm:$0xff]
          %v1776 = vld [vmem:[#allocation12 + $0x198] sm:$0xff]
          %v1777 = vld [vmem:[#allocation12 + $0x1a0] sm:$0xff]
          %v1778 = vld [vmem:[#allocation12 + $0x1a8] sm:$0xff]
          %v1779 = vld [vmem:[#allocation12 + $0x1b0] sm:$0xff]
          %v1780 = vld [vmem:[#allocation12 + $0x1b8] sm:$0xff]
          %v1781 = vld [vmem:[#allocation12 + $0x1c0] sm:$0xff]
          %v1782 = vld [vmem:[#allocation12 + $0x1c8] sm:$0xff]
          %v1783 = vld [vmem:[#allocation12 + $0x1d0] sm:$0xff]
          %v1784 = vld [vmem:[#allocation12 + $0x1d8] sm:$0xff]
          %v1785 = vld [vmem:[#allocation12 + $0x1e0] sm:$0xff]
          %v1786 = vld [vmem:[#allocation12 + $0x1e8] sm:$0xff]
          %v1787 = vld [vmem:[#allocation12 + $0x1f0] sm:$0xff]
          %v1788 = vld [vmem:[#allocation12 + $0x1f8] sm:$0xff]
          %v1789 = vld [vmem:[#allocation12 + $0x200] sm:$0xff]
          %v1790 = vld [vmem:[#allocation12 + $0x208] sm:$0xff]
          %v1791 = vld [vmem:[#allocation12 + $0x210] sm:$0xff]
          %v1792 = vld [vmem:[#allocation12 + $0x218] sm:$0xff]
          %v1793 = vld [vmem:[#allocation12 + $0x220] sm:$0xff]
          %v1794 = vld [vmem:[#allocation12 + $0x228] sm:$0xff]
          %v1795 = vld [vmem:[#allocation12 + $0x230] sm:$0xff]
          %v1796 = vld [vmem:[#allocation12 + $0x238] sm:$0xff]
          %v1797 = vld [vmem:[#allocation12 + $0x240] sm:$0xff]
          %v1798 = vld [vmem:[#allocation12 + $0x248] sm:$0xff]
          %v1799 = vld [vmem:[#allocation12 + $0x250] sm:$0xff]
          %v1800 = vld [vmem:[#allocation12 + $0x258] sm:$0xff]
          %v1801 = vld [vmem:[#allocation12 + $0x260] sm:$0xff]
          %v1802 = vld [vmem:[#allocation12 + $0x268] sm:$0xff]
          %v1803 = vld [vmem:[#allocation12 + $0x270] sm:$0xff]
          %v1804 = vld [vmem:[#allocation12 + $0x278] sm:$0xff]
          %v1805 = vld [vmem:[#allocation12 + $0x280] sm:$0xff]
          %v1806 = vld [vmem:[#allocation12 + $0x288] sm:$0xff]
          %v1807 = vld [vmem:[#allocation12 + $0x290] sm:$0xff]
          %v1808 = vld [vmem:[#allocation12 + $0x298] sm:$0xff]
          %v1809 = vld [vmem:[#allocation12 + $0x2a0] sm:$0xff]
          %v1810 = vld [vmem:[#allocation12 + $0x2a8] sm:$0xff]
          %v1811 = vld [vmem:[#allocation12 + $0x2b0] sm:$0xff]
          %v1812 = vld [vmem:[#allocation12 + $0x2b8] sm:$0xff]
          %v1813 = vld [vmem:[#allocation12 + $0x2c0] sm:$0xff]
          %v1814 = vld [vmem:[#allocation12 + $0x2c8] sm:$0xff]
          %v1815 = vld [vmem:[#allocation12 + $0x2d0] sm:$0xff]
          %v1816 = vld [vmem:[#allocation12 + $0x2d8] sm:$0xff]
          %v1817 = vld [vmem:[#allocation12 + $0x2e0] sm:$0xff]
          %v1818 = vld [vmem:[#allocation12 + $0x2e8] sm:$0xff]
          %v1819 = vld [vmem:[#allocation12 + $0x2f0] sm:$0xff]
          %v1820 = vld [vmem:[#allocation12 + $0x2f8] sm:$0xff]
          %v1917 = vunpack.c.l.b16 %v1725
          %v1918 = vunpack.c.h.b16 %v1725
          %v1919 = vunpack.c.l.b16 %v1726
          %v1920 = vunpack.c.h.b16 %v1726
          %v1921 = vunpack.c.l.b16 %v1727
          %v1922 = vunpack.c.h.b16 %v1727
          %v1923 = vunpack.c.l.b16 %v1728
          %v1924 = vunpack.c.h.b16 %v1728
          %v1925 = vunpack.c.l.b16 %v1729
          %v1926 = vunpack.c.h.b16 %v1729
          %v1927 = vunpack.c.l.b16 %v1730
          %v1928 = vunpack.c.h.b16 %v1730
          %v1929 = vunpack.c.l.b16 %v1731
          %v1930 = vunpack.c.h.b16 %v1731
          %v1931 = vunpack.c.l.b16 %v1732
          %v1932 = vunpack.c.h.b16 %v1732
          %v1933 = vunpack.c.l.b16 %v1733
          %v1934 = vunpack.c.h.b16 %v1733
          %v1935 = vunpack.c.l.b16 %v1734
          %v1936 = vunpack.c.h.b16 %v1734
          %v1937 = vunpack.c.l.b16 %v1735
          %v1938 = vunpack.c.h.b16 %v1735
          %v1939 = vunpack.c.l.b16 %v1736
          %v1940 = vunpack.c.h.b16 %v1736
          %v1941 = vunpack.c.l.b16 %v1737
          %v1942 = vunpack.c.h.b16 %v1737
          %v1943 = vunpack.c.l.b16 %v1738
          %v1944 = vunpack.c.h.b16 %v1738
          %v1945 = vunpack.c.l.b16 %v1739
          %v1946 = vunpack.c.h.b16 %v1739
          %v1947 = vunpack.c.l.b16 %v1740
          %v1948 = vunpack.c.h.b16 %v1740
          %v1949 = vunpack.c.l.b16 %v1741
          %v1950 = vunpack.c.h.b16 %v1741
          %v1951 = vunpack.c.l.b16 %v1742
          %v1952 = vunpack.c.h.b16 %v1742
          %v1953 = vunpack.c.l.b16 %v1743
          %v1954 = vunpack.c.h.b16 %v1743
          %v1955 = vunpack.c.l.b16 %v1744
          %v1956 = vunpack.c.h.b16 %v1744
          %v1957 = vunpack.c.l.b16 %v1745
          %v1958 = vunpack.c.h.b16 %v1745
          %v1959 = vunpack.c.l.b16 %v1746
          %v1960 = vunpack.c.h.b16 %v1746
          %v1961 = vunpack.c.l.b16 %v1747
          %v1962 = vunpack.c.h.b16 %v1747
          %v1963 = vunpack.c.l.b16 %v1748
          %v1964 = vunpack.c.h.b16 %v1748
          %v1965 = vunpack.c.l.b16 %v1749
          %v1966 = vunpack.c.h.b16 %v1749
          %v1967 = vunpack.c.l.b16 %v1750
          %v1968 = vunpack.c.h.b16 %v1750
          %v1969 = vunpack.c.l.b16 %v1751
          %v1970 = vunpack.c.h.b16 %v1751
          %v1971 = vunpack.c.l.b16 %v1752
          %v1972 = vunpack.c.h.b16 %v1752
          %v1973 = vunpack.c.l.b16 %v1753
          %v1974 = vunpack.c.h.b16 %v1753
          %v1975 = vunpack.c.l.b16 %v1754
          %v1976 = vunpack.c.h.b16 %v1754
          %v1977 = vunpack.c.l.b16 %v1755
          %v1978 = vunpack.c.h.b16 %v1755
          %v1979 = vunpack.c.l.b16 %v1756
          %v1980 = vunpack.c.h.b16 %v1756
          %v1981 = vunpack.c.l.b16 %v1757
          %v1982 = vunpack.c.h.b16 %v1757
          %v1983 = vunpack.c.l.b16 %v1758
          %v1984 = vunpack.c.h.b16 %v1758
          %v1985 = vunpack.c.l.b16 %v1759
          %v1986 = vunpack.c.h.b16 %v1759
          %v1987 = vunpack.c.l.b16 %v1760
          %v1988 = vunpack.c.h.b16 %v1760
          %v1989 = vunpack.c.l.b16 %v1761
          %v1990 = vunpack.c.h.b16 %v1761
          %v1991 = vunpack.c.l.b16 %v1762
          %v1992 = vunpack.c.h.b16 %v1762
          %v1993 = vunpack.c.l.b16 %v1763
          %v1994 = vunpack.c.h.b16 %v1763
          %v1995 = vunpack.c.l.b16 %v1764
          %v1996 = vunpack.c.h.b16 %v1764
          %v1997 = vunpack.c.l.b16 %v1765
          %v1998 = vunpack.c.h.b16 %v1765
          %v1999 = vunpack.c.l.b16 %v1766
          %v2000 = vunpack.c.h.b16 %v1766
          %v2001 = vunpack.c.l.b16 %v1767
          %v2002 = vunpack.c.h.b16 %v1767
          %v2003 = vunpack.c.l.b16 %v1768
          %v2004 = vunpack.c.h.b16 %v1768
          %v2005 = vunpack.c.l.b16 %v1769
          %v2006 = vunpack.c.h.b16 %v1769
          %v2007 = vunpack.c.l.b16 %v1770
          %v2008 = vunpack.c.h.b16 %v1770
          %v2009 = vunpack.c.l.b16 %v1771
          %v2010 = vunpack.c.h.b16 %v1771
          %v2011 = vunpack.c.l.b16 %v1772
          %v2012 = vunpack.c.h.b16 %v1772
          %v2013 = vunpack.c.l.b16 %v1773
          %v2014 = vunpack.c.h.b16 %v1773
          %v2015 = vunpack.c.l.b16 %v1774
          %v2016 = vunpack.c.h.b16 %v1774
          %v2017 = vunpack.c.l.b16 %v1775
          %v2018 = vunpack.c.h.b16 %v1775
          %v2019 = vunpack.c.l.b16 %v1776
          %v2020 = vunpack.c.h.b16 %v1776
          %v2021 = vunpack.c.l.b16 %v1777
          %v2022 = vunpack.c.h.b16 %v1777
          %v2023 = vunpack.c.l.b16 %v1778
          %v2024 = vunpack.c.h.b16 %v1778
          %v2025 = vunpack.c.l.b16 %v1779
          %v2026 = vunpack.c.h.b16 %v1779
          %v2027 = vunpack.c.l.b16 %v1780
          %v2028 = vunpack.c.h.b16 %v1780
          %v2029 = vunpack.c.l.b16 %v1781
          %v2030 = vunpack.c.h.b16 %v1781
          %v2031 = vunpack.c.l.b16 %v1782
          %v2032 = vunpack.c.h.b16 %v1782
          %v2033 = vunpack.c.l.b16 %v1783
          %v2034 = vunpack.c.h.b16 %v1783
          %v2035 = vunpack.c.l.b16 %v1784
          %v2036 = vunpack.c.h.b16 %v1784
          %v2037 = vunpack.c.l.b16 %v1785
          %v2038 = vunpack.c.h.b16 %v1785
          %v2039 = vunpack.c.l.b16 %v1786
          %v2040 = vunpack.c.h.b16 %v1786
          %v2041 = vunpack.c.l.b16 %v1787
          %v2042 = vunpack.c.h.b16 %v1787
          %v2043 = vunpack.c.l.b16 %v1788
          %v2044 = vunpack.c.h.b16 %v1788
          %v2045 = vunpack.c.l.b16 %v1789
          %v2046 = vunpack.c.h.b16 %v1789
          %v2047 = vunpack.c.l.b16 %v1790
          %v2048 = vunpack.c.h.b16 %v1790
          %v2049 = vunpack.c.l.b16 %v1791
          %v2050 = vunpack.c.h.b16 %v1791
          %v2051 = vunpack.c.l.b16 %v1792
          %v2052 = vunpack.c.h.b16 %v1792
          %v2053 = vunpack.c.l.b16 %v1793
          %v2054 = vunpack.c.h.b16 %v1793
          %v2055 = vunpack.c.l.b16 %v1794
          %v2056 = vunpack.c.h.b16 %v1794
          %v2057 = vunpack.c.l.b16 %v1795
          %v2058 = vunpack.c.h.b16 %v1795
          %v2059 = vunpack.c.l.b16 %v1796
          %v2060 = vunpack.c.h.b16 %v1796
          %v2061 = vunpack.c.l.b16 %v1797
          %v2062 = vunpack.c.h.b16 %v1797
          %v2063 = vunpack.c.l.b16 %v1798
          %v2064 = vunpack.c.h.b16 %v1798
          %v2065 = vunpack.c.l.b16 %v1799
          %v2066 = vunpack.c.h.b16 %v1799
          %v2067 = vunpack.c.l.b16 %v1800
          %v2068 = vunpack.c.h.b16 %v1800
          %v2069 = vunpack.c.l.b16 %v1801
          %v2070 = vunpack.c.h.b16 %v1801
          %v2071 = vunpack.c.l.b16 %v1802
          %v2072 = vunpack.c.h.b16 %v1802
          %v2073 = vunpack.c.l.b16 %v1803
          %v2074 = vunpack.c.h.b16 %v1803
          %v2075 = vunpack.c.l.b16 %v1804
          %v2076 = vunpack.c.h.b16 %v1804
          %v2077 = vunpack.c.l.b16 %v1805
          %v2078 = vunpack.c.h.b16 %v1805
          %v2079 = vunpack.c.l.b16 %v1806
          %v2080 = vunpack.c.h.b16 %v1806
          %v2081 = vunpack.c.l.b16 %v1807
          %v2082 = vunpack.c.h.b16 %v1807
          %v2083 = vunpack.c.l.b16 %v1808
          %v2084 = vunpack.c.h.b16 %v1808
          %v2085 = vunpack.c.l.b16 %v1809
          %v2086 = vunpack.c.h.b16 %v1809
          %v2087 = vunpack.c.l.b16 %v1810
          %v2088 = vunpack.c.h.b16 %v1810
          %v2089 = vunpack.c.l.b16 %v1811
          %v2090 = vunpack.c.h.b16 %v1811
          %v2091 = vunpack.c.l.b16 %v1812
          %v2092 = vunpack.c.h.b16 %v1812
          %v2093 = vunpack.c.l.b16 %v1813
          %v2094 = vunpack.c.h.b16 %v1813
          %v2095 = vunpack.c.l.b16 %v1814
          %v2096 = vunpack.c.h.b16 %v1814
          %v2097 = vunpack.c.l.b16 %v1815
          %v2098 = vunpack.c.h.b16 %v1815
          %v2099 = vunpack.c.l.b16 %v1816
          %v2100 = vunpack.c.h.b16 %v1816
          %v2101 = vunpack.c.l.b16 %v1817
          %v2102 = vunpack.c.h.b16 %v1817
          %v2103 = vunpack.c.l.b16 %v1818
          %v2104 = vunpack.c.h.b16 %v1818
          %v2105 = vunpack.c.l.b16 %v1819
          %v2106 = vunpack.c.h.b16 %v1819
          %v2107 = vunpack.c.l.b16 %v1820
          %v2108 = vunpack.c.h.b16 %v1820
          %v2109 = vpack.c.b16 %v1923, %v1917
          %v2110 = vpack.c.b16 %v1924, %v1918
          %v2111 = vpack.c.b16 %v1925, %v1919
          %v2112 = vpack.c.b16 %v1926, %v1920
          %v2113 = vpack.c.b16 %v1927, %v1921
          %v2114 = vpack.c.b16 %v1928, %v1922
          %v2115 = vpack.c.b16 %v1935, %v1929
          %v2116 = vpack.c.b16 %v1936, %v1930
          %v2117 = vpack.c.b16 %v1937, %v1931
          %v2118 = vpack.c.b16 %v1938, %v1932
          %v2119 = vpack.c.b16 %v1939, %v1933
          %v2120 = vpack.c.b16 %v1940, %v1934
          %v2121 = vpack.c.b16 %v1947, %v1941
          %v2122 = vpack.c.b16 %v1948, %v1942
          %v2123 = vpack.c.b16 %v1949, %v1943
          %v2124 = vpack.c.b16 %v1950, %v1944
          %v2125 = vpack.c.b16 %v1951, %v1945
          %v2126 = vpack.c.b16 %v1952, %v1946
          %v2127 = vpack.c.b16 %v1959, %v1953
          %v2128 = vpack.c.b16 %v1960, %v1954
          %v2129 = vpack.c.b16 %v1961, %v1955
          %v2130 = vpack.c.b16 %v1962, %v1956
          %v2131 = vpack.c.b16 %v1963, %v1957
          %v2132 = vpack.c.b16 %v1964, %v1958
          %v2133 = vpack.c.b16 %v1971, %v1965
          %v2134 = vpack.c.b16 %v1972, %v1966
          %v2135 = vpack.c.b16 %v1973, %v1967
          %v2136 = vpack.c.b16 %v1974, %v1968
          %v2137 = vpack.c.b16 %v1975, %v1969
          %v2138 = vpack.c.b16 %v1976, %v1970
          %v2139 = vpack.c.b16 %v1983, %v1977
          %v2140 = vpack.c.b16 %v1984, %v1978
          %v2141 = vpack.c.b16 %v1985, %v1979
          %v2142 = vpack.c.b16 %v1986, %v1980
          %v2143 = vpack.c.b16 %v1987, %v1981
          %v2144 = vpack.c.b16 %v1988, %v1982
          %v2145 = vpack.c.b16 %v1995, %v1989
          %v2146 = vpack.c.b16 %v1996, %v1990
          %v2147 = vpack.c.b16 %v1997, %v1991
          %v2148 = vpack.c.b16 %v1998, %v1992
          %v2149 = vpack.c.b16 %v1999, %v1993
          %v2150 = vpack.c.b16 %v2000, %v1994
          %v2151 = vpack.c.b16 %v2007, %v2001
          %v2152 = vpack.c.b16 %v2008, %v2002
          %v2153 = vpack.c.b16 %v2009, %v2003
          %v2154 = vpack.c.b16 %v2010, %v2004
          %v2155 = vpack.c.b16 %v2011, %v2005
          %v2156 = vpack.c.b16 %v2012, %v2006
          %v2157 = vpack.c.b16 %v2019, %v2013
          %v2158 = vpack.c.b16 %v2020, %v2014
          %v2159 = vpack.c.b16 %v2021, %v2015
          %v2160 = vpack.c.b16 %v2022, %v2016
          %v2161 = vpack.c.b16 %v2023, %v2017
          %v2162 = vpack.c.b16 %v2024, %v2018
          %v2163 = vpack.c.b16 %v2031, %v2025
          %v2164 = vpack.c.b16 %v2032, %v2026
          %v2165 = vpack.c.b16 %v2033, %v2027
          %v2166 = vpack.c.b16 %v2034, %v2028
          %v2167 = vpack.c.b16 %v2035, %v2029
          %v2168 = vpack.c.b16 %v2036, %v2030
          %v2169 = vpack.c.b16 %v2043, %v2037
          %v2170 = vpack.c.b16 %v2044, %v2038
          %v2171 = vpack.c.b16 %v2045, %v2039
          %v2172 = vpack.c.b16 %v2046, %v2040
          %v2173 = vpack.c.b16 %v2047, %v2041
          %v2174 = vpack.c.b16 %v2048, %v2042
          %v2175 = vpack.c.b16 %v2055, %v2049
          %v2176 = vpack.c.b16 %v2056, %v2050
          %v2177 = vpack.c.b16 %v2057, %v2051
          %v2178 = vpack.c.b16 %v2058, %v2052
          %v2179 = vpack.c.b16 %v2059, %v2053
          %v2180 = vpack.c.b16 %v2060, %v2054
          %v2181 = vpack.c.b16 %v2067, %v2061
          %v2182 = vpack.c.b16 %v2068, %v2062
          %v2183 = vpack.c.b16 %v2069, %v2063
          %v2184 = vpack.c.b16 %v2070, %v2064
          %v2185 = vpack.c.b16 %v2071, %v2065
          %v2186 = vpack.c.b16 %v2072, %v2066
          %v2187 = vpack.c.b16 %v2079, %v2073
          %v2188 = vpack.c.b16 %v2080, %v2074
          %v2189 = vpack.c.b16 %v2081, %v2075
          %v2190 = vpack.c.b16 %v2082, %v2076
          %v2191 = vpack.c.b16 %v2083, %v2077
          %v2192 = vpack.c.b16 %v2084, %v2078
          %v2193 = vpack.c.b16 %v2091, %v2085
          %v2194 = vpack.c.b16 %v2092, %v2086
          %v2195 = vpack.c.b16 %v2093, %v2087
          %v2196 = vpack.c.b16 %v2094, %v2088
          %v2197 = vpack.c.b16 %v2095, %v2089
          %v2198 = vpack.c.b16 %v2096, %v2090
          %v2199 = vpack.c.b16 %v2103, %v2097
          %v2200 = vpack.c.b16 %v2104, %v2098
          %v2201 = vpack.c.b16 %v2105, %v2099
          %v2202 = vpack.c.b16 %v2106, %v2100
          %v2203 = vpack.c.b16 %v2107, %v2101
          %v2204 = vpack.c.b16 %v2108, %v2102
          %2301 = vmatprep.subr.bf16.mxu0 %v2110
          %2302 = vmatpush1.bf16.msra.mxu0 %v2109
          %2303 = vmatprep.subr.bf16.mxu0 %v2116
          %2304 = vmatpush1.bf16.msra.mxu0 %v2115
          %2305 = vmatprep.subr.bf16.mxu0 %v2122
          %2306 = vmatpush1.bf16.msra.mxu0 %v2121
          %2307 = vmatprep.subr.bf16.mxu0 %v2128
          %2308 = vmatpush1.bf16.msra.mxu0 %v2127
          %2309 = vmatprep.subr.bf16.mxu0 %v2134
          %2310 = vmatpush1.bf16.msra.mxu0 %v2133
          %2311 = vmatprep.subr.bf16.mxu0 %v2140
          %2312 = vmatpush1.bf16.msra.mxu0 %v2139
          %2313 = vmatprep.subr.bf16.mxu0 %v2146
          %2314 = vmatpush1.bf16.msra.mxu0 %v2145
          %2315 = vmatprep.subr.bf16.mxu0 %v2152
          %2316 = vmatpush1.bf16.msra.mxu0 %v2151
          %2317 = vmatprep.subr.bf16.mxu0 %v2158
          %2318 = vmatpush1.bf16.msra.mxu0 %v2157
          %2319 = vmatprep.subr.bf16.mxu0 %v2164
          %2320 = vmatpush1.bf16.msra.mxu0 %v2163
          %2321 = vmatprep.subr.bf16.mxu0 %v2170
          %2322 = vmatpush1.bf16.msra.mxu0 %v2169
          %2323 = vmatprep.subr.bf16.mxu0 %v2176
          %2324 = vmatpush1.bf16.msra.mxu0 %v2175
          %2325 = vmatprep.subr.bf16.mxu0 %v2182
          %2326 = vmatpush1.bf16.msra.mxu0 %v2181
          %2327 = vmatprep.subr.bf16.mxu0 %v2188
          %2328 = vmatpush1.bf16.msra.mxu0 %v2187
          %2329 = vmatprep.subr.bf16.mxu0 %v2194
          %2330 = vmatpush1.bf16.msra.mxu0 %v2193
          %2331 = vmatprep.subr.bf16.mxu0 %v2200
          %2332 = vmatpush1.bf16.msra.mxu0 %v2199
          %2333 = vmatprep.mubr.bf16.mxu0 %v1722
          %2334 = vmatmul.mubr.bf16.gmra.mrb[0].mxu0 %v1721
          %v2335 = vpop.f32.mrb[0].mxu0
          %v2336 = vadd.f32 0.0, %v2335
          %v2337 = vpop.f32.mrb[0].mxu0
          %v2338 = vadd.f32 0.0, %v2337
          %v2339 = vpop.f32.mrb[0].mxu0
          %v2340 = vadd.f32 0.0, %v2339
          %v2341 = vpop.f32.mrb[0].mxu0
          %v2342 = vadd.f32 0.0, %v2341
          %2343 = vmatprep.mubr.bf16.mxu0 %v1724
          %2344 = vmatmul.mubr.bf16.gmra.mrb[0].mxu0 %v1723
          %v2345 = vpop.f32.mrb[0].mxu0
          %v2346 = vadd.f32 0.0, %v2345
          %v2347 = vpop.f32.mrb[0].mxu0
          %v2348 = vadd.f32 0.0, %v2347
          %v2349 = vpop.f32.mrb[0].mxu0
          %v2350 = vadd.f32 0.0, %v2349
          %v2351 = vpop.f32.mrb[0].mxu0
          %v2352 = vadd.f32 0.0, %v2351
          %2353 = vdwg.mxu0
          %2354 = vmatprep.subr.bf16.mxu0 %v2112
          %2355 = vmatpush1.bf16.msra.mxu0 %v2111
          %2356 = vmatprep.subr.bf16.mxu0 %v2118
          %2357 = vmatpush1.bf16.msra.mxu0 %v2117
          %2358 = vmatprep.subr.bf16.mxu0 %v2124
          %2359 = vmatpush1.bf16.msra.mxu0 %v2123
          %2360 = vmatprep.subr.bf16.mxu0 %v2130
          %2361 = vmatpush1.bf16.msra.mxu0 %v2129
          %2362 = vmatprep.subr.bf16.mxu0 %v2136
          %2363 = vmatpush1.bf16.msra.mxu0 %v2135
          %2364 = vmatprep.subr.bf16.mxu0 %v2142
          %2365 = vmatpush1.bf16.msra.mxu0 %v2141
          %2366 = vmatprep.subr.bf16.mxu0 %v2148
          %2367 = vmatpush1.bf16.msra.mxu0 %v2147
          %2368 = vmatprep.subr.bf16.mxu0 %v2154
          %2369 = vmatpush1.bf16.msra.mxu0 %v2153
          %2370 = vmatprep.subr.bf16.mxu0 %v2160
          %2371 = vmatpush1.bf16.msra.mxu0 %v2159
          %2372 = vmatprep.subr.bf16.mxu0 %v2166
          %2373 = vmatpush1.bf16.msra.mxu0 %v2165
          %2374 = vmatprep.subr.bf16.mxu0 %v2172
          %2375 = vmatpush1.bf16.msra.mxu0 %v2171
          %2376 = vmatprep.subr.bf16.mxu0 %v2178
          %2377 = vmatpush1.bf16.msra.mxu0 %v2177
          %2378 = vmatprep.subr.bf16.mxu0 %v2184
          %2379 = vmatpush1.bf16.msra.mxu0 %v2183
          %2380 = vmatprep.subr.bf16.mxu0 %v2190
          %2381 = vmatpush1.bf16.msra.mxu0 %v2189
          %2382 = vmatprep.subr.bf16.mxu0 %v2196
          %2383 = vmatpush1.bf16.msra.mxu0 %v2195
          %2384 = vmatprep.subr.bf16.mxu0 %v2202
          %2385 = vmatpush1.bf16.msra.mxu0 %v2201
          %2386 = vmatprep.mubr.bf16.mxu0 %v1722
          %2387 = vmatmul.mubr.bf16.gmra.mrb[0].mxu0 %v1721
          %v2388 = vpop.f32.mrb[0].mxu0
          %v2389 = vadd.f32 0.0, %v2388
          %v2390 = vpop.f32.mrb[0].mxu0
          %v2391 = vadd.f32 0.0, %v2390
          %v2392 = vpop.f32.mrb[0].mxu0
          %v2393 = vadd.f32 0.0, %v2392
          %v2394 = vpop.f32.mrb[0].mxu0
          %v2395 = vadd.f32 0.0, %v2394
          %2396 = vmatprep.mubr.bf16.mxu0 %v1724
          %2397 = vmatmul.mubr.bf16.gmra.mrb[0].mxu0 %v1723
          %v2398 = vpop.f32.mrb[0].mxu0
          %v2399 = vadd.f32 0.0, %v2398
          %v2400 = vpop.f32.mrb[0].mxu0
          %v2401 = vadd.f32 0.0, %v2400
          %v2402 = vpop.f32.mrb[0].mxu0
          %v2403 = vadd.f32 0.0, %v2402
          %v2404 = vpop.f32.mrb[0].mxu0
          %v2405 = vadd.f32 0.0, %v2404
          %2406 = vdwg.mxu0
          %2407 = vmatprep.subr.bf16.mxu0 %v2114
          %2408 = vmatpush1.bf16.msra.mxu0 %v2113
          %2409 = vmatprep.subr.bf16.mxu0 %v2120
          %2410 = vmatpush1.bf16.msra.mxu0 %v2119
          %2411 = vmatprep.subr.bf16.mxu0 %v2126
          %2412 = vmatpush1.bf16.msra.mxu0 %v2125
          %2413 = vmatprep.subr.bf16.mxu0 %v2132
          %2414 = vmatpush1.bf16.msra.mxu0 %v2131
          %2415 = vmatprep.subr.bf16.mxu0 %v2138
          %2416 = vmatpush1.bf16.msra.mxu0 %v2137
          %2417 = vmatprep.subr.bf16.mxu0 %v2144
          %2418 = vmatpush1.bf16.msra.mxu0 %v2143
          %2419 = vmatprep.subr.bf16.mxu0 %v2150
          %2420 = vmatpush1.bf16.msra.mxu0 %v2149
          %2421 = vmatprep.subr.bf16.mxu0 %v2156
          %2422 = vmatpush1.bf16.msra.mxu0 %v2155
          %2423 = vmatprep.subr.bf16.mxu0 %v2162
          %2424 = vmatpush1.bf16.msra.mxu0 %v2161
          %2425 = vmatprep.subr.bf16.mxu0 %v2168
          %2426 = vmatpush1.bf16.msra.mxu0 %v2167
          %2427 = vmatprep.subr.bf16.mxu0 %v2174
          %2428 = vmatpush1.bf16.msra.mxu0 %v2173
          %2429 = vmatprep.subr.bf16.mxu0 %v2180
          %2430 = vmatpush1.bf16.msra.mxu0 %v2179
          %2431 = vmatprep.subr.bf16.mxu0 %v2186
          %2432 = vmatpush1.bf16.msra.mxu0 %v2185
          %2433 = vmatprep.subr.bf16.mxu0 %v2192
          %2434 = vmatpush1.bf16.msra.mxu0 %v2191
          %2435 = vmatprep.subr.bf16.mxu0 %v2198
          %2436 = vmatpush1.bf16.msra.mxu0 %v2197
          %2437 = vmatprep.subr.bf16.mxu0 %v2204
          %2438 = vmatpush1.bf16.msra.mxu0 %v2203
          %2439 = vmatprep.mubr.bf16.mxu0 %v1722
          %2440 = vmatmul.mubr.bf16.gmra.mrb[0].mxu0 %v1721
          %v2441 = vpop.f32.mrb[0].mxu0
          %v2442 = vadd.f32 0.0, %v2441
          %v2443 = vpop.f32.mrb[0].mxu0
          %v2444 = vadd.f32 0.0, %v2443
          %v2445 = vpop.f32.mrb[0].mxu0
          %v2446 = vadd.f32 0.0, %v2445
          %v2447 = vpop.f32.mrb[0].mxu0
          %v2448 = vadd.f32 0.0, %v2447
          %2449 = vmatprep.mubr.bf16.mxu0 %v1724
          %2450 = vmatmul.mubr.bf16.gmra.mrb[0].mxu0 %v1723
          %v2451 = vpop.f32.mrb[0].mxu0
          %v2452 = vadd.f32 0.0, %v2451
          %v2453 = vpop.f32.mrb[0].mxu0
          %v2454 = vadd.f32 0.0, %v2453
          %v2455 = vpop.f32.mrb[0].mxu0
          %v2456 = vadd.f32 0.0, %v2455
          %v2457 = vpop.f32.mrb[0].mxu0
          %v2458 = vadd.f32 0.0, %v2457
          %2459 = vdwg.mxu0
          %s2460 = smul.u32 %s1706, 6
          %s2461 = smul.addr %s2460, 8
          %s2462 = scalar_lea.vmem [#allocation2], %s2461
          %v2463 = vld [vmem:[%s2462] sm:$0xff]
          %v2464 = vld [vmem:[%s2462 + $0x8] sm:$0xff]
          %v2465 = vld [vmem:[%s2462 + $0x10] sm:$0xff]
          %v2466 = vld [vmem:[%s2462 + $0x18] sm:$0xff]
          %v2467 = vld [vmem:[%s2462 + $0x20] sm:$0xff]
          %v2468 = vld [vmem:[%s2462 + $0x28] sm:$0xff]
          %v2469 = vunpack.c.l.bf16 %v2463
          %v2470 = vunpack.c.l.bf16 %v2464
          %v2471 = vunpack.c.h.bf16 %v2463
          %v2472 = vunpack.c.h.bf16 %v2464
          %v2473 = vunpack.c.l.bf16 %v2466
          %v2474 = vunpack.c.l.bf16 %v2467
          %v2475 = vunpack.c.h.bf16 %v2466
          %v2476 = vunpack.c.h.bf16 %v2467
          %v2477 = vadd.f32 %v2469, %v2336
          %v2478 = vadd.f32 %v2470, %v2338
          %v2479 = vadd.f32 %v2471, %v2340
          %v2480 = vadd.f32 %v2472, %v2342
          %v2481 = vadd.f32 %v2473, %v2346
          %v2482 = vadd.f32 %v2474, %v2348
          %v2483 = vadd.f32 %v2475, %v2350
          %v2484 = vadd.f32 %v2476, %v2352
          %v2485 = vxor.u32 %v2477, 2147483648
          %v2486 = vxor.u32 %v2478, 2147483648
          %v2487 = vxor.u32 %v2479, 2147483648
          %v2488 = vxor.u32 %v2480, 2147483648
          %v2489 = vxor.u32 %v2481, 2147483648
          %v2490 = vxor.u32 %v2482, 2147483648
          %v2491 = vxor.u32 %v2483, 2147483648
          %v2492 = vxor.u32 %v2484, 2147483648
          %v2493 = vmul.f32 %v2485, 1.442695
          %v2494 = vpow.pop %v2493
          %v2495 = vmul.f32 %v2486, 1.442695
          %v2496 = vpow.pop %v2495
          %v2497 = vmul.f32 %v2487, 1.442695
          %v2498 = vpow.pop %v2497
          %v2499 = vmul.f32 %v2488, 1.442695
          %v2500 = vpow.pop %v2499
          %v2501 = vmul.f32 %v2489, 1.442695
          %v2502 = vpow.pop %v2501
          %v2503 = vmul.f32 %v2490, 1.442695
          %v2504 = vpow.pop %v2503
          %v2505 = vmul.f32 %v2491, 1.442695
          %v2506 = vpow.pop %v2505
          %v2507 = vmul.f32 %v2492, 1.442695
          %v2508 = vpow.pop %v2507
          %v2509 = vadd.f32 %v2494, 1.0
          %v2510 = vadd.f32 %v2496, 1.0
          %v2511 = vadd.f32 %v2498, 1.0
          %v2512 = vadd.f32 %v2500, 1.0
          %v2513 = vadd.f32 %v2502, 1.0
          %v2514 = vadd.f32 %v2504, 1.0
          %v2515 = vadd.f32 %v2506, 1.0
          %v2516 = vadd.f32 %v2508, 1.0
          %v2517 = vrcp.pop %v2509
          %v2518 = vmul.f32 1.0, %v2517
          %v2519 = vrcp.pop %v2510
          %v2520 = vmul.f32 1.0, %v2519
          %v2521 = vrcp.pop %v2511
          %v2522 = vmul.f32 1.0, %v2521
          %v2523 = vrcp.pop %v2512
          %v2524 = vmul.f32 1.0, %v2523
          %v2525 = vrcp.pop %v2513
          %v2526 = vmul.f32 1.0, %v2525
          %v2527 = vrcp.pop %v2514
          %v2528 = vmul.f32 1.0, %v2527
          %v2529 = vrcp.pop %v2515
          %v2530 = vmul.f32 1.0, %v2529
          %v2531 = vrcp.pop %v2516
          %v2532 = vmul.f32 1.0, %v2531
          %v2533 = vunpack.c.l.bf16 %v2465
          %v2534 = vunpack.c.h.bf16 %v2465
          %v2535 = vunpack.c.l.bf16 %v2468
          %v2536 = vunpack.c.h.bf16 %v2468
          %v2537 = vlaneseq
          %v2538 = vshrl.u32 %v2537, 7
          %v2539 = vsub.s32 0, %v2538
          %v2540 = vrot.slane %v1703, %v2539
          %v2541 = vadd.f32 %v2389, %v2540
          %v2542 = vadd.f32 %v2393, %v2540
          %v2543 = vadd.f32 %v2399, %v2540
          %v2544 = vadd.f32 %v2403, %v2540
          %v2545 = vmul.f32 %v2518, %v2541
          %v2546 = vmul.f32 %v2522, %v2542
          %v2547 = vmul.f32 %v2526, %v2543
          %v2548 = vmul.f32 %v2530, %v2544
          %v2549 = vadd.f32 %v2533, %v2545
          %v2550 = vadd.f32 %v2534, %v2546
          %v2551 = vadd.f32 %v2535, %v2547
          %v2552 = vadd.f32 %v2536, %v2548
          %v2553 = vtanh.pop %v2549
          %v2554 = vtanh.pop %v2550
          %v2555 = vtanh.pop %v2551
          %v2556 = vtanh.pop %v2552
          %v2557 = vsub.f32 1.0, %v2520
          %v2558 = vsub.f32 1.0, %v2524
          %v2559 = vsub.f32 1.0, %v2528
          %v2560 = vsub.f32 1.0, %v2532
          %v2561 = vmul.f32 %v2557, %v2553
          %v2562 = vmul.f32 %v2558, %v2554
          %v2563 = vmul.f32 %v2559, %v2555
          %v2564 = vmul.f32 %v2560, %v2556
          %v2565 = vmul.f32 %v2520, %v1711
          %v2566 = vmul.f32 %v2524, %v1712
          %v2567 = vmul.f32 %v2528, %v1713
          %v2568 = vmul.f32 %v2532, %v1714
          %v2569 = vadd.f32 %v2561, %v2565
          %v2570 = vadd.f32 %v2562, %v2566
          %v2571 = vadd.f32 %v2563, %v2567
          %v2572 = vadd.f32 %v2564, %v2568
          %s2573 = smul.u32 %s1720, 6
          %s2574 = smul.addr %s2573, 8
          %s2575 = scalar_lea.vmem [#allocation3], %s2574
          %v2576 = vld [vmem:[%s2575] sm:$0xff]
          %v2577 = vld [vmem:[%s2575 + $0x8] sm:$0xff]
          %v2578 = vld [vmem:[%s2575 + $0x10] sm:$0xff]
          %v2579 = vld [vmem:[%s2575 + $0x18] sm:$0xff]
          %v2580 = vld [vmem:[%s2575 + $0x20] sm:$0xff]
          %v2581 = vld [vmem:[%s2575 + $0x28] sm:$0xff]
          %v2582 = vunpack.c.l.bf16 %v2576
          %v2583 = vunpack.c.l.bf16 %v2577
          %v2584 = vunpack.c.h.bf16 %v2576
          %v2585 = vunpack.c.h.bf16 %v2577
          %v2586 = vunpack.c.l.bf16 %v2579
          %v2587 = vunpack.c.l.bf16 %v2580
          %v2588 = vunpack.c.h.bf16 %v2579
          %v2589 = vunpack.c.h.bf16 %v2580
          %v2590 = vadd.f32 %v2582, %v2391
          %v2591 = vadd.f32 %v2583, %v2442
          %v2592 = vadd.f32 %v2584, %v2395
          %v2593 = vadd.f32 %v2585, %v2446
          %v2594 = vadd.f32 %v2586, %v2401
          %v2595 = vadd.f32 %v2587, %v2452
          %v2596 = vadd.f32 %v2588, %v2405
          %v2597 = vadd.f32 %v2589, %v2456
          %v2598 = vxor.u32 %v2590, 2147483648
          %v2599 = vxor.u32 %v2591, 2147483648
          %v2600 = vxor.u32 %v2592, 2147483648
          %v2601 = vxor.u32 %v2593, 2147483648
          %v2602 = vxor.u32 %v2594, 2147483648
          %v2603 = vxor.u32 %v2595, 2147483648
          %v2604 = vxor.u32 %v2596, 2147483648
          %v2605 = vxor.u32 %v2597, 2147483648
          %v2606 = vmul.f32 %v2598, 1.442695
          %v2607 = vpow.pop %v2606
          %v2608 = vmul.f32 %v2599, 1.442695
          %v2609 = vpow.pop %v2608
          %v2610 = vmul.f32 %v2600, 1.442695
          %v2611 = vpow.pop %v2610
          %v2612 = vmul.f32 %v2601, 1.442695
          %v2613 = vpow.pop %v2612
          %v2614 = vmul.f32 %v2602, 1.442695
          %v2615 = vpow.pop %v2614
          %v2616 = vmul.f32 %v2603, 1.442695
          %v2617 = vpow.pop %v2616
          %v2618 = vmul.f32 %v2604, 1.442695
          %v2619 = vpow.pop %v2618
          %v2620 = vmul.f32 %v2605, 1.442695
          %v2621 = vpow.pop %v2620
          %v2622 = vadd.f32 %v2607, 1.0
          %v2623 = vadd.f32 %v2609, 1.0
          %v2624 = vadd.f32 %v2611, 1.0
          %v2625 = vadd.f32 %v2613, 1.0
          %v2626 = vadd.f32 %v2615, 1.0
          %v2627 = vadd.f32 %v2617, 1.0
          %v2628 = vadd.f32 %v2619, 1.0
          %v2629 = vadd.f32 %v2621, 1.0
          %v2630 = vrcp.pop %v2622
          %v2631 = vmul.f32 1.0, %v2630
          %v2632 = vrcp.pop %v2623
          %v2633 = vmul.f32 1.0, %v2632
          %v2634 = vrcp.pop %v2624
          %v2635 = vmul.f32 1.0, %v2634
          %v2636 = vrcp.pop %v2625
          %v2637 = vmul.f32 1.0, %v2636
          %v2638 = vrcp.pop %v2626
          %v2639 = vmul.f32 1.0, %v2638
          %v2640 = vrcp.pop %v2627
          %v2641 = vmul.f32 1.0, %v2640
          %v2642 = vrcp.pop %v2628
          %v2643 = vmul.f32 1.0, %v2642
          %v2644 = vrcp.pop %v2629
          %v2645 = vmul.f32 1.0, %v2644
          %v2646 = vunpack.c.l.bf16 %v2578
          %v2647 = vunpack.c.h.bf16 %v2578
          %v2648 = vunpack.c.l.bf16 %v2581
          %v2649 = vunpack.c.h.bf16 %v2581
          %v2650 = vlaneseq
          %v2651 = vshrl.u32 %v2650, 7
          %v2652 = vsub.s32 0, %v2651
          %v2653 = vrot.slane %v1704, %v2652
          %v2654 = vadd.f32 %v2444, %v2653
          %v2655 = vadd.f32 %v2448, %v2653
          %v2656 = vadd.f32 %v2454, %v2653
          %v2657 = vadd.f32 %v2458, %v2653
          %v2658 = vmul.f32 %v2631, %v2654
          %v2659 = vmul.f32 %v2635, %v2655
          %v2660 = vmul.f32 %v2639, %v2656
          %v2661 = vmul.f32 %v2643, %v2657
          %v2662 = vadd.f32 %v2646, %v2658
          %v2663 = vadd.f32 %v2647, %v2659
          %v2664 = vadd.f32 %v2648, %v2660
          %v2665 = vadd.f32 %v2649, %v2661
          %v2666 = vtanh.pop %v2662
          %v2667 = vtanh.pop %v2663
          %v2668 = vtanh.pop %v2664
          %v2669 = vtanh.pop %v2665
          %v2670 = vsub.f32 1.0, %v2633
          %v2671 = vsub.f32 1.0, %v2637
          %v2672 = vsub.f32 1.0, %v2641
          %v2673 = vsub.f32 1.0, %v2645
          %v2674 = vmul.f32 %v2670, %v2666
          %v2675 = vmul.f32 %v2671, %v2667
          %v2676 = vmul.f32 %v2672, %v2668
          %v2677 = vmul.f32 %v2673, %v2669
          %v2678 = vmul.f32 %v2633, %v1715
          %v2679 = vmul.f32 %v2637, %v1716
          %v2680 = vmul.f32 %v2641, %v1717
          %v2681 = vmul.f32 %v2645, %v1718
          %v2682 = vadd.f32 %v2674, %v2678
          %v2683 = vadd.f32 %v2675, %v2679
          %v2684 = vadd.f32 %v2676, %v2680
          %v2685 = vadd.f32 %v2677, %v2681
          %s2686 = smul.u32 %s1706, 32
          %s2687 = scalar_lea.vmem %s377, %s2686 [#allocation13]
          %2688 = vst [vmem:[%s2687] sm:$0xff] %v2569
          %2689 = vst [vmem:[%s2687 + $0x8] sm:$0xff] %v2570
          %2690 = vst [vmem:[%s2687 + $0x10] sm:$0xff] %v2571
          %2691 = vst [vmem:[%s2687 + $0x18] sm:$0xff] %v2572
          %s2692 = smul.u32 %s1720, 32
          %s2693 = scalar_lea.vmem [#allocation4], %s2692
          %2694 = vst [vmem:[%s2693] sm:$0xff] %v2682
          %2695 = vst [vmem:[%s2693 + $0x8] sm:$0xff] %v2683
          %2696 = vst [vmem:[%s2693 + $0x10] sm:$0xff] %v2684
          %2697 = vst [vmem:[%s2693 + $0x18] sm:$0xff] %v2685
          %v2698 = vstv %s1720
          %vm2699 = vcmp.lt.s32.totalorder %v2698, %v396
          %vm2700 = vcmp.lt.s32.totalorder %v2698, %v397
          %vm2701 = vcmp.lt.s32.totalorder %v2698, %v398
          %vm2702 = vcmp.lt.s32.totalorder %v2698, %v399
          %v2703 = vsel %vm2699, 1, 0
          %v2704 = vsel %vm2700, 1, 0
          %v2705 = vsel %vm2701, 1, 0
          %v2706 = vsel %vm2702, 1, 0
          %2707 = vset.pattern.permute.xlu0 0
          %2708 = vperm.xlu0 %2707, %v2703
          %v2709 = vpop.permute.xlu0 %2708
          %2710 = vset.pattern.permute.xlu0 0
          %2711 = vperm.xlu0 %2710, %v2704
          %v2712 = vpop.permute.xlu0 %2711
          %2713 = vset.pattern.permute.xlu0 0
          %2714 = vperm.xlu0 %2713, %v2705
          %v2715 = vpop.permute.xlu0 %2714
          %2716 = vset.pattern.permute.xlu0 0
          %2717 = vperm.xlu0 %2716, %v2706
          %v2718 = vpop.permute.xlu0 %2717
          %vm2719 = vcmp.eq.s32.totalorder %v2709, 1
          %vm2720 = vcmp.eq.s32.totalorder %v2712, 1
          %vm2721 = vcmp.eq.s32.totalorder %v2715, 1
          %vm2722 = vcmp.eq.s32.totalorder %v2718, 1
          %v2723 = vsel %vm2719, %v2682, %v1715
          %v2724 = vsel %vm2720, %v2683, %v1716
          %v2725 = vsel %vm2721, %v2684, %v1717
          %v2726 = vsel %vm2722, %v2685, %v1718
        $region61: #{tpu_custom_call.1} parent=43 // loop_footer
          %s1708 = sadd.s32 %s1706, 1
        $region62: #{tpu_custom_call.1} parent=43 // loop_footer_branch
          %1705 = sbr.rel target = $region58
        $region63: #{tpu_custom_call.1} parent=43 // loop_exit
          _
        %vm2727 = vcmp.gt.s32.totalorder %v396, 0
        %vm2728 = vcmp.gt.s32.totalorder %v397, 0
        %vm2729 = vcmp.gt.s32.totalorder %v398, 0
        %vm2730 = vcmp.gt.s32.totalorder %v399, 0
        %vm2731 = vcmp.gt.s32.totalorder %v396, 1
        %vm2732 = vcmp.gt.s32.totalorder %v397, 1
        %vm2733 = vcmp.gt.s32.totalorder %v398, 1
        %vm2734 = vcmp.gt.s32.totalorder %v399, 1
        %vm2735 = vcmp.gt.s32.totalorder %v396, 2
        %vm2736 = vcmp.gt.s32.totalorder %v397, 2
        %vm2737 = vcmp.gt.s32.totalorder %v398, 2
        %vm2738 = vcmp.gt.s32.totalorder %v399, 2
        %vm2739 = vcmp.gt.s32.totalorder %v396, 3
        %vm2740 = vcmp.gt.s32.totalorder %v397, 3
        %vm2741 = vcmp.gt.s32.totalorder %v398, 3
        %vm2742 = vcmp.gt.s32.totalorder %v399, 3
        %vm2743 = vcmp.gt.s32.totalorder %v396, 4
        %vm2744 = vcmp.gt.s32.totalorder %v397, 4
        %vm2745 = vcmp.gt.s32.totalorder %v398, 4
        %vm2746 = vcmp.gt.s32.totalorder %v399, 4
        %vm2747 = vcmp.gt.s32.totalorder %v396, 5
        %vm2748 = vcmp.gt.s32.totalorder %v397, 5
        %vm2749 = vcmp.gt.s32.totalorder %v398, 5
        %vm2750 = vcmp.gt.s32.totalorder %v399, 5
        %vm2751 = vcmp.gt.s32.totalorder %v396, 6
        %vm2752 = vcmp.gt.s32.totalorder %v397, 6
        %vm2753 = vcmp.gt.s32.totalorder %v398, 6
        %vm2754 = vcmp.gt.s32.totalorder %v399, 6
        %vm2755 = vcmp.gt.s32.totalorder %v396, 7
        %vm2756 = vcmp.gt.s32.totalorder %v397, 7
        %vm2757 = vcmp.gt.s32.totalorder %v398, 7
        %vm2758 = vcmp.gt.s32.totalorder %v399, 7
        %v2759 = vld [vmem:[%s377] sm:$0xff]
        %v2760 = vld [vmem:[%s377 + $0x8] sm:$0xff]
        %v2761 = vld [vmem:[%s377 + $0x10] sm:$0xff]
        %v2762 = vld [vmem:[%s377 + $0x18] sm:$0xff]
        %v2763 = vld [vmem:[%s377 + $0x20] sm:$0xff]
        %v2764 = vld [vmem:[%s377 + $0x28] sm:$0xff]
        %v2765 = vld [vmem:[%s377 + $0x30] sm:$0xff]
        %v2766 = vld [vmem:[%s377 + $0x38] sm:$0xff]
        %v2767 = vld [vmem:[%s377 + $0x40] sm:$0xff]
        %v2768 = vld [vmem:[%s377 + $0x48] sm:$0xff]
        %v2769 = vld [vmem:[%s377 + $0x50] sm:$0xff]
        %v2770 = vld [vmem:[%s377 + $0x58] sm:$0xff]
        %v2771 = vld [vmem:[%s377 + $0x60] sm:$0xff]
        %v2772 = vld [vmem:[%s377 + $0x68] sm:$0xff]
        %v2773 = vld [vmem:[%s377 + $0x70] sm:$0xff]
        %v2774 = vld [vmem:[%s377 + $0x78] sm:$0xff]
        %v2775 = vld [vmem:[%s377 + $0x80] sm:$0xff]
        %v2776 = vld [vmem:[%s377 + $0x88] sm:$0xff]
        %v2777 = vld [vmem:[%s377 + $0x90] sm:$0xff]
        %v2778 = vld [vmem:[%s377 + $0x98] sm:$0xff]
        %v2779 = vld [vmem:[%s377 + $0xa0] sm:$0xff]
        %v2780 = vld [vmem:[%s377 + $0xa8] sm:$0xff]
        %v2781 = vld [vmem:[%s377 + $0xb0] sm:$0xff]
        %v2782 = vld [vmem:[%s377 + $0xb8] sm:$0xff]
        %v2783 = vld [vmem:[%s377 + $0xc0] sm:$0xff]
        %v2784 = vld [vmem:[%s377 + $0xc8] sm:$0xff]
        %v2785 = vld [vmem:[%s377 + $0xd0] sm:$0xff]
        %v2786 = vld [vmem:[%s377 + $0xd8] sm:$0xff]
        %v2787 = vld [vmem:[%s377 + $0xe0] sm:$0xff]
        %v2788 = vld [vmem:[%s377 + $0xe8] sm:$0xff]
        %v2789 = vld [vmem:[%s377 + $0xf0] sm:$0xff]
        %v2790 = vld [vmem:[%s377 + $0xf8] sm:$0xff]
        %v2791 = vld [vmem:[#allocation4] sm:$0xff]
        %v2792 = vld [vmem:[#allocation4 + $0x8] sm:$0xff]
        %v2793 = vld [vmem:[#allocation4 + $0x10] sm:$0xff]
        %v2794 = vld [vmem:[#allocation4 + $0x18] sm:$0xff]
        %v2795 = vld [vmem:[#allocation4 + $0x20] sm:$0xff]
        %v2796 = vld [vmem:[#allocation4 + $0x28] sm:$0xff]
        %v2797 = vld [vmem:[#allocation4 + $0x30] sm:$0xff]
        %v2798 = vld [vmem:[#allocation4 + $0x38] sm:$0xff]
        %v2799 = vld [vmem:[#allocation4 + $0x40] sm:$0xff]
        %v2800 = vld [vmem:[#allocation4 + $0x48] sm:$0xff]
        %v2801 = vld [vmem:[#allocation4 + $0x50] sm:$0xff]
        %v2802 = vld [vmem:[#allocation4 + $0x58] sm:$0xff]
        %v2803 = vld [vmem:[#allocation4 + $0x60] sm:$0xff]
        %v2804 = vld [vmem:[#allocation4 + $0x68] sm:$0xff]
        %v2805 = vld [vmem:[#allocation4 + $0x70] sm:$0xff]
        %v2806 = vld [vmem:[#allocation4 + $0x78] sm:$0xff]
        %v2807 = vld [vmem:[#allocation4 + $0x80] sm:$0xff]
        %v2808 = vld [vmem:[#allocation4 + $0x88] sm:$0xff]
        %v2809 = vld [vmem:[#allocation4 + $0x90] sm:$0xff]
        %v2810 = vld [vmem:[#allocation4 + $0x98] sm:$0xff]
        %v2811 = vld [vmem:[#allocation4 + $0xa0] sm:$0xff]
        %v2812 = vld [vmem:[#allocation4 + $0xa8] sm:$0xff]
        %v2813 = vld [vmem:[#allocation4 + $0xb0] sm:$0xff]
        %v2814 = vld [vmem:[#allocation4 + $0xb8] sm:$0xff]
        %v2815 = vld [vmem:[#allocation4 + $0xc0] sm:$0xff]
        %v2816 = vld [vmem:[#allocation4 + $0xc8] sm:$0xff]
        %v2817 = vld [vmem:[#allocation4 + $0xd0] sm:$0xff]
        %v2818 = vld [vmem:[#allocation4 + $0xd8] sm:$0xff]
        %v2819 = vld [vmem:[#allocation4 + $0xe0] sm:$0xff]
        %v2820 = vld [vmem:[#allocation4 + $0xe8] sm:$0xff]
        %v2821 = vld [vmem:[#allocation4 + $0xf0] sm:$0xff]
        %v2822 = vld [vmem:[#allocation4 + $0xf8] sm:$0xff]
        %v2823 = vadd.f32 %v2759, %v2791
        %v2824 = vadd.f32 %v2760, %v2792
        %v2825 = vadd.f32 %v2761, %v2793
        %v2826 = vadd.f32 %v2762, %v2794
        %v2827 = vadd.f32 %v2763, %v2795
        %v2828 = vadd.f32 %v2764, %v2796
        %v2829 = vadd.f32 %v2765, %v2797
        %v2830 = vadd.f32 %v2766, %v2798
        %v2831 = vadd.f32 %v2767, %v2799
        %v2832 = vadd.f32 %v2768, %v2800
        %v2833 = vadd.f32 %v2769, %v2801
        %v2834 = vadd.f32 %v2770, %v2802
        %v2835 = vadd.f32 %v2771, %v2803
        %v2836 = vadd.f32 %v2772, %v2804
        %v2837 = vadd.f32 %v2773, %v2805
        %v2838 = vadd.f32 %v2774, %v2806
        %v2839 = vadd.f32 %v2775, %v2807
        %v2840 = vadd.f32 %v2776, %v2808
        %v2841 = vadd.f32 %v2777, %v2809
        %v2842 = vadd.f32 %v2778, %v2810
        %v2843 = vadd.f32 %v2779, %v2811
        %v2844 = vadd.f32 %v2780, %v2812
        %v2845 = vadd.f32 %v2781, %v2813
        %v2846 = vadd.f32 %v2782, %v2814
        %v2847 = vadd.f32 %v2783, %v2815
        %v2848 = vadd.f32 %v2784, %v2816
        %v2849 = vadd.f32 %v2785, %v2817
        %v2850 = vadd.f32 %v2786, %v2818
        %v2851 = vadd.f32 %v2787, %v2819
        %v2852 = vadd.f32 %v2788, %v2820
        %v2853 = vadd.f32 %v2789, %v2821
        %v2854 = vadd.f32 %v2790, %v2822
        %v2855 = vmul.f32 %v2823, 0.5
        %v2856 = vmul.f32 %v2824, 0.5
        %v2857 = vmul.f32 %v2825, 0.5
        %v2858 = vmul.f32 %v2826, 0.5
        %v2859 = vmul.f32 %v2827, 0.5
        %v2860 = vmul.f32 %v2828, 0.5
        %v2861 = vmul.f32 %v2829, 0.5
        %v2862 = vmul.f32 %v2830, 0.5
        %v2863 = vmul.f32 %v2831, 0.5
        %v2864 = vmul.f32 %v2832, 0.5
        %v2865 = vmul.f32 %v2833, 0.5
        %v2866 = vmul.f32 %v2834, 0.5
        %v2867 = vmul.f32 %v2835, 0.5
        %v2868 = vmul.f32 %v2836, 0.5
        %v2869 = vmul.f32 %v2837, 0.5
        %v2870 = vmul.f32 %v2838, 0.5
        %v2871 = vmul.f32 %v2839, 0.5
        %v2872 = vmul.f32 %v2840, 0.5
        %v2873 = vmul.f32 %v2841, 0.5
        %v2874 = vmul.f32 %v2842, 0.5
        %v2875 = vmul.f32 %v2843, 0.5
        %v2876 = vmul.f32 %v2844, 0.5
        %v2877 = vmul.f32 %v2845, 0.5
        %v2878 = vmul.f32 %v2846, 0.5
        %v2879 = vmul.f32 %v2847, 0.5
        %v2880 = vmul.f32 %v2848, 0.5
        %v2881 = vmul.f32 %v2849, 0.5
        %v2882 = vmul.f32 %v2850, 0.5
        %v2883 = vmul.f32 %v2851, 0.5
        %v2884 = vmul.f32 %v2852, 0.5
        %v2885 = vmul.f32 %v2853, 0.5
        %v2886 = vmul.f32 %v2854, 0.5
        %v2887 = vsel %vm2727, 1, 0
        %v2888 = vsel %vm2728, 1, 0
        %v2889 = vsel %vm2729, 1, 0
        %v2890 = vsel %vm2730, 1, 0
        %v2891 = vsel %vm2731, 1, 0
        %v2892 = vsel %vm2732, 1, 0
        %v2893 = vsel %vm2733, 1, 0
        %v2894 = vsel %vm2734, 1, 0
        %v2895 = vsel %vm2735, 1, 0
        %v2896 = vsel %vm2736, 1, 0
        %v2897 = vsel %vm2737, 1, 0
        %v2898 = vsel %vm2738, 1, 0
        %v2899 = vsel %vm2739, 1, 0
        %v2900 = vsel %vm2740, 1, 0
        %v2901 = vsel %vm2741, 1, 0
        %v2902 = vsel %vm2742, 1, 0
        %v2903 = vsel %vm2743, 1, 0
        %v2904 = vsel %vm2744, 1, 0
        %v2905 = vsel %vm2745, 1, 0
        %v2906 = vsel %vm2746, 1, 0
        %v2907 = vsel %vm2747, 1, 0
        %v2908 = vsel %vm2748, 1, 0
        %v2909 = vsel %vm2749, 1, 0
        %v2910 = vsel %vm2750, 1, 0
        %v2911 = vsel %vm2751, 1, 0
        %v2912 = vsel %vm2752, 1, 0
        %v2913 = vsel %vm2753, 1, 0
        %v2914 = vsel %vm2754, 1, 0
        %v2915 = vsel %vm2755, 1, 0
        %v2916 = vsel %vm2756, 1, 0
        %v2917 = vsel %vm2757, 1, 0
        %v2918 = vsel %vm2758, 1, 0
        %2919 = vset.pattern.permute.xlu0 0
        %2920 = vperm.xlu0 %2919, %v2887
        %v2921 = vpop.permute.xlu0 %2920
        %2922 = vset.pattern.permute.xlu0 0
        %2923 = vperm.xlu0 %2922, %v2888
        %v2924 = vpop.permute.xlu0 %2923
        %2925 = vset.pattern.permute.xlu0 0
        %2926 = vperm.xlu0 %2925, %v2889
        %v2927 = vpop.permute.xlu0 %2926
        %2928 = vset.pattern.permute.xlu0 0
        %2929 = vperm.xlu0 %2928, %v2890
        %v2930 = vpop.permute.xlu0 %2929
        %2931 = vset.pattern.permute.xlu0 0
        %2932 = vperm.xlu0 %2931, %v2891
        %v2933 = vpop.permute.xlu0 %2932
        %2934 = vset.pattern.permute.xlu0 0
        %2935 = vperm.xlu0 %2934, %v2892
        %v2936 = vpop.permute.xlu0 %2935
        %2937 = vset.pattern.permute.xlu0 0
        %2938 = vperm.xlu0 %2937, %v2893
        %v2939 = vpop.permute.xlu0 %2938
        %2940 = vset.pattern.permute.xlu0 0
        %2941 = vperm.xlu0 %2940, %v2894
        %v2942 = vpop.permute.xlu0 %2941
        %2943 = vset.pattern.permute.xlu0 0
        %2944 = vperm.xlu0 %2943, %v2895
        %v2945 = vpop.permute.xlu0 %2944
        %2946 = vset.pattern.permute.xlu0 0
        %2947 = vperm.xlu0 %2946, %v2896
        %v2948 = vpop.permute.xlu0 %2947
        %2949 = vset.pattern.permute.xlu0 0
        %2950 = vperm.xlu0 %2949, %v2897
        %v2951 = vpop.permute.xlu0 %2950
        %2952 = vset.pattern.permute.xlu0 0
        %2953 = vperm.xlu0 %2952, %v2898
        %v2954 = vpop.permute.xlu0 %2953
        %2955 = vset.pattern.permute.xlu0 0
        %2956 = vperm.xlu0 %2955, %v2899
        %v2957 = vpop.permute.xlu0 %2956
        %2958 = vset.pattern.permute.xlu0 0
        %2959 = vperm.xlu0 %2958, %v2900
        %v2960 = vpop.permute.xlu0 %2959
        %2961 = vset.pattern.permute.xlu0 0
        %2962 = vperm.xlu0 %2961, %v2901
        %v2963 = vpop.permute.xlu0 %2962
        %2964 = vset.pattern.permute.xlu0 0
        %2965 = vperm.xlu0 %2964, %v2902
        %v2966 = vpop.permute.xlu0 %2965
        %2967 = vset.pattern.permute.xlu0 0
        %2968 = vperm.xlu0 %2967, %v2903
        %v2969 = vpop.permute.xlu0 %2968
        %2970 = vset.pattern.permute.xlu0 0
        %2971 = vperm.xlu0 %2970, %v2904
        %v2972 = vpop.permute.xlu0 %2971
        %2973 = vset.pattern.permute.xlu0 0
        %2974 = vperm.xlu0 %2973, %v2905
        %v2975 = vpop.permute.xlu0 %2974
        %2976 = vset.pattern.permute.xlu0 0
        %2977 = vperm.xlu0 %2976, %v2906
        %v2978 = vpop.permute.xlu0 %2977
        %2979 = vset.pattern.permute.xlu0 0
        %2980 = vperm.xlu0 %2979, %v2907
        %v2981 = vpop.permute.xlu0 %2980
        %2982 = vset.pattern.permute.xlu0 0
        %2983 = vperm.xlu0 %2982, %v2908
        %v2984 = vpop.permute.xlu0 %2983
        %2985 = vset.pattern.permute.xlu0 0
        %2986 = vperm.xlu0 %2985, %v2909
        %v2987 = vpop.permute.xlu0 %2986
        %2988 = vset.pattern.permute.xlu0 0
        %2989 = vperm.xlu0 %2988, %v2910
        %v2990 = vpop.permute.xlu0 %2989
        %2991 = vset.pattern.permute.xlu0 0
        %2992 = vperm.xlu0 %2991, %v2911
        %v2993 = vpop.permute.xlu0 %2992
        %2994 = vset.pattern.permute.xlu0 0
        %2995 = vperm.xlu0 %2994, %v2912
        %v2996 = vpop.permute.xlu0 %2995
        %2997 = vset.pattern.permute.xlu0 0
        %2998 = vperm.xlu0 %2997, %v2913
        %v2999 = vpop.permute.xlu0 %2998
        %3000 = vset.pattern.permute.xlu0 0
        %3001 = vperm.xlu0 %3000, %v2914
        %v3002 = vpop.permute.xlu0 %3001
        %3003 = vset.pattern.permute.xlu0 0
        %3004 = vperm.xlu0 %3003, %v2915
        %v3005 = vpop.permute.xlu0 %3004
        %3006 = vset.pattern.permute.xlu0 0
        %3007 = vperm.xlu0 %3006, %v2916
        %v3008 = vpop.permute.xlu0 %3007
        %3009 = vset.pattern.permute.xlu0 0
        %3010 = vperm.xlu0 %3009, %v2917
        %v3011 = vpop.permute.xlu0 %3010
        %3012 = vset.pattern.permute.xlu0 0
        %3013 = vperm.xlu0 %3012, %v2918
        %v3014 = vpop.permute.xlu0 %3013
        %vm3015 = vcmp.eq.s32.totalorder %v2921, 1
        %vm3016 = vcmp.eq.s32.totalorder %v2924, 1
        %vm3017 = vcmp.eq.s32.totalorder %v2927, 1
        %vm3018 = vcmp.eq.s32.totalorder %v2930, 1
        %vm3019 = vcmp.eq.s32.totalorder %v2933, 1
        %vm3020 = vcmp.eq.s32.totalorder %v2936, 1
        %vm3021 = vcmp.eq.s32.totalorder %v2939, 1
        %vm3022 = vcmp.eq.s32.totalorder %v2942, 1
        %vm3023 = vcmp.eq.s32.totalorder %v2945, 1
        %vm3024 = vcmp.eq.s32.totalorder %v2948, 1
        %vm3025 = vcmp.eq.s32.totalorder %v2951, 1
        %vm3026 = vcmp.eq.s32.totalorder %v2954, 1
        %vm3027 = vcmp.eq.s32.totalorder %v2957, 1
        %vm3028 = vcmp.eq.s32.totalorder %v2960, 1
        %vm3029 = vcmp.eq.s32.totalorder %v2963, 1
        %vm3030 = vcmp.eq.s32.totalorder %v2966, 1
        %vm3031 = vcmp.eq.s32.totalorder %v2969, 1
        %vm3032 = vcmp.eq.s32.totalorder %v2972, 1
        %vm3033 = vcmp.eq.s32.totalorder %v2975, 1
        %vm3034 = vcmp.eq.s32.totalorder %v2978, 1
        %vm3035 = vcmp.eq.s32.totalorder %v2981, 1
        %vm3036 = vcmp.eq.s32.totalorder %v2984, 1
        %vm3037 = vcmp.eq.s32.totalorder %v2987, 1
        %vm3038 = vcmp.eq.s32.totalorder %v2990, 1
        %vm3039 = vcmp.eq.s32.totalorder %v2993, 1
        %vm3040 = vcmp.eq.s32.totalorder %v2996, 1
        %vm3041 = vcmp.eq.s32.totalorder %v2999, 1
        %vm3042 = vcmp.eq.s32.totalorder %v3002, 1
        %vm3043 = vcmp.eq.s32.totalorder %v3005, 1
        %vm3044 = vcmp.eq.s32.totalorder %v3008, 1
        %vm3045 = vcmp.eq.s32.totalorder %v3011, 1
        %vm3046 = vcmp.eq.s32.totalorder %v3014, 1
        %v3047 = vsel %vm3015, %v2855, 0.0
        %v3048 = vsel %vm3016, %v2856, 0.0
        %v3049 = vsel %vm3017, %v2857, 0.0
        %v3050 = vsel %vm3018, %v2858, 0.0
        %v3051 = vsel %vm3019, %v2859, 0.0
        %v3052 = vsel %vm3020, %v2860, 0.0
        %v3053 = vsel %vm3021, %v2861, 0.0
        %v3054 = vsel %vm3022, %v2862, 0.0
        %v3055 = vsel %vm3023, %v2863, 0.0
        %v3056 = vsel %vm3024, %v2864, 0.0
        %v3057 = vsel %vm3025, %v2865, 0.0
        %v3058 = vsel %vm3026, %v2866, 0.0
        %v3059 = vsel %vm3027, %v2867, 0.0
        %v3060 = vsel %vm3028, %v2868, 0.0
        %v3061 = vsel %vm3029, %v2869, 0.0
        %v3062 = vsel %vm3030, %v2870, 0.0
        %v3063 = vsel %vm3031, %v2871, 0.0
        %v3064 = vsel %vm3032, %v2872, 0.0
        %v3065 = vsel %vm3033, %v2873, 0.0
        %v3066 = vsel %vm3034, %v2874, 0.0
        %v3067 = vsel %vm3035, %v2875, 0.0
        %v3068 = vsel %vm3036, %v2876, 0.0
        %v3069 = vsel %vm3037, %v2877, 0.0
        %v3070 = vsel %vm3038, %v2878, 0.0
        %v3071 = vsel %vm3039, %v2879, 0.0
        %v3072 = vsel %vm3040, %v2880, 0.0
        %v3073 = vsel %vm3041, %v2881, 0.0
        %v3074 = vsel %vm3042, %v2882, 0.0
        %v3075 = vsel %vm3043, %v2883, 0.0
        %v3076 = vsel %vm3044, %v2884, 0.0
        %v3077 = vsel %vm3045, %v2885, 0.0
        %v3078 = vsel %vm3046, %v2886, 0.0
        %v3079 = vmul.f32 %v3047, %v3047
        %v3080 = vmul.f32 %v3048, %v3048
        %v3081 = vmul.f32 %v3049, %v3049
        %v3082 = vmul.f32 %v3050, %v3050
        %v3083 = vmul.f32 %v3051, %v3051
        %v3084 = vmul.f32 %v3052, %v3052
        %v3085 = vmul.f32 %v3053, %v3053
        %v3086 = vmul.f32 %v3054, %v3054
        %v3087 = vmul.f32 %v3055, %v3055
        %v3088 = vmul.f32 %v3056, %v3056
        %v3089 = vmul.f32 %v3057, %v3057
        %v3090 = vmul.f32 %v3058, %v3058
        %v3091 = vmul.f32 %v3059, %v3059
        %v3092 = vmul.f32 %v3060, %v3060
        %v3093 = vmul.f32 %v3061, %v3061
        %v3094 = vmul.f32 %v3062, %v3062
        %v3095 = vmul.f32 %v3063, %v3063
        %v3096 = vmul.f32 %v3064, %v3064
        %v3097 = vmul.f32 %v3065, %v3065
        %v3098 = vmul.f32 %v3066, %v3066
        %v3099 = vmul.f32 %v3067, %v3067
        %v3100 = vmul.f32 %v3068, %v3068
        %v3101 = vmul.f32 %v3069, %v3069
        %v3102 = vmul.f32 %v3070, %v3070
        %v3103 = vmul.f32 %v3071, %v3071
        %v3104 = vmul.f32 %v3072, %v3072
        %v3105 = vmul.f32 %v3073, %v3073
        %v3106 = vmul.f32 %v3074, %v3074
        %v3107 = vmul.f32 %v3075, %v3075
        %v3108 = vmul.f32 %v3076, %v3076
        %v3109 = vmul.f32 %v3077, %v3077
        %v3110 = vmul.f32 %v3078, %v3078
        %3111 = vadd.xlane.f32.xlu0 %v3079
        %v3112 = vpop.xlane.xlu0 %3111
        %3113 = vadd.xlane.f32.xlu0 %v3080
        %v3114 = vpop.xlane.xlu0 %3113
        %3115 = vadd.xlane.f32.xlu0 %v3081
        %v3116 = vpop.xlane.xlu0 %3115
        %3117 = vadd.xlane.f32.xlu0 %v3082
        %v3118 = vpop.xlane.xlu0 %3117
        %3119 = vadd.xlane.f32.xlu0 %v3083
        %v3120 = vpop.xlane.xlu0 %3119
        %3121 = vadd.xlane.f32.xlu0 %v3084
        %v3122 = vpop.xlane.xlu0 %3121
        %3123 = vadd.xlane.f32.xlu0 %v3085
        %v3124 = vpop.xlane.xlu0 %3123
        %3125 = vadd.xlane.f32.xlu0 %v3086
        %v3126 = vpop.xlane.xlu0 %3125
        %3127 = vadd.xlane.f32.xlu0 %v3087
        %v3128 = vpop.xlane.xlu0 %3127
        %3129 = vadd.xlane.f32.xlu0 %v3088
        %v3130 = vpop.xlane.xlu0 %3129
        %3131 = vadd.xlane.f32.xlu0 %v3089
        %v3132 = vpop.xlane.xlu0 %3131
        %3133 = vadd.xlane.f32.xlu0 %v3090
        %v3134 = vpop.xlane.xlu0 %3133
        %3135 = vadd.xlane.f32.xlu0 %v3091
        %v3136 = vpop.xlane.xlu0 %3135
        %3137 = vadd.xlane.f32.xlu0 %v3092
        %v3138 = vpop.xlane.xlu0 %3137
        %3139 = vadd.xlane.f32.xlu0 %v3093
        %v3140 = vpop.xlane.xlu0 %3139
        %3141 = vadd.xlane.f32.xlu0 %v3094
        %v3142 = vpop.xlane.xlu0 %3141
        %3143 = vadd.xlane.f32.xlu0 %v3095
        %v3144 = vpop.xlane.xlu0 %3143
        %3145 = vadd.xlane.f32.xlu0 %v3096
        %v3146 = vpop.xlane.xlu0 %3145
        %3147 = vadd.xlane.f32.xlu0 %v3097
        %v3148 = vpop.xlane.xlu0 %3147
        %3149 = vadd.xlane.f32.xlu0 %v3098
        %v3150 = vpop.xlane.xlu0 %3149
        %3151 = vadd.xlane.f32.xlu0 %v3099
        %v3152 = vpop.xlane.xlu0 %3151
        %3153 = vadd.xlane.f32.xlu0 %v3100
        %v3154 = vpop.xlane.xlu0 %3153
        %3155 = vadd.xlane.f32.xlu0 %v3101
        %v3156 = vpop.xlane.xlu0 %3155
        %3157 = vadd.xlane.f32.xlu0 %v3102
        %v3158 = vpop.xlane.xlu0 %3157
        %3159 = vadd.xlane.f32.xlu0 %v3103
        %v3160 = vpop.xlane.xlu0 %3159
        %3161 = vadd.xlane.f32.xlu0 %v3104
        %v3162 = vpop.xlane.xlu0 %3161
        %3163 = vadd.xlane.f32.xlu0 %v3105
        %v3164 = vpop.xlane.xlu0 %3163
        %3165 = vadd.xlane.f32.xlu0 %v3106
        %v3166 = vpop.xlane.xlu0 %3165
        %3167 = vadd.xlane.f32.xlu0 %v3107
        %v3168 = vpop.xlane.xlu0 %3167
        %3169 = vadd.xlane.f32.xlu0 %v3108
        %v3170 = vpop.xlane.xlu0 %3169
        %3171 = vadd.xlane.f32.xlu0 %v3109
        %v3172 = vpop.xlane.xlu0 %3171
        %3173 = vadd.xlane.f32.xlu0 %v3110
        %v3174 = vpop.xlane.xlu0 %3173
        %v3175 = vrsqrt.pop %v3112
        %v3176 = vmul.f32 %v3112, %v3175
        %vm3177 = vcmp.eq.f32.partialorder %v3112, inf
        %v3178 = vsel %vm3177, %v3112, %v3176
        %vm3179 = vcmp.eq.f32.partialorder %v3112, 0.0
        %v3180 = vand.u32 %v3112, 2147483648
        %v3181 = vsel %vm3179, %v3180, %v3178
        %v3182 = vrsqrt.pop %v3114
        %v3183 = vmul.f32 %v3114, %v3182
        %vm3184 = vcmp.eq.f32.partialorder %v3114, inf
        %v3185 = vsel %vm3184, %v3114, %v3183
        %vm3186 = vcmp.eq.f32.partialorder %v3114, 0.0
        %v3187 = vand.u32 %v3114, 2147483648
        %v3188 = vsel %vm3186, %v3187, %v3185
        %v3189 = vrsqrt.pop %v3116
        %v3190 = vmul.f32 %v3116, %v3189
        %vm3191 = vcmp.eq.f32.partialorder %v3116, inf
        %v3192 = vsel %vm3191, %v3116, %v3190
        %vm3193 = vcmp.eq.f32.partialorder %v3116, 0.0
        %v3194 = vand.u32 %v3116, 2147483648
        %v3195 = vsel %vm3193, %v3194, %v3192
        %v3196 = vrsqrt.pop %v3118
        %v3197 = vmul.f32 %v3118, %v3196
        %vm3198 = vcmp.eq.f32.partialorder %v3118, inf
        %v3199 = vsel %vm3198, %v3118, %v3197
        %vm3200 = vcmp.eq.f32.partialorder %v3118, 0.0
        %v3201 = vand.u32 %v3118, 2147483648
        %v3202 = vsel %vm3200, %v3201, %v3199
        %v3203 = vrsqrt.pop %v3120
        %v3204 = vmul.f32 %v3120, %v3203
        %vm3205 = vcmp.eq.f32.partialorder %v3120, inf
        %v3206 = vsel %vm3205, %v3120, %v3204
        %vm3207 = vcmp.eq.f32.partialorder %v3120, 0.0
        %v3208 = vand.u32 %v3120, 2147483648
        %v3209 = vsel %vm3207, %v3208, %v3206
        %v3210 = vrsqrt.pop %v3122
        %v3211 = vmul.f32 %v3122, %v3210
        %vm3212 = vcmp.eq.f32.partialorder %v3122, inf
        %v3213 = vsel %vm3212, %v3122, %v3211
        %vm3214 = vcmp.eq.f32.partialorder %v3122, 0.0
        %v3215 = vand.u32 %v3122, 2147483648
        %v3216 = vsel %vm3214, %v3215, %v3213
        %v3217 = vrsqrt.pop %v3124
        %v3218 = vmul.f32 %v3124, %v3217
        %vm3219 = vcmp.eq.f32.partialorder %v3124, inf
        %v3220 = vsel %vm3219, %v3124, %v3218
        %vm3221 = vcmp.eq.f32.partialorder %v3124, 0.0
        %v3222 = vand.u32 %v3124, 2147483648
        %v3223 = vsel %vm3221, %v3222, %v3220
        %v3224 = vrsqrt.pop %v3126
        %v3225 = vmul.f32 %v3126, %v3224
        %vm3226 = vcmp.eq.f32.partialorder %v3126, inf
        %v3227 = vsel %vm3226, %v3126, %v3225
        %vm3228 = vcmp.eq.f32.partialorder %v3126, 0.0
        %v3229 = vand.u32 %v3126, 2147483648
        %v3230 = vsel %vm3228, %v3229, %v3227
        %v3231 = vrsqrt.pop %v3128
        %v3232 = vmul.f32 %v3128, %v3231
        %vm3233 = vcmp.eq.f32.partialorder %v3128, inf
        %v3234 = vsel %vm3233, %v3128, %v3232
        %vm3235 = vcmp.eq.f32.partialorder %v3128, 0.0
        %v3236 = vand.u32 %v3128, 2147483648
        %v3237 = vsel %vm3235, %v3236, %v3234
        %v3238 = vrsqrt.pop %v3130
        %v3239 = vmul.f32 %v3130, %v3238
        %vm3240 = vcmp.eq.f32.partialorder %v3130, inf
        %v3241 = vsel %vm3240, %v3130, %v3239
        %vm3242 = vcmp.eq.f32.partialorder %v3130, 0.0
        %v3243 = vand.u32 %v3130, 2147483648
        %v3244 = vsel %vm3242, %v3243, %v3241
        %v3245 = vrsqrt.pop %v3132
        %v3246 = vmul.f32 %v3132, %v3245
        %vm3247 = vcmp.eq.f32.partialorder %v3132, inf
        %v3248 = vsel %vm3247, %v3132, %v3246
        %vm3249 = vcmp.eq.f32.partialorder %v3132, 0.0
        %v3250 = vand.u32 %v3132, 2147483648
        %v3251 = vsel %vm3249, %v3250, %v3248
        %v3252 = vrsqrt.pop %v3134
        %v3253 = vmul.f32 %v3134, %v3252
        %vm3254 = vcmp.eq.f32.partialorder %v3134, inf
        %v3255 = vsel %vm3254, %v3134, %v3253
        %vm3256 = vcmp.eq.f32.partialorder %v3134, 0.0
        %v3257 = vand.u32 %v3134, 2147483648
        %v3258 = vsel %vm3256, %v3257, %v3255
        %v3259 = vrsqrt.pop %v3136
        %v3260 = vmul.f32 %v3136, %v3259
        %vm3261 = vcmp.eq.f32.partialorder %v3136, inf
        %v3262 = vsel %vm3261, %v3136, %v3260
        %vm3263 = vcmp.eq.f32.partialorder %v3136, 0.0
        %v3264 = vand.u32 %v3136, 2147483648
        %v3265 = vsel %vm3263, %v3264, %v3262
        %v3266 = vrsqrt.pop %v3138
        %v3267 = vmul.f32 %v3138, %v3266
        %vm3268 = vcmp.eq.f32.partialorder %v3138, inf
        %v3269 = vsel %vm3268, %v3138, %v3267
        %vm3270 = vcmp.eq.f32.partialorder %v3138, 0.0
        %v3271 = vand.u32 %v3138, 2147483648
        %v3272 = vsel %vm3270, %v3271, %v3269
        %v3273 = vrsqrt.pop %v3140
        %v3274 = vmul.f32 %v3140, %v3273
        %vm3275 = vcmp.eq.f32.partialorder %v3140, inf
        %v3276 = vsel %vm3275, %v3140, %v3274
        %vm3277 = vcmp.eq.f32.partialorder %v3140, 0.0
        %v3278 = vand.u32 %v3140, 2147483648
        %v3279 = vsel %vm3277, %v3278, %v3276
        %v3280 = vrsqrt.pop %v3142
        %v3281 = vmul.f32 %v3142, %v3280
        %vm3282 = vcmp.eq.f32.partialorder %v3142, inf
        %v3283 = vsel %vm3282, %v3142, %v3281
        %vm3284 = vcmp.eq.f32.partialorder %v3142, 0.0
        %v3285 = vand.u32 %v3142, 2147483648
        %v3286 = vsel %vm3284, %v3285, %v3283
        %v3287 = vrsqrt.pop %v3144
        %v3288 = vmul.f32 %v3144, %v3287
        %vm3289 = vcmp.eq.f32.partialorder %v3144, inf
        %v3290 = vsel %vm3289, %v3144, %v3288
        %vm3291 = vcmp.eq.f32.partialorder %v3144, 0.0
        %v3292 = vand.u32 %v3144, 2147483648
        %v3293 = vsel %vm3291, %v3292, %v3290
        %v3294 = vrsqrt.pop %v3146
        %v3295 = vmul.f32 %v3146, %v3294
        %vm3296 = vcmp.eq.f32.partialorder %v3146, inf
        %v3297 = vsel %vm3296, %v3146, %v3295
        %vm3298 = vcmp.eq.f32.partialorder %v3146, 0.0
        %v3299 = vand.u32 %v3146, 2147483648
        %v3300 = vsel %vm3298, %v3299, %v3297
        %v3301 = vrsqrt.pop %v3148
        %v3302 = vmul.f32 %v3148, %v3301
        %vm3303 = vcmp.eq.f32.partialorder %v3148, inf
        %v3304 = vsel %vm3303, %v3148, %v3302
        %vm3305 = vcmp.eq.f32.partialorder %v3148, 0.0
        %v3306 = vand.u32 %v3148, 2147483648
        %v3307 = vsel %vm3305, %v3306, %v3304
        %v3308 = vrsqrt.pop %v3150
        %v3309 = vmul.f32 %v3150, %v3308
        %vm3310 = vcmp.eq.f32.partialorder %v3150, inf
        %v3311 = vsel %vm3310, %v3150, %v3309
        %vm3312 = vcmp.eq.f32.partialorder %v3150, 0.0
        %v3313 = vand.u32 %v3150, 2147483648
        %v3314 = vsel %vm3312, %v3313, %v3311
        %v3315 = vrsqrt.pop %v3152
        %v3316 = vmul.f32 %v3152, %v3315
        %vm3317 = vcmp.eq.f32.partialorder %v3152, inf
        %v3318 = vsel %vm3317, %v3152, %v3316
        %vm3319 = vcmp.eq.f32.partialorder %v3152, 0.0
        %v3320 = vand.u32 %v3152, 2147483648
        %v3321 = vsel %vm3319, %v3320, %v3318
        %v3322 = vrsqrt.pop %v3154
        %v3323 = vmul.f32 %v3154, %v3322
        %vm3324 = vcmp.eq.f32.partialorder %v3154, inf
        %v3325 = vsel %vm3324, %v3154, %v3323
        %vm3326 = vcmp.eq.f32.partialorder %v3154, 0.0
        %v3327 = vand.u32 %v3154, 2147483648
        %v3328 = vsel %vm3326, %v3327, %v3325
        %v3329 = vrsqrt.pop %v3156
        %v3330 = vmul.f32 %v3156, %v3329
        %vm3331 = vcmp.eq.f32.partialorder %v3156, inf
        %v3332 = vsel %vm3331, %v3156, %v3330
        %vm3333 = vcmp.eq.f32.partialorder %v3156, 0.0
        %v3334 = vand.u32 %v3156, 2147483648
        %v3335 = vsel %vm3333, %v3334, %v3332
        %v3336 = vrsqrt.pop %v3158
        %v3337 = vmul.f32 %v3158, %v3336
        %vm3338 = vcmp.eq.f32.partialorder %v3158, inf
        %v3339 = vsel %vm3338, %v3158, %v3337
        %vm3340 = vcmp.eq.f32.partialorder %v3158, 0.0
        %v3341 = vand.u32 %v3158, 2147483648
        %v3342 = vsel %vm3340, %v3341, %v3339
        %v3343 = vrsqrt.pop %v3160
        %v3344 = vmul.f32 %v3160, %v3343
        %vm3345 = vcmp.eq.f32.partialorder %v3160, inf
        %v3346 = vsel %vm3345, %v3160, %v3344
        %vm3347 = vcmp.eq.f32.partialorder %v3160, 0.0
        %v3348 = vand.u32 %v3160, 2147483648
        %v3349 = vsel %vm3347, %v3348, %v3346
        %v3350 = vrsqrt.pop %v3162
        %v3351 = vmul.f32 %v3162, %v3350
        %vm3352 = vcmp.eq.f32.partialorder %v3162, inf
        %v3353 = vsel %vm3352, %v3162, %v3351
        %vm3354 = vcmp.eq.f32.partialorder %v3162, 0.0
        %v3355 = vand.u32 %v3162, 2147483648
        %v3356 = vsel %vm3354, %v3355, %v3353
        %v3357 = vrsqrt.pop %v3164
        %v3358 = vmul.f32 %v3164, %v3357
        %vm3359 = vcmp.eq.f32.partialorder %v3164, inf
        %v3360 = vsel %vm3359, %v3164, %v3358
        %vm3361 = vcmp.eq.f32.partialorder %v3164, 0.0
        %v3362 = vand.u32 %v3164, 2147483648
        %v3363 = vsel %vm3361, %v3362, %v3360
        %v3364 = vrsqrt.pop %v3166
        %v3365 = vmul.f32 %v3166, %v3364
        %vm3366 = vcmp.eq.f32.partialorder %v3166, inf
        %v3367 = vsel %vm3366, %v3166, %v3365
        %vm3368 = vcmp.eq.f32.partialorder %v3166, 0.0
        %v3369 = vand.u32 %v3166, 2147483648
        %v3370 = vsel %vm3368, %v3369, %v3367
        %v3371 = vrsqrt.pop %v3168
        %v3372 = vmul.f32 %v3168, %v3371
        %vm3373 = vcmp.eq.f32.partialorder %v3168, inf
        %v3374 = vsel %vm3373, %v3168, %v3372
        %vm3375 = vcmp.eq.f32.partialorder %v3168, 0.0
        %v3376 = vand.u32 %v3168, 2147483648
        %v3377 = vsel %vm3375, %v3376, %v3374
        %v3378 = vrsqrt.pop %v3170
        %v3379 = vmul.f32 %v3170, %v3378
        %vm3380 = vcmp.eq.f32.partialorder %v3170, inf
        %v3381 = vsel %vm3380, %v3170, %v3379
        %vm3382 = vcmp.eq.f32.partialorder %v3170, 0.0
        %v3383 = vand.u32 %v3170, 2147483648
        %v3384 = vsel %vm3382, %v3383, %v3381
        %v3385 = vrsqrt.pop %v3172
        %v3386 = vmul.f32 %v3172, %v3385
        %vm3387 = vcmp.eq.f32.partialorder %v3172, inf
        %v3388 = vsel %vm3387, %v3172, %v3386
        %vm3389 = vcmp.eq.f32.partialorder %v3172, 0.0
        %v3390 = vand.u32 %v3172, 2147483648
        %v3391 = vsel %vm3389, %v3390, %v3388
        %v3392 = vrsqrt.pop %v3174
        %v3393 = vmul.f32 %v3174, %v3392
        %vm3394 = vcmp.eq.f32.partialorder %v3174, inf
        %v3395 = vsel %vm3394, %v3174, %v3393
        %vm3396 = vcmp.eq.f32.partialorder %v3174, 0.0
        %v3397 = vand.u32 %v3174, 2147483648
        %v3398 = vsel %vm3396, %v3397, %v3395
        %v3399 = vadd.f32 %v3181, 1e-08
        %v3400 = vadd.f32 %v3188, 1e-08
        %v3401 = vadd.f32 %v3195, 1e-08
        %v3402 = vadd.f32 %v3202, 1e-08
        %v3403 = vadd.f32 %v3209, 1e-08
        %v3404 = vadd.f32 %v3216, 1e-08
        %v3405 = vadd.f32 %v3223, 1e-08
        %v3406 = vadd.f32 %v3230, 1e-08
        %v3407 = vadd.f32 %v3237, 1e-08
        %v3408 = vadd.f32 %v3244, 1e-08
        %v3409 = vadd.f32 %v3251, 1e-08
        %v3410 = vadd.f32 %v3258, 1e-08
        %v3411 = vadd.f32 %v3265, 1e-08
        %v3412 = vadd.f32 %v3272, 1e-08
        %v3413 = vadd.f32 %v3279, 1e-08
        %v3414 = vadd.f32 %v3286, 1e-08
        %v3415 = vadd.f32 %v3293, 1e-08
        %v3416 = vadd.f32 %v3300, 1e-08
        %v3417 = vadd.f32 %v3307, 1e-08
        %v3418 = vadd.f32 %v3314, 1e-08
        %v3419 = vadd.f32 %v3321, 1e-08
        %v3420 = vadd.f32 %v3328, 1e-08
        %v3421 = vadd.f32 %v3335, 1e-08
        %v3422 = vadd.f32 %v3342, 1e-08
        %v3423 = vadd.f32 %v3349, 1e-08
        %v3424 = vadd.f32 %v3356, 1e-08
        %v3425 = vadd.f32 %v3363, 1e-08
        %v3426 = vadd.f32 %v3370, 1e-08
        %v3427 = vadd.f32 %v3377, 1e-08
        %v3428 = vadd.f32 %v3384, 1e-08
        %v3429 = vadd.f32 %v3391, 1e-08
        %v3430 = vadd.f32 %v3398, 1e-08
        %v3431 = vrcp.pop %v3399
        %v3432 = vrcp.pop %v3400
        %v3433 = vrcp.pop %v3401
        %v3434 = vrcp.pop %v3402
        %v3435 = vrcp.pop %v3403
        %v3436 = vrcp.pop %v3404
        %v3437 = vrcp.pop %v3405
        %v3438 = vrcp.pop %v3406
        %v3439 = vrcp.pop %v3407
        %v3440 = vrcp.pop %v3408
        %v3441 = vrcp.pop %v3409
        %v3442 = vrcp.pop %v3410
        %v3443 = vrcp.pop %v3411
        %v3444 = vrcp.pop %v3412
        %v3445 = vrcp.pop %v3413
        %v3446 = vrcp.pop %v3414
        %v3447 = vrcp.pop %v3415
        %v3448 = vrcp.pop %v3416
        %v3449 = vrcp.pop %v3417
        %v3450 = vrcp.pop %v3418
        %v3451 = vrcp.pop %v3419
        %v3452 = vrcp.pop %v3420
        %v3453 = vrcp.pop %v3421
        %v3454 = vrcp.pop %v3422
        %v3455 = vrcp.pop %v3423
        %v3456 = vrcp.pop %v3424
        %v3457 = vrcp.pop %v3425
        %v3458 = vrcp.pop %v3426
        %v3459 = vrcp.pop %v3427
        %v3460 = vrcp.pop %v3428
        %v3461 = vrcp.pop %v3429
        %v3462 = vrcp.pop %v3430
        %v3463 = vmul.f32 %v3047, %v3431
        %v3464 = vmul.f32 %v3048, %v3432
        %v3465 = vmul.f32 %v3049, %v3433
        %v3466 = vmul.f32 %v3050, %v3434
        %v3467 = vmul.f32 %v3051, %v3435
        %v3468 = vmul.f32 %v3052, %v3436
        %v3469 = vmul.f32 %v3053, %v3437
        %v3470 = vmul.f32 %v3054, %v3438
        %v3471 = vmul.f32 %v3055, %v3439
        %v3472 = vmul.f32 %v3056, %v3440
        %v3473 = vmul.f32 %v3057, %v3441
        %v3474 = vmul.f32 %v3058, %v3442
        %v3475 = vmul.f32 %v3059, %v3443
        %v3476 = vmul.f32 %v3060, %v3444
        %v3477 = vmul.f32 %v3061, %v3445
        %v3478 = vmul.f32 %v3062, %v3446
        %v3479 = vmul.f32 %v3063, %v3447
        %v3480 = vmul.f32 %v3064, %v3448
        %v3481 = vmul.f32 %v3065, %v3449
        %v3482 = vmul.f32 %v3066, %v3450
        %v3483 = vmul.f32 %v3067, %v3451
        %v3484 = vmul.f32 %v3068, %v3452
        %v3485 = vmul.f32 %v3069, %v3453
        %v3486 = vmul.f32 %v3070, %v3454
        %v3487 = vmul.f32 %v3071, %v3455
        %v3488 = vmul.f32 %v3072, %v3456
        %v3489 = vmul.f32 %v3073, %v3457
        %v3490 = vmul.f32 %v3074, %v3458
        %v3491 = vmul.f32 %v3075, %v3459
        %v3492 = vmul.f32 %v3076, %v3460
        %v3493 = vmul.f32 %v3077, %v3461
        %v3494 = vmul.f32 %v3078, %v3462
        %3495 = vst [vmem:[%s377] sm:$0xff] %v3463
        %3496 = vst [vmem:[%s377 + $0x8] sm:$0xff] %v3464
        %3497 = vst [vmem:[%s377 + $0x10] sm:$0xff] %v3465
        %3498 = vst [vmem:[%s377 + $0x18] sm:$0xff] %v3466
        %3499 = vst [vmem:[%s377 + $0x20] sm:$0xff] %v3467
        %3500 = vst [vmem:[%s377 + $0x28] sm:$0xff] %v3468
        %3501 = vst [vmem:[%s377 + $0x30] sm:$0xff] %v3469
        %3502 = vst [vmem:[%s377 + $0x38] sm:$0xff] %v3470
        %3503 = vst [vmem:[%s377 + $0x40] sm:$0xff] %v3471
        %3504 = vst [vmem:[%s377 + $0x48] sm:$0xff] %v3472
        %3505 = vst [vmem:[%s377 + $0x50] sm:$0xff] %v3473
        %3506 = vst [vmem:[%s377 + $0x58] sm:$0xff] %v3474
        %3507 = vst [vmem:[%s377 + $0x60] sm:$0xff] %v3475
        %3508 = vst [vmem:[%s377 + $0x68] sm:$0xff] %v3476
        %3509 = vst [vmem:[%s377 + $0x70] sm:$0xff] %v3477
        %3510 = vst [vmem:[%s377 + $0x78] sm:$0xff] %v3478
        %3511 = vst [vmem:[%s377 + $0x80] sm:$0xff] %v3479
        %3512 = vst [vmem:[%s377 + $0x88] sm:$0xff] %v3480
        %3513 = vst [vmem:[%s377 + $0x90] sm:$0xff] %v3481
        %3514 = vst [vmem:[%s377 + $0x98] sm:$0xff] %v3482
        %3515 = vst [vmem:[%s377 + $0xa0] sm:$0xff] %v3483
        %3516 = vst [vmem:[%s377 + $0xa8] sm:$0xff] %v3484
        %3517 = vst [vmem:[%s377 + $0xb0] sm:$0xff] %v3485
        %3518 = vst [vmem:[%s377 + $0xb8] sm:$0xff] %v3486
        %3519 = vst [vmem:[%s377 + $0xc0] sm:$0xff] %v3487
        %3520 = vst [vmem:[%s377 + $0xc8] sm:$0xff] %v3488
        %3521 = vst [vmem:[%s377 + $0xd0] sm:$0xff] %v3489
        %3522 = vst [vmem:[%s377 + $0xd8] sm:$0xff] %v3490
        %3523 = vst [vmem:[%s377 + $0xe0] sm:$0xff] %v3491
        %3524 = vst [vmem:[%s377 + $0xe8] sm:$0xff] %v3492
        %3525 = vst [vmem:[%s377 + $0xf0] sm:$0xff] %v3493
        %3526 = vst [vmem:[%s377 + $0xf8] sm:$0xff] %v3494
        %v3527 = vadd.f32 %v3463, %v3467
        %v3528 = vadd.f32 %v3527, %v3471
        %v3529 = vadd.f32 %v3528, %v3475
        %v3530 = vadd.f32 %v3529, %v3479
        %v3531 = vadd.f32 %v3530, %v3483
        %v3532 = vadd.f32 %v3531, %v3487
        %v3533 = vadd.f32 %v3532, %v3491
        %v3534 = vadd.f32 %v3464, %v3468
        %v3535 = vadd.f32 %v3534, %v3472
        %v3536 = vadd.f32 %v3535, %v3476
        %v3537 = vadd.f32 %v3536, %v3480
        %v3538 = vadd.f32 %v3537, %v3484
        %v3539 = vadd.f32 %v3538, %v3488
        %v3540 = vadd.f32 %v3539, %v3492
        %v3541 = vadd.f32 %v3465, %v3469
        %v3542 = vadd.f32 %v3541, %v3473
        %v3543 = vadd.f32 %v3542, %v3477
        %v3544 = vadd.f32 %v3543, %v3481
        %v3545 = vadd.f32 %v3544, %v3485
        %v3546 = vadd.f32 %v3545, %v3489
        %v3547 = vadd.f32 %v3546, %v3493
        %v3548 = vadd.f32 %v3466, %v3470
        %v3549 = vadd.f32 %v3548, %v3474
        %v3550 = vadd.f32 %v3549, %v3478
        %v3551 = vadd.f32 %v3550, %v3482
        %v3552 = vadd.f32 %v3551, %v3486
        %v3553 = vadd.f32 %v3552, %v3490
        %v3554 = vadd.f32 %v3553, %v3494
        %v3555 = vmul.f32 %v3533, 0.125
        %v3556 = vmul.f32 %v3540, 0.125
        %v3557 = vmul.f32 %v3547, 0.125
        %v3558 = vmul.f32 %v3554, 0.125
        %v3559 = vmul.f32 %v3555, %v3555
        %v3560 = vmul.f32 %v3556, %v3556
        %v3561 = vmul.f32 %v3557, %v3557
        %v3562 = vmul.f32 %v3558, %v3558
        %3563 = vadd.xlane.f32.xlu0 %v3559
        %v3564 = vpop.xlane.xlu0 %3563
        %3565 = vadd.xlane.f32.xlu0 %v3560
        %v3566 = vpop.xlane.xlu0 %3565
        %3567 = vadd.xlane.f32.xlu0 %v3561
        %v3568 = vpop.xlane.xlu0 %3567
        %3569 = vadd.xlane.f32.xlu0 %v3562
        %v3570 = vpop.xlane.xlu0 %3569
        %v3571 = vrsqrt.pop %v3564
        %v3572 = vmul.f32 %v3564, %v3571
        %vm3573 = vcmp.eq.f32.partialorder %v3564, inf
        %v3574 = vsel %vm3573, %v3564, %v3572
        %vm3575 = vcmp.eq.f32.partialorder %v3564, 0.0
        %v3576 = vand.u32 %v3564, 2147483648
        %v3577 = vsel %vm3575, %v3576, %v3574
        %v3578 = vrsqrt.pop %v3566
        %v3579 = vmul.f32 %v3566, %v3578
        %vm3580 = vcmp.eq.f32.partialorder %v3566, inf
        %v3581 = vsel %vm3580, %v3566, %v3579
        %vm3582 = vcmp.eq.f32.partialorder %v3566, 0.0
        %v3583 = vand.u32 %v3566, 2147483648
        %v3584 = vsel %vm3582, %v3583, %v3581
        %v3585 = vrsqrt.pop %v3568
        %v3586 = vmul.f32 %v3568, %v3585
        %vm3587 = vcmp.eq.f32.partialorder %v3568, inf
        %v3588 = vsel %vm3587, %v3568, %v3586
        %vm3589 = vcmp.eq.f32.partialorder %v3568, 0.0
        %v3590 = vand.u32 %v3568, 2147483648
        %v3591 = vsel %vm3589, %v3590, %v3588
        %v3592 = vrsqrt.pop %v3570
        %v3593 = vmul.f32 %v3570, %v3592
        %vm3594 = vcmp.eq.f32.partialorder %v3570, inf
        %v3595 = vsel %vm3594, %v3570, %v3593
        %vm3596 = vcmp.eq.f32.partialorder %v3570, 0.0
        %v3597 = vand.u32 %v3570, 2147483648
        %v3598 = vsel %vm3596, %v3597, %v3595
        %v3599 = vadd.f32 %v3577, 1e-08
        %v3600 = vadd.f32 %v3584, 1e-08
        %v3601 = vadd.f32 %v3591, 1e-08
        %v3602 = vadd.f32 %v3598, 1e-08
        %v3603 = vrcp.pop %v3599
        %v3604 = vmul.f32 %v3555, %v3603
        %v3605 = vrcp.pop %v3600
        %v3606 = vmul.f32 %v3556, %v3605
        %v3607 = vrcp.pop %v3601
        %v3608 = vmul.f32 %v3557, %v3607
        %v3609 = vrcp.pop %v3602
        %v3610 = vmul.f32 %v3558, %v3609
        %3611 = vst [vmem:[%s384] sm:$0xff] %v3604
        %3612 = vst [vmem:[%s384 + $0x8] sm:$0xff] %v3606
        %3613 = vst [vmem:[%s384 + $0x10] sm:$0xff] %v3608
        %3614 = vst [vmem:[%s384 + $0x18] sm:$0xff] %v3610
        %s3615 = sand.u32 %s180, 1
        %s3616 = scalar_lea.sflag [#allocation9], %s3615
        %s3617 = sand.u32 %s180, 1
        %s3618 = smul.addr %s3617, 256
        %s3619 = scalar_lea.vmem [#allocation13], %s3618
        %s3620 = sand.u32 %s206, 1
        %s3621 = scalar_lea.sflag [#allocation15], %s3620
        %s3622 = sand.u32 %s206, 1
        %s3623 = smul.addr %s3622, 32
        %s3624 = scalar_lea.vmem [#allocation14], %s3623
        // Predicated region
        $region64: #{tpu_custom_call.1} parent=43 // pred_check
          %p3625 = pneg %p190
        $region65: #{tpu_custom_call.1} parent=43 // pred_check_branch
          %3627 = sbr.rel (%p3625) target = $region67
        $region66: #{tpu_custom_call.1} parent=43 // pred_region
          #allocation19 [shape = 'u32[6]{0}', space=smem, size = 0x18, scoped, tag = 'DMA stride descriptor']
          %s3628 = smul.u32 4, %s36
          %s3630 = ssub.s32 4096, 4096
          %3631 = vsyncadd %s3616, %s3630
          %s3632 = smul.addr %s3628, 128
          %s3633 = scalar_lea.hbm %s7, %s3632
          %s3635 = sshll.u32 1, 14
          %s3636 = sxor.u32 4294967295, %s3635
          %s3639 = sshll.u32 7, 18
          %s3640 = sxor.u32 4294967295, %s3639
          %s3641 = sand.u32 0, %s3640
          %s3643 = sor.u32 %s3641, 0
          %s3645 = sshll.u32 3, 24
          %s3646 = sxor.u32 4294967295, %s3645
          %s3647 = sand.u32 %s3643, %s3646
          %s3649 = sor.u32 %s3647, 0
          %s3650 = sshll.u32 %s3619, 4
          %s3651 = int_to_ptr.vmem [resolvable:$true] %s3650
          %3657 = sst [smem:[#allocation19]] 512
          %s3658 = scalar_lea.smem [#allocation19], 1
          %3659 = sst [smem:[%s3658]] 1024
          %s3660 = scalar_lea.smem [#allocation19], 2
          %3661 = sst [smem:[%s3660]] 4
          %s3662 = scalar_lea.smem [#allocation19], 3
          %3663 = sst [smem:[%s3662]] 128
          %s3664 = scalar_lea.smem [#allocation19], 4
          %3665 = sst [smem:[%s3664]] 128
          %s3666 = scalar_lea.smem [#allocation19], 5
          %3667 = sst [smem:[%s3666]] 8
          %3669 = dma.general %s3651, 4096, %s3633, %s3616, [#allocation18], [#allocation19], %s3649, 0
        $region67: #{tpu_custom_call.1} parent=43 // pred_fallthru
          _
        // Predicated region
        $region68: #{tpu_custom_call.1} parent=43 // pred_check
          %p3670 = pneg %p216
        $region69: #{tpu_custom_call.1} parent=43 // pred_check_branch
          %3672 = sbr.rel (%p3670) target = $region71
        $region70: #{tpu_custom_call.1} parent=43 // pred_region
          %s3673 = smul.u32 4, %s36
          %s3675 = ssub.s32 512, 512
          %3676 = vsyncadd %s3621, %s3675
          %s3677 = smul.addr %s3673, 128
          %s3678 = scalar_lea.hbm %s8, %s3677
          %s3679 = sshll.u32 %s3624, 4
          %s3680 = int_to_ptr.vmem [resolvable:$true] %s3679
          %3685 = dma.vmem_to_hbm [thread:$0]  %s3680, 512, %s3678, %s3621, 128, 128, 8
        $region71: #{tpu_custom_call.1} parent=43 // pred_fallthru
          _
      $region44: #{tpu_custom_call.1} parent=5 // pred_fallthru
        _
      %p3686 = scmp.le.s32.totalorder 2, %s31
      // Predicated region
      $region72: #{tpu_custom_call.1} parent=5 // pred_check
        %p3687 = pneg %p3686
      $region73: #{tpu_custom_call.1} parent=5 // pred_check_branch
        %3689 = sbr.rel (%p3687) target = $region75
      $region74: #{tpu_custom_call.1} parent=5 // pred_region
        %s3690 = ssub.s32 %s31, 2
        // Predicated region
        $region76: #{tpu_custom_call.1} parent=74 // pred_check
          %p3691 = pneg %p196
        $region77: #{tpu_custom_call.1} parent=74 // pred_check_branch
          %3693 = sbr.rel (%p3691) target = $region79
        $region78: #{tpu_custom_call.1} parent=74 // pred_region
          %s3694 = sand.u32 %s181, 1
          %s3695 = scalar_lea.sflag [#allocation9], %s3694
          %s3696 = sand.u32 %s181, 1
          %s3697 = smul.addr %s3696, 256
          %s3698 = scalar_lea.vmem [#allocation13], %s3697
          %3699 = dma.done %s3695, 4096
        $region79: #{tpu_custom_call.1} parent=74 // pred_fallthru
          _
        // Predicated region
        $region80: #{tpu_custom_call.1} parent=74 // pred_check
          %p3700 = pneg %p222
        $region81: #{tpu_custom_call.1} parent=74 // pred_check_branch
          %3702 = sbr.rel (%p3700) target = $region83
        $region82: #{tpu_custom_call.1} parent=74 // pred_region
          %s3703 = sand.u32 %s207, 1
          %s3704 = scalar_lea.sflag [#allocation15], %s3703
          %s3705 = sand.u32 %s207, 1
          %s3706 = smul.addr %s3705, 32
          %s3707 = scalar_lea.vmem [#allocation14], %s3706
          %3708 = dma.done %s3704, 512
        $region83: #{tpu_custom_call.1} parent=74 // pred_fallthru
          _
      $region75: #{tpu_custom_call.1} parent=5 // pred_fallthru
        _
    $region6: #{tpu_custom_call.1} parent=1 // loop_footer
      %s35 = sadd.s32 1, %s31
    $region7: #{tpu_custom_call.1} parent=1 // loop_footer_branch
      %30 = sbr.rel target = $region3
    $region8: #{tpu_custom_call.1} parent=1 // loop_exit
      _
    %3709 = vsyncpa [#allocation8], 1
    %s3710 = scalar_lea.sflag [#allocation8], 1
    %3711 = vsyncpa %s3710, 1
    %3712 = vsyncpa [#allocation11], 1
    %3713 = vsyncpa [#allocation9], 1
    %s3714 = scalar_lea.sflag [#allocation9], 1
    %3715 = vsyncpa %s3714, 1
    %3716 = vsyncpa [#allocation15], 1
    %s3717 = scalar_lea.sflag [#allocation15], 1
    %3718 = vsyncpa %s3717, 1

</llo_original>
